<compile_context>
chip_gen: v6e
topology: v6e:2x2x1
jax: 0.10.0
libtpu: 0.0.40
codegen_flags: <defaults>
</compile_context>

<pallas_src>
import jax
import jax.numpy as jnp
from jax import lax
from jax.experimental import pallas as pl
from jax.experimental.pallas import tpu as pltpu

# ----- module hyper-parameters (NormalizingCondFlow.__init__) -----
INPUT_DIM = 4
CONTEXT_DIM = 5
N_LAYERS = 3
COUNT_BINS = 8
BOUND = 3.0
ORDER = "linear"

# ----- constants from pyro's _monotonic_rational_spline -----
MIN_BIN_WIDTH = 1e-3
MIN_BIN_HEIGHT = 1e-3
MIN_DERIVATIVE = 1e-3
MIN_LAMBDA = 0.025
EPS = 1e-6

HIDDEN = INPUT_DIM * 10                     # 40
IK = INPUT_DIM * COUNT_BINS                 # 32
OFF_W, OFF_H, OFF_L, OFF_D = 0, IK, 2 * IK, 3 * IK
OUT_DIM = 4 * IK                            # 128 (d head padded K-1 -> K for alignment)


# ---------------------------------------------------------------------------
# Fused kernel: DenseNN (context -> spline params) + componentwise linear
# rational spline, iterated over layers via the second grid axis.
# ---------------------------------------------------------------------------
def _flow_kernel(x_ref, ctx_ref, w1_ref, b1_ref, w2_ref, b2_ref, w3_ref, b3_ref,
                 u_ref, ld_ref):
    layer = pl.program_id(1)

    @pl.when(layer == 0)
    def _init():                                 # carry x / log_det in the output blocks
        u_ref[...] = x_ref[...]
        ld_ref[...] = jnp.zeros_like(ld_ref)

    I, T = u_ref.shape
    K = COUNT_BINS

    # ---------------- conditioning MLP (transposed: batch on the lane axis) -------------
    h = jnp.dot(w1_ref[0], ctx_ref[...], preferred_element_type=jnp.float32) + b1_ref[0]
    h = jnp.maximum(h, 0.0)
    h = jnp.dot(w2_ref[0], h, preferred_element_type=jnp.float32) + b2_ref[0]
    h = jnp.maximum(h, 0.0)
    raw = jnp.dot(w3_ref[0], h, preferred_element_type=jnp.float32) + b3_ref[0]  # (128, T)

    w_raw = raw[OFF_W:OFF_W + IK].reshape(I, K, T)
    h_raw = raw[OFF_H:OFF_H + IK].reshape(I, K, T)
    l_raw = raw[OFF_L:OFF_L + IK].reshape(I, K, T)
    d_raw = raw[OFF_D:OFF_D + IK].reshape(I, K, T)   # last column per dim = unused padding

    # ---------------- spline parameters --------------------------------------------------
    def softmax_k(z):                                # softmax over the K (sublane) axis
        z = z - jnp.max(z, axis=1, keepdims=True)
        e = jnp.exp(z)
        return e * pl.reciprocal(jnp.sum(e, axis=1, keepdims=True), approx=True)

    widths = softmax_k(w_raw)
    heights = softmax_k(h_raw)
    # F.softplus (stable) then + min_derivative
    derivs = MIN_DERIVATIVE + (jnp.maximum(d_raw, 0.0)
                               + jnp.log(1.0 + jnp.exp(-jnp.abs(d_raw))))
    lambdas = pl.reciprocal(1.0 + jnp.exp(-l_raw), approx=True)        # sigmoid
    lambdas = (1.0 - 2.0 * MIN_LAMBDA) * lambdas + MIN_LAMBDA

    widths = MIN_BIN_WIDTH + (1.0 - MIN_BIN_WIDTH * K) * widths
    heights = MIN_BIN_HEIGHT + (1.0 - MIN_BIN_HEIGHT * K) * heights

    lane_k = lax.broadcasted_iota(jnp.int32, (I, K, T), 1)

    def incl_excl_cumsum(v):        # inclusive / exclusive cumsum along K (static unroll)
        run = jnp.zeros((I, 1, T), jnp.float32)
        incl = jnp.zeros((I, K, T), jnp.float32)
        excl = jnp.zeros((I, K, T), jnp.float32)
        for j in range(K):
            excl = jnp.where(lane_k == j, run, excl)
            run = run + v[:, j:j + 1, :]
            incl = jnp.where(lane_k == j, run, incl)
        return incl, excl

    left = -BOUND
    two_b = 2.0 * BOUND
    wi, we = incl_excl_cumsum(widths)
    hi_, he = incl_excl_cumsum(heights)
    cw_hi = two_b * wi + left              # cumwidths[1:]   (right knot of each bin)
    cw_lo = two_b * we + left              # cumwidths[:-1]  (left knot of each bin)
    ch_hi = two_b * hi_ + left
    ch_lo = two_b * he + left
    # pyro forces the outermost knots exactly onto the bound
    is_last = lane_k == (K - 1)
    cw_hi = jnp.where(is_last, BOUND, cw_hi)
    ch_hi = jnp.where(is_last, BOUND, ch_hi)
    widths_k = cw_hi - cw_lo
    heights_k = ch_hi - ch_lo
    delta_k = heights_k / widths_k

    # ---------------- bin search + one-hot gathers ---------------------------------------
    x_in = u_ref[...]                                          # (I, T) current x
    x = jnp.clip(x_in, -BOUND, BOUND)[:, None, :]              # clamp -> dead branch finite
    cnt = (x >= (left + EPS)).astype(jnp.int32)
    cnt = cnt + jnp.sum((x >= (cw_hi + EPS)).astype(jnp.int32), axis=1, keepdims=True)
    bidx = jnp.clip(cnt - 1, 0, K - 1)                         # (I, 1, T)

    onehot = (lane_k == bidx).astype(jnp.float32)              # computed once, reused

    def gather(v):
        return jnp.sum(v * onehot, axis=1, keepdims=True)      # (I, 1, T)

    input_widths = gather(widths_k)
    input_cumwidths = gather(cw_lo)
    input_cumheights = gather(ch_lo)
    input_heights = gather(heights_k)
    input_delta = gather(delta_k)
    input_lambdas = gather(lambdas)

    d_lo = jnp.sum(derivs * (lane_k == (bidx - 1)).astype(jnp.float32),
                   axis=1, keepdims=True)
    d_hi = jnp.sum(derivs * onehot, axis=1, keepdims=True)
    # boundary knots: derivative is exactly 1 (identity continuation outside the box)
    input_derivatives = jnp.where(bidx == 0, 1.0, d_lo)
    input_derivatives_p1 = jnp.where(bidx == K - 1, 1.0, d_hi)

    # ---------------- linear rational spline (forward, wa == 1) --------------------------
    wb = jnp.sqrt(input_derivatives / input_derivatives_p1)
    wc = (input_lambdas * input_derivatives
          + (1.0 - input_lambdas) * wb * input_derivatives_p1) / input_delta
    ya = input_cumheights
    yb = input_heights + input_cumheights
    yc = ((1.0 - input_lambdas) * ya + input_lambdas * wb * yb) * \
        pl.reciprocal((1.0 - input_lambdas) + input_lambdas * wb, approx=True)

    theta = jnp.clip((x - input_cumwidths) * pl.reciprocal(input_widths, approx=True),
                     0.0, 1.0)
    lo = (theta <= input_lambdas).astype(jnp.float32)
    hi = 1.0 - lo

    numerator = (ya * (input_lambdas - theta) + wc * yc * theta) * lo + \
                (wc * yc * (1.0 - theta) + wb * yb * (theta - input_lambdas)) * hi
    denominator = ((input_lambdas - theta) + wc * theta) * lo + \
                  (wc * (1.0 - theta) + wb * (theta - input_lambdas)) * hi
    outputs = numerator * pl.reciprocal(denominator, approx=True)

    deriv_num = (wc * input_lambdas * (yc - ya) * lo +
                 wb * wc * (1.0 - input_lambdas) * (yb - yc) * hi) * input_widths
    logabsdet = jnp.log(deriv_num / (denominator * denominator))   # fused single log

    outputs = outputs.reshape(I, T)
    logabsdet = logabsdet.reshape(I, T)
    inside = jnp.logical_and(x_in >= -BOUND, x_in <= BOUND)        # identity outside box
    u_ref[...] = jnp.where(inside, outputs, x_in)
    ld_ref[...] = ld_ref[...] + jnp.sum(jnp.where(inside, logabsdet, 0.0),
                                        axis=0, keepdims=True)


# ---------------------------------------------------------------------------
# Wrapper: pad/transpose to lane-dense layout, launch the fused flow kernel
# ---------------------------------------------------------------------------
def _pick_tile(m, max_tile=512):
    pm = max(128, ((m + 127) // 128) * 128)
    if pm <= max_tile:
        return pm, pm
    pm = ((pm + max_tile - 1) // max_tile) * max_tile
    return max_tile, pm


def normalizing_cond_flow_forward(x, context, params, *, max_tile=512):
    m = x.shape[0]
    tile, pm = _pick_tile(m, max_tile)
    w1, b1, w2, b2, w3, b3 = params

    x_t = jnp.zeros((INPUT_DIM, pm), jnp.float32).at[:, :m].set(x.T)
    c_t = jnp.zeros((CONTEXT_DIM, pm), jnp.float32).at[:, :m].set(context.T)

    u_t, ld = pl.pallas_call(
        _flow_kernel,
        out_shape=(jax.ShapeDtypeStruct((INPUT_DIM, pm), jnp.float32),
                   jax.ShapeDtypeStruct((1, pm), jnp.float32)),
        grid=(pm // tile, N_LAYERS),
        in_specs=[
            pl.BlockSpec((INPUT_DIM, tile), lambda b, l: (0, b)),      # x (lane-dense)
            pl.BlockSpec((CONTEXT_DIM, tile), lambda b, l: (0, b)),    # context
            pl.BlockSpec((1, HIDDEN, CONTEXT_DIM), lambda b, l: (l, 0, 0)),
            pl.BlockSpec((1, HIDDEN, 1), lambda b, l: (l, 0, 0)),
            pl.BlockSpec((1, HIDDEN, HIDDEN), lambda b, l: (l, 0, 0)),
            pl.BlockSpec((1, HIDDEN, 1), lambda b, l: (l, 0, 0)),
            pl.BlockSpec((1, OUT_DIM, HIDDEN), lambda b, l: (l, 0, 0)),
            pl.BlockSpec((1, OUT_DIM, 1), lambda b, l: (l, 0, 0)),
        ],
        out_specs=(
            pl.BlockSpec((INPUT_DIM, tile), lambda b, l: (0, b)),      # u  (carried over l)
            pl.BlockSpec((1, tile), lambda b, l: (0, b)),              # log|detJ| accumulator
        ),
        compiler_params=pltpu.CompilerParams(
            dimension_semantics=("parallel", "arbitrary"),
            vmem_limit_bytes=32 * 1024 * 1024,
        ),
    )(x_t, c_t, w1, b1, w2, b2, w3, b3)

    return u_t[:, :m].T, ld[0, :m]


# ---------------------------------------------------------------------------
# Deterministic parameter init (mimics nn.Linear default uniform init),
# stored transposed + stacked over layers: (N_LAYERS, out_features, in_features)
# ---------------------------------------------------------------------------
def init_flow_params(key):
    w1s, b1s, w2s, b2s, w3s, b3s = [], [], [], [], [], []
    for lk in jax.random.split(key, N_LAYERS):
        k1w, k1b, k2w, k2b, k3w, k3b = jax.random.split(lk, 6)
        bnd1 = 1.0 / (CONTEXT_DIM ** 0.5)
        bnd2 = 1.0 / (HIDDEN ** 0.5)
        w1s.append(jax.random.uniform(k1w, (HIDDEN, CONTEXT_DIM), jnp.float32, -bnd1, bnd1))
        b1s.append(jax.random.uniform(k1b, (HIDDEN, 1), jnp.float32, -bnd1, bnd1))
        w2s.append(jax.random.uniform(k2w, (HIDDEN, HIDDEN), jnp.float32, -bnd2, bnd2))
        b2s.append(jax.random.uniform(k2b, (HIDDEN, 1), jnp.float32, -bnd2, bnd2))
        w3s.append(jax.random.uniform(k3w, (OUT_DIM, HIDDEN), jnp.float32, -bnd2, bnd2))
        b3s.append(jax.random.uniform(k3b, (OUT_DIM, 1), jnp.float32, -bnd2, bnd2))
    return tuple(jnp.stack(a) for a in (w1s, b1s, w2s, b2s, w3s, b3s))


if __name__ == "__main__":
    key = jax.random.PRNGKey(0)
    kx, kc, kp = jax.random.split(key, 3)
    m = 8
    x = jax.random.normal(kx, (m, INPUT_DIM), jnp.float32) * 2.0  # mix of inside/outside [-B, B]
    context = jax.random.normal(kc, (m, CONTEXT_DIM), jnp.float32)
    params = init_flow_params(kp)

    fwd = jax.jit(lambda xx, cc: normalizing_cond_flow_forward(xx, cc, params))
    u, log_det = fwd(x, context)
    jax.block_until_ready((u, log_det))

    assert u.shape == (m, INPUT_DIM) and u.dtype == jnp.float32
    assert log_det.shape == (m,) and log_det.dtype == jnp.float32
    assert bool(jnp.all(jnp.isfinite(u))) and bool(jnp.all(jnp.isfinite(log_det)))
    # identity (exact) outside the tail bound
    outside = jnp.abs(x) > BOUND
    assert bool(jnp.all(jnp.where(outside, u == x, True)))

    # exercise the multi-tile / padded-batch path as well
    m2 = 1000
    x2 = jax.random.normal(jax.random.PRNGKey(1), (m2, INPUT_DIM), jnp.float32) * 2.0
    c2 = jax.random.normal(jax.random.PRNGKey(2), (m2, CONTEXT_DIM), jnp.float32)
    u2, ld2 = jax.jit(lambda xx, cc: normalizing_cond_flow_forward(xx, cc, params))(x2, c2)
    jax.block_until_ready((u2, ld2))
    assert u2.shape == (m2, INPUT_DIM) and ld2.shape == (m2,)
    assert bool(jnp.all(jnp.isfinite(u2))) and bool(jnp.all(jnp.isfinite(ld2)))

    print("KERNEL_OK")
</pallas_src>

<mosaic_0001>
module attributes {stable_mosaic.version = 11 : i64} {
  func.func @_flow_kernel(%arg0: i32, %arg1: i32, %arg2: memref<4x128xf32, #tpu.memory_space<vmem>>, %arg3: memref<5x128xf32, #tpu.memory_space<vmem>>, %arg4: memref<1x40x5xf32, #tpu.memory_space<vmem>>, %arg5: memref<1x40x1xf32, #tpu.memory_space<vmem>>, %arg6: memref<1x40x40xf32, #tpu.memory_space<vmem>>, %arg7: memref<1x40x1xf32, #tpu.memory_space<vmem>>, %arg8: memref<1x128x40xf32, #tpu.memory_space<vmem>>, %arg9: memref<1x128x1xf32, #tpu.memory_space<vmem>>, %arg10: memref<4x128xf32, #tpu.memory_space<vmem>>, %arg11: memref<1x128xf32, #tpu.memory_space<vmem>>) attributes {dimension_semantics = [#tpu.dimension_semantics<parallel>, #tpu.dimension_semantics<arbitrary>], iteration_bounds = array<i64: 1, 3>, scalar_prefetch = 0 : i64, scratch_operands = 0 : i64, tpu.core_type = #tpu.core_type<tc>, window_params = [{transform_indices = @transform_0, window_bounds = array<i64: 4, 128>}, {transform_indices = @transform_1, window_bounds = array<i64: 5, 128>}, {transform_indices = @transform_2, window_bounds = array<i64: 1, 40, 5>}, {transform_indices = @transform_3, window_bounds = array<i64: 1, 40, 1>}, {transform_indices = @transform_4, window_bounds = array<i64: 1, 40, 40>}, {transform_indices = @transform_5, window_bounds = array<i64: 1, 40, 1>}, {transform_indices = @transform_6, window_bounds = array<i64: 1, 128, 40>}, {transform_indices = @transform_7, window_bounds = array<i64: 1, 128, 1>}, {transform_indices = @transform_8, window_bounds = array<i64: 4, 128>}, {transform_indices = @transform_9, window_bounds = array<i64: 1, 128>}]} {
    %c0_i32 = arith.constant 0 : i32
    %0 = arith.cmpi eq, %arg1, %c0_i32 : i32
    %1 = arith.extui %0 : i1 to i32
    %c0_i32_0 = arith.constant 0 : i32
    %2 = arith.cmpi ne, %1, %c0_i32_0 : i32
    scf.if %2 {
      %c0_124 = arith.constant 0 : index
      %c0_125 = arith.constant 0 : index
      %472 = vector.load %arg2[%c0_124, %c0_125] : memref<4x128xf32, #tpu.memory_space<vmem>>, vector<4x128xf32>
      %c0_126 = arith.constant 0 : index
      %c0_127 = arith.constant 0 : index
      %473 = vector.load %arg10[%c0_126, %c0_127] : memref<4x128xf32, #tpu.memory_space<vmem>>, vector<4x128xf32>
      tpu.vector_store %arg10[%c0_126, %c0_127], %472 {strides = array<i32>} : memref<4x128xf32, #tpu.memory_space<vmem>>, vector<4x128xf32>,
      %cst_128 = arith.constant 0.000000e+00 : f32
      %474 = vector.broadcast %cst_128 : f32 to vector<1x128xf32>
      %c0_129 = arith.constant 0 : index
      %c0_130 = arith.constant 0 : index
      %475 = vector.load %arg11[%c0_129, %c0_130] : memref<1x128xf32, #tpu.memory_space<vmem>>, vector<1x128xf32>
      tpu.vector_store %arg11[%c0_129, %c0_130], %474 {strides = array<i32>} : memref<1x128xf32, #tpu.memory_space<vmem>>, vector<1x128xf32>,
    } else {
    }
    %c0 = arith.constant 0 : index
    %c0_1 = arith.constant 0 : index
    %c0_2 = arith.constant 0 : index
    %3 = vector.load %arg4[%c0, %c0_1, %c0_2] : memref<1x40x5xf32, #tpu.memory_space<vmem>>, vector<1x40x5xf32>
    %4 = vector.shape_cast %3 : vector<1x40x5xf32> to vector<40x5xf32>
    %c0_3 = arith.constant 0 : index
    %c0_4 = arith.constant 0 : index
    %5 = vector.load %arg3[%c0_3, %c0_4] : memref<5x128xf32, #tpu.memory_space<vmem>>, vector<5x128xf32>
    %cst = arith.constant dense<0.000000e+00> : vector<40x128xf32>
    %6 = tpu.matmul %4, %5, %cst {dimension_numbers = #tpu.dot_dimension_numbers<[1], [0], [0], [1], [0, 0, 1, 1], [], []>} : vector<40x5xf32>, vector<5x128xf32>, vector<40x128xf32> -> vector<40x128xf32>
    %c0_5 = arith.constant 0 : index
    %c0_6 = arith.constant 0 : index
    %c0_7 = arith.constant 0 : index
    %7 = vector.load %arg5[%c0_5, %c0_6, %c0_7] : memref<1x40x1xf32, #tpu.memory_space<vmem>>, vector<1x40x1xf32>
    %8 = vector.shape_cast %7 : vector<1x40x1xf32> to vector<40x1xf32>
    %9 = vector.broadcast %8 : vector<40x1xf32> to vector<40x128xf32>
    %10 = arith.addf %6, %9 : vector<40x128xf32>
    %cst_8 = arith.constant 0.000000e+00 : f32
    %11 = vector.broadcast %cst_8 : f32 to vector<40x128xf32>
    %12 = arith.maximumf %10, %11 : vector<40x128xf32>
    %c0_9 = arith.constant 0 : index
    %c0_10 = arith.constant 0 : index
    %c0_11 = arith.constant 0 : index
    %13 = vector.load %arg6[%c0_9, %c0_10, %c0_11] : memref<1x40x40xf32, #tpu.memory_space<vmem>>, vector<1x40x40xf32>
    %14 = vector.shape_cast %13 : vector<1x40x40xf32> to vector<40x40xf32>
    %cst_12 = arith.constant dense<0.000000e+00> : vector<40x128xf32>
    %15 = tpu.matmul %14, %12, %cst_12 {dimension_numbers = #tpu.dot_dimension_numbers<[1], [0], [0], [1], [0, 0, 1, 1], [], []>} : vector<40x40xf32>, vector<40x128xf32>, vector<40x128xf32> -> vector<40x128xf32>
    %c0_13 = arith.constant 0 : index
    %c0_14 = arith.constant 0 : index
    %c0_15 = arith.constant 0 : index
    %16 = vector.load %arg7[%c0_13, %c0_14, %c0_15] : memref<1x40x1xf32, #tpu.memory_space<vmem>>, vector<1x40x1xf32>
    %17 = vector.shape_cast %16 : vector<1x40x1xf32> to vector<40x1xf32>
    %18 = vector.broadcast %17 : vector<40x1xf32> to vector<40x128xf32>
    %19 = arith.addf %15, %18 : vector<40x128xf32>
    %cst_16 = arith.constant 0.000000e+00 : f32
    %20 = vector.broadcast %cst_16 : f32 to vector<40x128xf32>
    %21 = arith.maximumf %19, %20 : vector<40x128xf32>
    %c0_17 = arith.constant 0 : index
    %c0_18 = arith.constant 0 : index
    %c0_19 = arith.constant 0 : index
    %22 = vector.load %arg8[%c0_17, %c0_18, %c0_19] : memref<1x128x40xf32, #tpu.memory_space<vmem>>, vector<1x128x40xf32>
    %23 = vector.shape_cast %22 : vector<1x128x40xf32> to vector<128x40xf32>
    %cst_20 = arith.constant dense<0.000000e+00> : vector<128x128xf32>
    %24 = tpu.matmul %23, %21, %cst_20 {dimension_numbers = #tpu.dot_dimension_numbers<[1], [0], [0], [1], [0, 0, 1, 1], [], []>} : vector<128x40xf32>, vector<40x128xf32>, vector<128x128xf32> -> vector<128x128xf32>
    %c0_21 = arith.constant 0 : index
    %c0_22 = arith.constant 0 : index
    %c0_23 = arith.constant 0 : index
    %25 = vector.load %arg9[%c0_21, %c0_22, %c0_23] : memref<1x128x1xf32, #tpu.memory_space<vmem>>, vector<1x128x1xf32>
    %26 = vector.shape_cast %25 : vector<1x128x1xf32> to vector<128x1xf32>
    %27 = vector.broadcast %26 : vector<128x1xf32> to vector<128x128xf32>
    %28 = arith.addf %24, %27 : vector<128x128xf32>
    %29 = vector.extract_strided_slice %28 {offsets = [0, 0], sizes = [32, 128], strides = [1, 1]} : vector<128x128xf32> to vector<32x128xf32>
    %30 = vector.shape_cast %29 : vector<32x128xf32> to vector<4x8x128xf32>
    %31 = vector.extract_strided_slice %28 {offsets = [32, 0], sizes = [32, 128], strides = [1, 1]} : vector<128x128xf32> to vector<32x128xf32>
    %32 = vector.shape_cast %31 : vector<32x128xf32> to vector<4x8x128xf32>
    %33 = vector.extract_strided_slice %28 {offsets = [64, 0], sizes = [32, 128], strides = [1, 1]} : vector<128x128xf32> to vector<32x128xf32>
    %34 = vector.shape_cast %33 : vector<32x128xf32> to vector<4x8x128xf32>
    %35 = vector.extract_strided_slice %28 {offsets = [96, 0], sizes = [32, 128], strides = [1, 1]} : vector<128x128xf32> to vector<32x128xf32>
    %36 = vector.shape_cast %35 : vector<32x128xf32> to vector<4x8x128xf32>
    %cst_24 = arith.constant dense<0xFF800000> : vector<4x128xf32>
    %37 = vector.multi_reduction <maximumf>, %30, %cst_24 [1] : vector<4x8x128xf32> to vector<4x128xf32>
    %38 = vector.shape_cast %37 : vector<4x128xf32> to vector<4x1x128xf32>
    %39 = vector.broadcast %38 : vector<4x1x128xf32> to vector<4x8x128xf32>
    %40 = arith.subf %30, %39 : vector<4x8x128xf32>
    %41 = math.exp %40 : vector<4x8x128xf32>
    %cst_25 = arith.constant dense<0.000000e+00> : vector<4x128xf32>
    %42 = vector.multi_reduction <add>, %41, %cst_25 [1] : vector<4x8x128xf32> to vector<4x128xf32>
    %43 = vector.shape_cast %42 : vector<4x128xf32> to vector<4x1x128xf32>
    %44 = tpu.reciprocal %43 {approx = true} : vector<4x1x128xf32> -> vector<4x1x128xf32>
    %45 = vector.broadcast %44 : vector<4x1x128xf32> to vector<4x8x128xf32>
    %46 = arith.mulf %41, %45 : vector<4x8x128xf32>
    %cst_26 = arith.constant dense<0xFF800000> : vector<4x128xf32>
    %47 = vector.multi_reduction <maximumf>, %32, %cst_26 [1] : vector<4x8x128xf32> to vector<4x128xf32>
    %48 = vector.shape_cast %47 : vector<4x128xf32> to vector<4x1x128xf32>
    %49 = vector.broadcast %48 : vector<4x1x128xf32> to vector<4x8x128xf32>
    %50 = arith.subf %32, %49 : vector<4x8x128xf32>
    %51 = math.exp %50 : vector<4x8x128xf32>
    %cst_27 = arith.constant dense<0.000000e+00> : vector<4x128xf32>
    %52 = vector.multi_reduction <add>, %51, %cst_27 [1] : vector<4x8x128xf32> to vector<4x128xf32>
    %53 = vector.shape_cast %52 : vector<4x128xf32> to vector<4x1x128xf32>
    %54 = tpu.reciprocal %53 {approx = true} : vector<4x1x128xf32> -> vector<4x1x128xf32>
    %55 = vector.broadcast %54 : vector<4x1x128xf32> to vector<4x8x128xf32>
    %56 = arith.mulf %51, %55 : vector<4x8x128xf32>
    %cst_28 = arith.constant 0.000000e+00 : f32
    %57 = vector.broadcast %cst_28 : f32 to vector<4x8x128xf32>
    %58 = arith.maximumf %36, %57 : vector<4x8x128xf32>
    %59 = math.absf %36 : vector<4x8x128xf32>
    %cst_29 = arith.constant 0.000000e+00 : f32
    %60 = vector.broadcast %cst_29 : f32 to vector<4x8x128xf32>
    %61 = arith.subf %60, %59 : vector<4x8x128xf32>
    %62 = math.exp %61 : vector<4x8x128xf32>
    %cst_30 = arith.constant 1.000000e+00 : f32
    %63 = vector.broadcast %cst_30 : f32 to vector<4x8x128xf32>
    %64 = arith.addf %63, %62 : vector<4x8x128xf32>
    %65 = math.log %64 : vector<4x8x128xf32>
    %66 = arith.addf %58, %65 : vector<4x8x128xf32>
    %cst_31 = arith.constant 1.000000e-03 : f32
    %67 = vector.broadcast %cst_31 : f32 to vector<4x8x128xf32>
    %68 = arith.addf %67, %66 : vector<4x8x128xf32>
    %cst_32 = arith.constant 0.000000e+00 : f32
    %69 = vector.broadcast %cst_32 : f32 to vector<4x8x128xf32>
    %70 = arith.subf %69, %34 : vector<4x8x128xf32>
    %71 = math.exp %70 : vector<4x8x128xf32>
    %cst_33 = arith.constant 1.000000e+00 : f32
    %72 = vector.broadcast %cst_33 : f32 to vector<4x8x128xf32>
    %73 = arith.addf %72, %71 : vector<4x8x128xf32>
    %74 = tpu.reciprocal %73 {approx = true} : vector<4x8x128xf32> -> vector<4x8x128xf32>
    %cst_34 = arith.constant 0.949999988 : f32
    %75 = vector.broadcast %cst_34 : f32 to vector<4x8x128xf32>
    %76 = arith.mulf %75, %74 : vector<4x8x128xf32>
    %cst_35 = arith.constant 2.500000e-02 : f32
    %77 = vector.broadcast %cst_35 : f32 to vector<4x8x128xf32>
    %78 = arith.addf %76, %77 : vector<4x8x128xf32>
    %cst_36 = arith.constant 0.991999983 : f32
    %79 = vector.broadcast %cst_36 : f32 to vector<4x8x128xf32>
    %80 = arith.mulf %79, %46 : vector<4x8x128xf32>
    %cst_37 = arith.constant 1.000000e-03 : f32
    %81 = vector.broadcast %cst_37 : f32 to vector<4x8x128xf32>
    %82 = arith.addf %81, %80 : vector<4x8x128xf32>
    %cst_38 = arith.constant 0.991999983 : f32
    %83 = vector.broadcast %cst_38 : f32 to vector<4x8x128xf32>
    %84 = arith.mulf %83, %56 : vector<4x8x128xf32>
    %cst_39 = arith.constant 1.000000e-03 : f32
    %85 = vector.broadcast %cst_39 : f32 to vector<4x8x128xf32>
    %86 = arith.addf %85, %84 : vector<4x8x128xf32>
    %87 = tpu.iota {dimensions = array<i32: 1>} : vector<4x8x128xi32>
    %cst_40 = arith.constant 0.000000e+00 : f32
    %88 = vector.broadcast %cst_40 : f32 to vector<4x1x128xf32>
    %cst_41 = arith.constant 0.000000e+00 : f32
    %89 = vector.broadcast %cst_41 : f32 to vector<4x8x128xf32>
    %cst_42 = arith.constant 0.000000e+00 : f32
    %90 = vector.broadcast %cst_42 : f32 to vector<4x8x128xf32>
    %c0_i32_43 = arith.constant 0 : i32
    %91 = vector.broadcast %c0_i32_43 : i32 to vector<4x8x128xi32>
    %92 = arith.cmpi eq, %87, %91 : vector<4x8x128xi32>
    %93 = vector.shape_cast %88 : vector<4x1x128xf32> to vector<4x1x128xf32>
    %94 = vector.broadcast %93 : vector<4x1x128xf32> to vector<4x8x128xf32>
    %95 = arith.select %92, %94, %90 : vector<4x8x128xi1>, vector<4x8x128xf32>
    %96 = vector.extract_strided_slice %82 {offsets = [0, 0, 0], sizes = [4, 1, 128], strides = [1, 1, 1]} : vector<4x8x128xf32> to vector<4x1x128xf32>
    %97 = arith.addf %88, %96 : vector<4x1x128xf32>
    %c0_i32_44 = arith.constant 0 : i32
    %98 = vector.broadcast %c0_i32_44 : i32 to vector<4x8x128xi32>
    %99 = arith.cmpi eq, %87, %98 : vector<4x8x128xi32>
    %100 = vector.shape_cast %97 : vector<4x1x128xf32> to vector<4x1x128xf32>
    %101 = vector.broadcast %100 : vector<4x1x128xf32> to vector<4x8x128xf32>
    %102 = arith.select %99, %101, %89 : vector<4x8x128xi1>, vector<4x8x128xf32>
    %c1_i32 = arith.constant 1 : i32
    %103 = vector.broadcast %c1_i32 : i32 to vector<4x8x128xi32>
    %104 = arith.cmpi eq, %87, %103 : vector<4x8x128xi32>
    %105 = vector.shape_cast %97 : vector<4x1x128xf32> to vector<4x1x128xf32>
    %106 = vector.broadcast %105 : vector<4x1x128xf32> to vector<4x8x128xf32>
    %107 = arith.select %104, %106, %95 : vector<4x8x128xi1>, vector<4x8x128xf32>
    %108 = vector.extract_strided_slice %82 {offsets = [0, 1, 0], sizes = [4, 1, 128], strides = [1, 1, 1]} : vector<4x8x128xf32> to vector<4x1x128xf32>
    %109 = arith.addf %97, %108 : vector<4x1x128xf32>
    %c1_i32_45 = arith.constant 1 : i32
    %110 = vector.broadcast %c1_i32_45 : i32 to vector<4x8x128xi32>
    %111 = arith.cmpi eq, %87, %110 : vector<4x8x128xi32>
    %112 = vector.shape_cast %109 : vector<4x1x128xf32> to vector<4x1x128xf32>
    %113 = vector.broadcast %112 : vector<4x1x128xf32> to vector<4x8x128xf32>
    %114 = arith.select %111, %113, %102 : vector<4x8x128xi1>, vector<4x8x128xf32>
    %c2_i32 = arith.constant 2 : i32
    %115 = vector.broadcast %c2_i32 : i32 to vector<4x8x128xi32>
    %116 = arith.cmpi eq, %87, %115 : vector<4x8x128xi32>
    %117 = vector.shape_cast %109 : vector<4x1x128xf32> to vector<4x1x128xf32>
    %118 = vector.broadcast %117 : vector<4x1x128xf32> to vector<4x8x128xf32>
    %119 = arith.select %116, %118, %107 : vector<4x8x128xi1>, vector<4x8x128xf32>
    %120 = vector.extract_strided_slice %82 {offsets = [0, 2, 0], sizes = [4, 1, 128], strides = [1, 1, 1]} : vector<4x8x128xf32> to vector<4x1x128xf32>
    %121 = arith.addf %109, %120 : vector<4x1x128xf32>
    %c2_i32_46 = arith.constant 2 : i32
    %122 = vector.broadcast %c2_i32_46 : i32 to vector<4x8x128xi32>
    %123 = arith.cmpi eq, %87, %122 : vector<4x8x128xi32>
    %124 = vector.shape_cast %121 : vector<4x1x128xf32> to vector<4x1x128xf32>
    %125 = vector.broadcast %124 : vector<4x1x128xf32> to vector<4x8x128xf32>
    %126 = arith.select %123, %125, %114 : vector<4x8x128xi1>, vector<4x8x128xf32>
    %c3_i32 = arith.constant 3 : i32
    %127 = vector.broadcast %c3_i32 : i32 to vector<4x8x128xi32>
    %128 = arith.cmpi eq, %87, %127 : vector<4x8x128xi32>
    %129 = vector.shape_cast %121 : vector<4x1x128xf32> to vector<4x1x128xf32>
    %130 = vector.broadcast %129 : vector<4x1x128xf32> to vector<4x8x128xf32>
    %131 = arith.select %128, %130, %119 : vector<4x8x128xi1>, vector<4x8x128xf32>
    %132 = vector.extract_strided_slice %82 {offsets = [0, 3, 0], sizes = [4, 1, 128], strides = [1, 1, 1]} : vector<4x8x128xf32> to vector<4x1x128xf32>
    %133 = arith.addf %121, %132 : vector<4x1x128xf32>
    %c3_i32_47 = arith.constant 3 : i32
    %134 = vector.broadcast %c3_i32_47 : i32 to vector<4x8x128xi32>
    %135 = arith.cmpi eq, %87, %134 : vector<4x8x128xi32>
    %136 = vector.shape_cast %133 : vector<4x1x128xf32> to vector<4x1x128xf32>
    %137 = vector.broadcast %136 : vector<4x1x128xf32> to vector<4x8x128xf32>
    %138 = arith.select %135, %137, %126 : vector<4x8x128xi1>, vector<4x8x128xf32>
    %c4_i32 = arith.constant 4 : i32
    %139 = vector.broadcast %c4_i32 : i32 to vector<4x8x128xi32>
    %140 = arith.cmpi eq, %87, %139 : vector<4x8x128xi32>
    %141 = vector.shape_cast %133 : vector<4x1x128xf32> to vector<4x1x128xf32>
    %142 = vector.broadcast %141 : vector<4x1x128xf32> to vector<4x8x128xf32>
    %143 = arith.select %140, %142, %131 : vector<4x8x128xi1>, vector<4x8x128xf32>
    %144 = vector.extract_strided_slice %82 {offsets = [0, 4, 0], sizes = [4, 1, 128], strides = [1, 1, 1]} : vector<4x8x128xf32> to vector<4x1x128xf32>
    %145 = arith.addf %133, %144 : vector<4x1x128xf32>
    %c4_i32_48 = arith.constant 4 : i32
    %146 = vector.broadcast %c4_i32_48 : i32 to vector<4x8x128xi32>
    %147 = arith.cmpi eq, %87, %146 : vector<4x8x128xi32>
    %148 = vector.shape_cast %145 : vector<4x1x128xf32> to vector<4x1x128xf32>
    %149 = vector.broadcast %148 : vector<4x1x128xf32> to vector<4x8x128xf32>
    %150 = arith.select %147, %149, %138 : vector<4x8x128xi1>, vector<4x8x128xf32>
    %c5_i32 = arith.constant 5 : i32
    %151 = vector.broadcast %c5_i32 : i32 to vector<4x8x128xi32>
    %152 = arith.cmpi eq, %87, %151 : vector<4x8x128xi32>
    %153 = vector.shape_cast %145 : vector<4x1x128xf32> to vector<4x1x128xf32>
    %154 = vector.broadcast %153 : vector<4x1x128xf32> to vector<4x8x128xf32>
    %155 = arith.select %152, %154, %143 : vector<4x8x128xi1>, vector<4x8x128xf32>
    %156 = vector.extract_strided_slice %82 {offsets = [0, 5, 0], sizes = [4, 1, 128], strides = [1, 1, 1]} : vector<4x8x128xf32> to vector<4x1x128xf32>
    %157 = arith.addf %145, %156 : vector<4x1x128xf32>
    %c5_i32_49 = arith.constant 5 : i32
    %158 = vector.broadcast %c5_i32_49 : i32 to vector<4x8x128xi32>
    %159 = arith.cmpi eq, %87, %158 : vector<4x8x128xi32>
    %160 = vector.shape_cast %157 : vector<4x1x128xf32> to vector<4x1x128xf32>
    %161 = vector.broadcast %160 : vector<4x1x128xf32> to vector<4x8x128xf32>
    %162 = arith.select %159, %161, %150 : vector<4x8x128xi1>, vector<4x8x128xf32>
    %c6_i32 = arith.constant 6 : i32
    %163 = vector.broadcast %c6_i32 : i32 to vector<4x8x128xi32>
    %164 = arith.cmpi eq, %87, %163 : vector<4x8x128xi32>
    %165 = vector.shape_cast %157 : vector<4x1x128xf32> to vector<4x1x128xf32>
    %166 = vector.broadcast %165 : vector<4x1x128xf32> to vector<4x8x128xf32>
    %167 = arith.select %164, %166, %155 : vector<4x8x128xi1>, vector<4x8x128xf32>
    %168 = vector.extract_strided_slice %82 {offsets = [0, 6, 0], sizes = [4, 1, 128], strides = [1, 1, 1]} : vector<4x8x128xf32> to vector<4x1x128xf32>
    %169 = arith.addf %157, %168 : vector<4x1x128xf32>
    %c6_i32_50 = arith.constant 6 : i32
    %170 = vector.broadcast %c6_i32_50 : i32 to vector<4x8x128xi32>
    %171 = arith.cmpi eq, %87, %170 : vector<4x8x128xi32>
    %172 = vector.shape_cast %169 : vector<4x1x128xf32> to vector<4x1x128xf32>
    %173 = vector.broadcast %172 : vector<4x1x128xf32> to vector<4x8x128xf32>
    %174 = arith.select %171, %173, %162 : vector<4x8x128xi1>, vector<4x8x128xf32>
    %c7_i32 = arith.constant 7 : i32
    %175 = vector.broadcast %c7_i32 : i32 to vector<4x8x128xi32>
    %176 = arith.cmpi eq, %87, %175 : vector<4x8x128xi32>
    %177 = vector.shape_cast %169 : vector<4x1x128xf32> to vector<4x1x128xf32>
    %178 = vector.broadcast %177 : vector<4x1x128xf32> to vector<4x8x128xf32>
    %179 = arith.select %176, %178, %167 : vector<4x8x128xi1>, vector<4x8x128xf32>
    %180 = vector.extract_strided_slice %82 {offsets = [0, 7, 0], sizes = [4, 1, 128], strides = [1, 1, 1]} : vector<4x8x128xf32> to vector<4x1x128xf32>
    %181 = arith.addf %169, %180 : vector<4x1x128xf32>
    %c7_i32_51 = arith.constant 7 : i32
    %182 = vector.broadcast %c7_i32_51 : i32 to vector<4x8x128xi32>
    %183 = arith.cmpi eq, %87, %182 : vector<4x8x128xi32>
    %184 = vector.shape_cast %181 : vector<4x1x128xf32> to vector<4x1x128xf32>
    %185 = vector.broadcast %184 : vector<4x1x128xf32> to vector<4x8x128xf32>
    %186 = arith.select %183, %185, %174 : vector<4x8x128xi1>, vector<4x8x128xf32>
    %cst_52 = arith.constant 0.000000e+00 : f32
    %187 = vector.broadcast %cst_52 : f32 to vector<4x1x128xf32>
    %cst_53 = arith.constant 0.000000e+00 : f32
    %188 = vector.broadcast %cst_53 : f32 to vector<4x8x128xf32>
    %cst_54 = arith.constant 0.000000e+00 : f32
    %189 = vector.broadcast %cst_54 : f32 to vector<4x8x128xf32>
    %c0_i32_55 = arith.constant 0 : i32
    %190 = vector.broadcast %c0_i32_55 : i32 to vector<4x8x128xi32>
    %191 = arith.cmpi eq, %87, %190 : vector<4x8x128xi32>
    %192 = vector.shape_cast %187 : vector<4x1x128xf32> to vector<4x1x128xf32>
    %193 = vector.broadcast %192 : vector<4x1x128xf32> to vector<4x8x128xf32>
    %194 = arith.select %191, %193, %189 : vector<4x8x128xi1>, vector<4x8x128xf32>
    %195 = vector.extract_strided_slice %86 {offsets = [0, 0, 0], sizes = [4, 1, 128], strides = [1, 1, 1]} : vector<4x8x128xf32> to vector<4x1x128xf32>
    %196 = arith.addf %187, %195 : vector<4x1x128xf32>
    %c0_i32_56 = arith.constant 0 : i32
    %197 = vector.broadcast %c0_i32_56 : i32 to vector<4x8x128xi32>
    %198 = arith.cmpi eq, %87, %197 : vector<4x8x128xi32>
    %199 = vector.shape_cast %196 : vector<4x1x128xf32> to vector<4x1x128xf32>
    %200 = vector.broadcast %199 : vector<4x1x128xf32> to vector<4x8x128xf32>
    %201 = arith.select %198, %200, %188 : vector<4x8x128xi1>, vector<4x8x128xf32>
    %c1_i32_57 = arith.constant 1 : i32
    %202 = vector.broadcast %c1_i32_57 : i32 to vector<4x8x128xi32>
    %203 = arith.cmpi eq, %87, %202 : vector<4x8x128xi32>
    %204 = vector.shape_cast %196 : vector<4x1x128xf32> to vector<4x1x128xf32>
    %205 = vector.broadcast %204 : vector<4x1x128xf32> to vector<4x8x128xf32>
    %206 = arith.select %203, %205, %194 : vector<4x8x128xi1>, vector<4x8x128xf32>
    %207 = vector.extract_strided_slice %86 {offsets = [0, 1, 0], sizes = [4, 1, 128], strides = [1, 1, 1]} : vector<4x8x128xf32> to vector<4x1x128xf32>
    %208 = arith.addf %196, %207 : vector<4x1x128xf32>
    %c1_i32_58 = arith.constant 1 : i32
    %209 = vector.broadcast %c1_i32_58 : i32 to vector<4x8x128xi32>
    %210 = arith.cmpi eq, %87, %209 : vector<4x8x128xi32>
    %211 = vector.shape_cast %208 : vector<4x1x128xf32> to vector<4x1x128xf32>
    %212 = vector.broadcast %211 : vector<4x1x128xf32> to vector<4x8x128xf32>
    %213 = arith.select %210, %212, %201 : vector<4x8x128xi1>, vector<4x8x128xf32>
    %c2_i32_59 = arith.constant 2 : i32
    %214 = vector.broadcast %c2_i32_59 : i32 to vector<4x8x128xi32>
    %215 = arith.cmpi eq, %87, %214 : vector<4x8x128xi32>
    %216 = vector.shape_cast %208 : vector<4x1x128xf32> to vector<4x1x128xf32>
    %217 = vector.broadcast %216 : vector<4x1x128xf32> to vector<4x8x128xf32>
    %218 = arith.select %215, %217, %206 : vector<4x8x128xi1>, vector<4x8x128xf32>
    %219 = vector.extract_strided_slice %86 {offsets = [0, 2, 0], sizes = [4, 1, 128], strides = [1, 1, 1]} : vector<4x8x128xf32> to vector<4x1x128xf32>
    %220 = arith.addf %208, %219 : vector<4x1x128xf32>
    %c2_i32_60 = arith.constant 2 : i32
    %221 = vector.broadcast %c2_i32_60 : i32 to vector<4x8x128xi32>
    %222 = arith.cmpi eq, %87, %221 : vector<4x8x128xi32>
    %223 = vector.shape_cast %220 : vector<4x1x128xf32> to vector<4x1x128xf32>
    %224 = vector.broadcast %223 : vector<4x1x128xf32> to vector<4x8x128xf32>
    %225 = arith.select %222, %224, %213 : vector<4x8x128xi1>, vector<4x8x128xf32>
    %c3_i32_61 = arith.constant 3 : i32
    %226 = vector.broadcast %c3_i32_61 : i32 to vector<4x8x128xi32>
    %227 = arith.cmpi eq, %87, %226 : vector<4x8x128xi32>
    %228 = vector.shape_cast %220 : vector<4x1x128xf32> to vector<4x1x128xf32>
    %229 = vector.broadcast %228 : vector<4x1x128xf32> to vector<4x8x128xf32>
    %230 = arith.select %227, %229, %218 : vector<4x8x128xi1>, vector<4x8x128xf32>
    %231 = vector.extract_strided_slice %86 {offsets = [0, 3, 0], sizes = [4, 1, 128], strides = [1, 1, 1]} : vector<4x8x128xf32> to vector<4x1x128xf32>
    %232 = arith.addf %220, %231 : vector<4x1x128xf32>
    %c3_i32_62 = arith.constant 3 : i32
    %233 = vector.broadcast %c3_i32_62 : i32 to vector<4x8x128xi32>
    %234 = arith.cmpi eq, %87, %233 : vector<4x8x128xi32>
    %235 = vector.shape_cast %232 : vector<4x1x128xf32> to vector<4x1x128xf32>
    %236 = vector.broadcast %235 : vector<4x1x128xf32> to vector<4x8x128xf32>
    %237 = arith.select %234, %236, %225 : vector<4x8x128xi1>, vector<4x8x128xf32>
    %c4_i32_63 = arith.constant 4 : i32
    %238 = vector.broadcast %c4_i32_63 : i32 to vector<4x8x128xi32>
    %239 = arith.cmpi eq, %87, %238 : vector<4x8x128xi32>
    %240 = vector.shape_cast %232 : vector<4x1x128xf32> to vector<4x1x128xf32>
    %241 = vector.broadcast %240 : vector<4x1x128xf32> to vector<4x8x128xf32>
    %242 = arith.select %239, %241, %230 : vector<4x8x128xi1>, vector<4x8x128xf32>
    %243 = vector.extract_strided_slice %86 {offsets = [0, 4, 0], sizes = [4, 1, 128], strides = [1, 1, 1]} : vector<4x8x128xf32> to vector<4x1x128xf32>
    %244 = arith.addf %232, %243 : vector<4x1x128xf32>
    %c4_i32_64 = arith.constant 4 : i32
    %245 = vector.broadcast %c4_i32_64 : i32 to vector<4x8x128xi32>
    %246 = arith.cmpi eq, %87, %245 : vector<4x8x128xi32>
    %247 = vector.shape_cast %244 : vector<4x1x128xf32> to vector<4x1x128xf32>
    %248 = vector.broadcast %247 : vector<4x1x128xf32> to vector<4x8x128xf32>
    %249 = arith.select %246, %248, %237 : vector<4x8x128xi1>, vector<4x8x128xf32>
    %c5_i32_65 = arith.constant 5 : i32
    %250 = vector.broadcast %c5_i32_65 : i32 to vector<4x8x128xi32>
    %251 = arith.cmpi eq, %87, %250 : vector<4x8x128xi32>
    %252 = vector.shape_cast %244 : vector<4x1x128xf32> to vector<4x1x128xf32>
    %253 = vector.broadcast %252 : vector<4x1x128xf32> to vector<4x8x128xf32>
    %254 = arith.select %251, %253, %242 : vector<4x8x128xi1>, vector<4x8x128xf32>
    %255 = vector.extract_strided_slice %86 {offsets = [0, 5, 0], sizes = [4, 1, 128], strides = [1, 1, 1]} : vector<4x8x128xf32> to vector<4x1x128xf32>
    %256 = arith.addf %244, %255 : vector<4x1x128xf32>
    %c5_i32_66 = arith.constant 5 : i32
    %257 = vector.broadcast %c5_i32_66 : i32 to vector<4x8x128xi32>
    %258 = arith.cmpi eq, %87, %257 : vector<4x8x128xi32>
    %259 = vector.shape_cast %256 : vector<4x1x128xf32> to vector<4x1x128xf32>
    %260 = vector.broadcast %259 : vector<4x1x128xf32> to vector<4x8x128xf32>
    %261 = arith.select %258, %260, %249 : vector<4x8x128xi1>, vector<4x8x128xf32>
    %c6_i32_67 = arith.constant 6 : i32
    %262 = vector.broadcast %c6_i32_67 : i32 to vector<4x8x128xi32>
    %263 = arith.cmpi eq, %87, %262 : vector<4x8x128xi32>
    %264 = vector.shape_cast %256 : vector<4x1x128xf32> to vector<4x1x128xf32>
    %265 = vector.broadcast %264 : vector<4x1x128xf32> to vector<4x8x128xf32>
    %266 = arith.select %263, %265, %254 : vector<4x8x128xi1>, vector<4x8x128xf32>
    %267 = vector.extract_strided_slice %86 {offsets = [0, 6, 0], sizes = [4, 1, 128], strides = [1, 1, 1]} : vector<4x8x128xf32> to vector<4x1x128xf32>
    %268 = arith.addf %256, %267 : vector<4x1x128xf32>
    %c6_i32_68 = arith.constant 6 : i32
    %269 = vector.broadcast %c6_i32_68 : i32 to vector<4x8x128xi32>
    %270 = arith.cmpi eq, %87, %269 : vector<4x8x128xi32>
    %271 = vector.shape_cast %268 : vector<4x1x128xf32> to vector<4x1x128xf32>
    %272 = vector.broadcast %271 : vector<4x1x128xf32> to vector<4x8x128xf32>
    %273 = arith.select %270, %272, %261 : vector<4x8x128xi1>, vector<4x8x128xf32>
    %c7_i32_69 = arith.constant 7 : i32
    %274 = vector.broadcast %c7_i32_69 : i32 to vector<4x8x128xi32>
    %275 = arith.cmpi eq, %87, %274 : vector<4x8x128xi32>
    %276 = vector.shape_cast %268 : vector<4x1x128xf32> to vector<4x1x128xf32>
    %277 = vector.broadcast %276 : vector<4x1x128xf32> to vector<4x8x128xf32>
    %278 = arith.select %275, %277, %266 : vector<4x8x128xi1>, vector<4x8x128xf32>
    %279 = vector.extract_strided_slice %86 {offsets = [0, 7, 0], sizes = [4, 1, 128], strides = [1, 1, 1]} : vector<4x8x128xf32> to vector<4x1x128xf32>
    %280 = arith.addf %268, %279 : vector<4x1x128xf32>
    %c7_i32_70 = arith.constant 7 : i32
    %281 = vector.broadcast %c7_i32_70 : i32 to vector<4x8x128xi32>
    %282 = arith.cmpi eq, %87, %281 : vector<4x8x128xi32>
    %283 = vector.shape_cast %280 : vector<4x1x128xf32> to vector<4x1x128xf32>
    %284 = vector.broadcast %283 : vector<4x1x128xf32> to vector<4x8x128xf32>
    %285 = arith.select %282, %284, %273 : vector<4x8x128xi1>, vector<4x8x128xf32>
    %cst_71 = arith.constant 6.000000e+00 : f32
    %286 = vector.broadcast %cst_71 : f32 to vector<4x8x128xf32>
    %287 = arith.mulf %286, %186 : vector<4x8x128xf32>
    %cst_72 = arith.constant -3.000000e+00 : f32
    %288 = vector.broadcast %cst_72 : f32 to vector<4x8x128xf32>
    %289 = arith.addf %287, %288 : vector<4x8x128xf32>
    %cst_73 = arith.constant 6.000000e+00 : f32
    %290 = vector.broadcast %cst_73 : f32 to vector<4x8x128xf32>
    %291 = arith.mulf %290, %179 : vector<4x8x128xf32>
    %cst_74 = arith.constant -3.000000e+00 : f32
    %292 = vector.broadcast %cst_74 : f32 to vector<4x8x128xf32>
    %293 = arith.addf %291, %292 : vector<4x8x128xf32>
    %cst_75 = arith.constant 6.000000e+00 : f32
    %294 = vector.broadcast %cst_75 : f32 to vector<4x8x128xf32>
    %295 = arith.mulf %294, %285 : vector<4x8x128xf32>
    %cst_76 = arith.constant -3.000000e+00 : f32
    %296 = vector.broadcast %cst_76 : f32 to vector<4x8x128xf32>
    %297 = arith.addf %295, %296 : vector<4x8x128xf32>
    %cst_77 = arith.constant 6.000000e+00 : f32
    %298 = vector.broadcast %cst_77 : f32 to vector<4x8x128xf32>
    %299 = arith.mulf %298, %278 : vector<4x8x128xf32>
    %cst_78 = arith.constant -3.000000e+00 : f32
    %300 = vector.broadcast %cst_78 : f32 to vector<4x8x128xf32>
    %301 = arith.addf %299, %300 : vector<4x8x128xf32>
    %c7_i32_79 = arith.constant 7 : i32
    %302 = vector.broadcast %c7_i32_79 : i32 to vector<4x8x128xi32>
    %303 = arith.cmpi eq, %87, %302 : vector<4x8x128xi32>
    %cst_80 = arith.constant 3.000000e+00 : f32
    %304 = vector.broadcast %cst_80 : f32 to vector<4x8x128xf32>
    %305 = arith.select %303, %304, %289 : vector<4x8x128xi1>, vector<4x8x128xf32>
    %cst_81 = arith.constant 3.000000e+00 : f32
    %306 = vector.broadcast %cst_81 : f32 to vector<4x8x128xf32>
    %307 = arith.select %303, %306, %297 : vector<4x8x128xi1>, vector<4x8x128xf32>
    %308 = arith.subf %305, %293 : vector<4x8x128xf32>
    %309 = arith.subf %307, %301 : vector<4x8x128xf32>
    %310 = arith.divf %309, %308 : vector<4x8x128xf32>
    %c0_82 = arith.constant 0 : index
    %c0_83 = arith.constant 0 : index
    %311 = vector.load %arg10[%c0_82, %c0_83] : memref<4x128xf32, #tpu.memory_space<vmem>>, vector<4x128xf32>
    %cst_84 = arith.constant -3.000000e+00 : f32
    %cst_85 = arith.constant 3.000000e+00 : f32
    %312 = vector.broadcast %cst_84 : f32 to vector<4x128xf32>
    %313 = arith.maximumf %312, %311 : vector<4x128xf32>
    %314 = vector.broadcast %cst_85 : f32 to vector<4x128xf32>
    %315 = arith.minimumf %314, %313 : vector<4x128xf32>
    %316 = vector.shape_cast %315 : vector<4x128xf32> to vector<4x1x128xf32>
    %cst_86 = arith.constant -2.99999905 : f32
    %317 = vector.broadcast %cst_86 : f32 to vector<4x1x128xf32>
    %318 = arith.cmpf oge, %316, %317 : vector<4x1x128xf32>
    %319 = arith.extui %318 : vector<4x1x128xi1> to vector<4x1x128xi32>
    %cst_87 = arith.constant 9.99999997E-7 : f32
    %320 = vector.broadcast %cst_87 : f32 to vector<4x8x128xf32>
    %321 = arith.addf %305, %320 : vector<4x8x128xf32>
    %322 = vector.broadcast %316 : vector<4x1x128xf32> to vector<4x8x128xf32>
    %323 = arith.cmpf oge, %322, %321 : vector<4x8x128xf32>
    %324 = arith.extui %323 : vector<4x8x128xi1> to vector<4x8x128xi32>
    %cst_88 = arith.constant dense<0> : vector<4x128xi32>
    %325 = vector.multi_reduction <add>, %324, %cst_88 [1] : vector<4x8x128xi32> to vector<4x128xi32>
    %326 = vector.shape_cast %325 : vector<4x128xi32> to vector<4x1x128xi32>
    %327 = arith.addi %319, %326 : vector<4x1x128xi32>
    %c1_i32_89 = arith.constant 1 : i32
    %328 = vector.broadcast %c1_i32_89 : i32 to vector<4x1x128xi32>
    %329 = arith.subi %327, %328 : vector<4x1x128xi32>
    %c0_i32_90 = arith.constant 0 : i32
    %c7_i32_91 = arith.constant 7 : i32
    %330 = vector.broadcast %c0_i32_90 : i32 to vector<4x1x128xi32>
    %331 = arith.maxsi %330, %329 : vector<4x1x128xi32>
    %332 = vector.broadcast %c7_i32_91 : i32 to vector<4x1x128xi32>
    %333 = arith.minsi %332, %331 : vector<4x1x128xi32>
    %334 = vector.broadcast %333 : vector<4x1x128xi32> to vector<4x8x128xi32>
    %335 = arith.cmpi eq, %87, %334 : vector<4x8x128xi32>
    %336 = arith.extui %335 : vector<4x8x128xi1> to vector<4x8x128xi32>
    %337 = arith.sitofp %336 : vector<4x8x128xi32> to vector<4x8x128xf32>
    %338 = arith.mulf %308, %337 : vector<4x8x128xf32>
    %cst_92 = arith.constant dense<0.000000e+00> : vector<4x128xf32>
    %339 = vector.multi_reduction <add>, %338, %cst_92 [1] : vector<4x8x128xf32> to vector<4x128xf32>
    %340 = vector.shape_cast %339 : vector<4x128xf32> to vector<4x1x128xf32>
    %341 = arith.mulf %293, %337 : vector<4x8x128xf32>
    %cst_93 = arith.constant dense<0.000000e+00> : vector<4x128xf32>
    %342 = vector.multi_reduction <add>, %341, %cst_93 [1] : vector<4x8x128xf32> to vector<4x128xf32>
    %343 = vector.shape_cast %342 : vector<4x128xf32> to vector<4x1x128xf32>
    %344 = arith.mulf %301, %337 : vector<4x8x128xf32>
    %cst_94 = arith.constant dense<0.000000e+00> : vector<4x128xf32>
    %345 = vector.multi_reduction <add>, %344, %cst_94 [1] : vector<4x8x128xf32> to vector<4x128xf32>
    %346 = vector.shape_cast %345 : vector<4x128xf32> to vector<4x1x128xf32>
    %347 = arith.mulf %309, %337 : vector<4x8x128xf32>
    %cst_95 = arith.constant dense<0.000000e+00> : vector<4x128xf32>
    %348 = vector.multi_reduction <add>, %347, %cst_95 [1] : vector<4x8x128xf32> to vector<4x128xf32>
    %349 = vector.shape_cast %348 : vector<4x128xf32> to vector<4x1x128xf32>
    %350 = arith.mulf %310, %337 : vector<4x8x128xf32>
    %cst_96 = arith.constant dense<0.000000e+00> : vector<4x128xf32>
    %351 = vector.multi_reduction <add>, %350, %cst_96 [1] : vector<4x8x128xf32> to vector<4x128xf32>
    %352 = vector.shape_cast %351 : vector<4x128xf32> to vector<4x1x128xf32>
    %353 = arith.mulf %78, %337 : vector<4x8x128xf32>
    %cst_97 = arith.constant dense<0.000000e+00> : vector<4x128xf32>
    %354 = vector.multi_reduction <add>, %353, %cst_97 [1] : vector<4x8x128xf32> to vector<4x128xf32>
    %355 = vector.shape_cast %354 : vector<4x128xf32> to vector<4x1x128xf32>
    %c1_i32_98 = arith.constant 1 : i32
    %356 = vector.broadcast %c1_i32_98 : i32 to vector<4x1x128xi32>
    %357 = arith.subi %333, %356 : vector<4x1x128xi32>
    %358 = vector.broadcast %357 : vector<4x1x128xi32> to vector<4x8x128xi32>
    %359 = arith.cmpi eq, %87, %358 : vector<4x8x128xi32>
    %360 = arith.extui %359 : vector<4x8x128xi1> to vector<4x8x128xi32>
    %361 = arith.sitofp %360 : vector<4x8x128xi32> to vector<4x8x128xf32>
    %362 = arith.mulf %68, %361 : vector<4x8x128xf32>
    %cst_99 = arith.constant dense<0.000000e+00> : vector<4x128xf32>
    %363 = vector.multi_reduction <add>, %362, %cst_99 [1] : vector<4x8x128xf32> to vector<4x128xf32>
    %364 = vector.shape_cast %363 : vector<4x128xf32> to vector<4x1x128xf32>
    %365 = arith.mulf %68, %337 : vector<4x8x128xf32>
    %cst_100 = arith.constant dense<0.000000e+00> : vector<4x128xf32>
    %366 = vector.multi_reduction <add>, %365, %cst_100 [1] : vector<4x8x128xf32> to vector<4x128xf32>
    %367 = vector.shape_cast %366 : vector<4x128xf32> to vector<4x1x128xf32>
    %c0_i32_101 = arith.constant 0 : i32
    %368 = vector.broadcast %c0_i32_101 : i32 to vector<4x1x128xi32>
    %369 = arith.cmpi eq, %333, %368 : vector<4x1x128xi32>
    %cst_102 = arith.constant 1.000000e+00 : f32
    %370 = vector.broadcast %cst_102 : f32 to vector<4x1x128xf32>
    %371 = arith.select %369, %370, %364 : vector<4x1x128xi1>, vector<4x1x128xf32>
    %c7_i32_103 = arith.constant 7 : i32
    %372 = vector.broadcast %c7_i32_103 : i32 to vector<4x1x128xi32>
    %373 = arith.cmpi eq, %333, %372 : vector<4x1x128xi32>
    %cst_104 = arith.constant 1.000000e+00 : f32
    %374 = vector.broadcast %cst_104 : f32 to vector<4x1x128xf32>
    %375 = arith.select %373, %374, %367 : vector<4x1x128xi1>, vector<4x1x128xf32>
    %376 = arith.divf %371, %375 : vector<4x1x128xf32>
    %377 = math.sqrt %376 : vector<4x1x128xf32>
    %378 = arith.mulf %355, %371 : vector<4x1x128xf32>
    %cst_105 = arith.constant 1.000000e+00 : f32
    %379 = vector.broadcast %cst_105 : f32 to vector<4x1x128xf32>
    %380 = arith.subf %379, %355 : vector<4x1x128xf32>
    %381 = arith.mulf %380, %377 : vector<4x1x128xf32>
    %382 = arith.mulf %381, %375 : vector<4x1x128xf32>
    %383 = arith.addf %378, %382 : vector<4x1x128xf32>
    %384 = arith.divf %383, %352 : vector<4x1x128xf32>
    %385 = arith.addf %349, %346 : vector<4x1x128xf32>
    %cst_106 = arith.constant 1.000000e+00 : f32
    %386 = vector.broadcast %cst_106 : f32 to vector<4x1x128xf32>
    %387 = arith.subf %386, %355 : vector<4x1x128xf32>
    %388 = arith.mulf %387, %346 : vector<4x1x128xf32>
    %389 = arith.mulf %355, %377 : vector<4x1x128xf32>
    %390 = arith.mulf %389, %385 : vector<4x1x128xf32>
    %391 = arith.addf %388, %390 : vector<4x1x128xf32>
    %cst_107 = arith.constant 1.000000e+00 : f32
    %392 = vector.broadcast %cst_107 : f32 to vector<4x1x128xf32>
    %393 = arith.subf %392, %355 : vector<4x1x128xf32>
    %394 = arith.mulf %355, %377 : vector<4x1x128xf32>
    %395 = arith.addf %393, %394 : vector<4x1x128xf32>
    %396 = tpu.reciprocal %395 {approx = true} : vector<4x1x128xf32> -> vector<4x1x128xf32>
    %397 = arith.mulf %391, %396 : vector<4x1x128xf32>
    %398 = arith.subf %316, %343 : vector<4x1x128xf32>
    %399 = tpu.reciprocal %340 {approx = true} : vector<4x1x128xf32> -> vector<4x1x128xf32>
    %400 = arith.mulf %398, %399 : vector<4x1x128xf32>
    %cst_108 = arith.constant 0.000000e+00 : f32
    %cst_109 = arith.constant 1.000000e+00 : f32
    %401 = vector.broadcast %cst_108 : f32 to vector<4x1x128xf32>
    %402 = arith.maximumf %401, %400 : vector<4x1x128xf32>
    %403 = vector.broadcast %cst_109 : f32 to vector<4x1x128xf32>
    %404 = arith.minimumf %403, %402 : vector<4x1x128xf32>
    %405 = arith.cmpf ole, %404, %355 : vector<4x1x128xf32>
    %406 = arith.extui %405 : vector<4x1x128xi1> to vector<4x1x128xi32>
    %407 = arith.sitofp %406 : vector<4x1x128xi32> to vector<4x1x128xf32>
    %cst_110 = arith.constant 1.000000e+00 : f32
    %408 = vector.broadcast %cst_110 : f32 to vector<4x1x128xf32>
    %409 = arith.subf %408, %407 : vector<4x1x128xf32>
    %410 = arith.subf %355, %404 : vector<4x1x128xf32>
    %411 = arith.mulf %346, %410 : vector<4x1x128xf32>
    %412 = arith.mulf %384, %397 : vector<4x1x128xf32>
    %413 = arith.mulf %412, %404 : vector<4x1x128xf32>
    %414 = arith.addf %411, %413 : vector<4x1x128xf32>
    %415 = arith.mulf %414, %407 : vector<4x1x128xf32>
    %416 = arith.mulf %384, %397 : vector<4x1x128xf32>
    %cst_111 = arith.constant 1.000000e+00 : f32
    %417 = vector.broadcast %cst_111 : f32 to vector<4x1x128xf32>
    %418 = arith.subf %417, %404 : vector<4x1x128xf32>
    %419 = arith.mulf %416, %418 : vector<4x1x128xf32>
    %420 = arith.mulf %377, %385 : vector<4x1x128xf32>
    %421 = arith.subf %404, %355 : vector<4x1x128xf32>
    %422 = arith.mulf %420, %421 : vector<4x1x128xf32>
    %423 = arith.addf %419, %422 : vector<4x1x128xf32>
    %424 = arith.mulf %423, %409 : vector<4x1x128xf32>
    %425 = arith.addf %415, %424 : vector<4x1x128xf32>
    %426 = arith.subf %355, %404 : vector<4x1x128xf32>
    %427 = arith.mulf %384, %404 : vector<4x1x128xf32>
    %428 = arith.addf %426, %427 : vector<4x1x128xf32>
    %429 = arith.mulf %428, %407 : vector<4x1x128xf32>
    %cst_112 = arith.constant 1.000000e+00 : f32
    %430 = vector.broadcast %cst_112 : f32 to vector<4x1x128xf32>
    %431 = arith.subf %430, %404 : vector<4x1x128xf32>
    %432 = arith.mulf %384, %431 : vector<4x1x128xf32>
    %433 = arith.subf %404, %355 : vector<4x1x128xf32>
    %434 = arith.mulf %377, %433 : vector<4x1x128xf32>
    %435 = arith.addf %432, %434 : vector<4x1x128xf32>
    %436 = arith.mulf %435, %409 : vector<4x1x128xf32>
    %437 = arith.addf %429, %436 : vector<4x1x128xf32>
    %438 = tpu.reciprocal %437 {approx = true} : vector<4x1x128xf32> -> vector<4x1x128xf32>
    %439 = arith.mulf %425, %438 : vector<4x1x128xf32>
    %440 = arith.mulf %384, %355 : vector<4x1x128xf32>
    %441 = arith.subf %397, %346 : vector<4x1x128xf32>
    %442 = arith.mulf %440, %441 : vector<4x1x128xf32>
    %443 = arith.mulf %442, %407 : vector<4x1x128xf32>
    %444 = arith.mulf %377, %384 : vector<4x1x128xf32>
    %cst_113 = arith.constant 1.000000e+00 : f32
    %445 = vector.broadcast %cst_113 : f32 to vector<4x1x128xf32>
    %446 = arith.subf %445, %355 : vector<4x1x128xf32>
    %447 = arith.mulf %444, %446 : vector<4x1x128xf32>
    %448 = arith.subf %385, %397 : vector<4x1x128xf32>
    %449 = arith.mulf %447, %448 : vector<4x1x128xf32>
    %450 = arith.mulf %449, %409 : vector<4x1x128xf32>
    %451 = arith.addf %443, %450 : vector<4x1x128xf32>
    %452 = arith.mulf %451, %340 : vector<4x1x128xf32>
    %453 = arith.mulf %437, %437 : vector<4x1x128xf32>
    %454 = arith.divf %452, %453 : vector<4x1x128xf32>
    %455 = math.log %454 : vector<4x1x128xf32>
    %456 = vector.shape_cast %439 : vector<4x1x128xf32> to vector<4x128xf32>
    %457 = vector.shape_cast %455 : vector<4x1x128xf32> to vector<4x128xf32>
    %cst_114 = arith.constant -3.000000e+00 : f32
    %458 = vector.broadcast %cst_114 : f32 to vector<4x128xf32>
    %459 = arith.cmpf oge, %311, %458 : vector<4x128xf32>
    %cst_115 = arith.constant 3.000000e+00 : f32
    %460 = vector.broadcast %cst_115 : f32 to vector<4x128xf32>
    %461 = arith.cmpf ole, %311, %460 : vector<4x128xf32>
    %462 = arith.andi %459, %461 : vector<4x128xi1>
    %463 = arith.select %462, %456, %311 : vector<4x128xi1>, vector<4x128xf32>
    %c0_116 = arith.constant 0 : index
    %c0_117 = arith.constant 0 : index
    %464 = vector.load %arg10[%c0_116, %c0_117] : memref<4x128xf32, #tpu.memory_space<vmem>>, vector<4x128xf32>
    tpu.vector_store %arg10[%c0_116, %c0_117], %463 {strides = array<i32>} : memref<4x128xf32, #tpu.memory_space<vmem>>, vector<4x128xf32>,
    %c0_118 = arith.constant 0 : index
    %c0_119 = arith.constant 0 : index
    %465 = vector.load %arg11[%c0_118, %c0_119] : memref<1x128xf32, #tpu.memory_space<vmem>>, vector<1x128xf32>
    %cst_120 = arith.constant 0.000000e+00 : f32
    %466 = vector.broadcast %cst_120 : f32 to vector<4x128xf32>
    %467 = arith.select %462, %457, %466 : vector<4x128xi1>, vector<4x128xf32>
    %cst_121 = arith.constant dense<0.000000e+00> : vector<128xf32>
    %468 = vector.multi_reduction <add>, %467, %cst_121 [0] : vector<4x128xf32> to vector<128xf32>
    %469 = vector.shape_cast %468 : vector<128xf32> to vector<1x128xf32>
    %470 = arith.addf %465, %469 : vector<1x128xf32>
    %c0_122 = arith.constant 0 : index
    %c0_123 = arith.constant 0 : index
    %471 = vector.load %arg11[%c0_122, %c0_123] : memref<1x128xf32, #tpu.memory_space<vmem>>, vector<1x128xf32>
    tpu.vector_store %arg11[%c0_122, %c0_123], %470 {strides = array<i32>} : memref<1x128xf32, #tpu.memory_space<vmem>>, vector<1x128xf32>,
    return
  }
  func.func @transform_0(%arg0: i32, %arg1: i32) -> (i32, i32) {
    %c0_i32 = arith.constant 0 : i32
    %c0_i32_0 = arith.constant 0 : i32
    return %c0_i32, %arg0 : i32, i32
  }
  func.func @transform_1(%arg0: i32, %arg1: i32) -> (i32, i32) {
    %c0_i32 = arith.constant 0 : i32
    %c0_i32_0 = arith.constant 0 : i32
    return %c0_i32, %arg0 : i32, i32
  }
  func.func @transform_2(%arg0: i32, %arg1: i32) -> (i32, i32, i32) {
    %c0_i32 = arith.constant 0 : i32
    %c0_i32_0 = arith.constant 0 : i32
    %c0_i32_1 = arith.constant 0 : i32
    return %arg1, %c0_i32, %c0_i32_0 : i32, i32, i32
  }
  func.func @transform_3(%arg0: i32, %arg1: i32) -> (i32, i32, i32) {
    %c0_i32 = arith.constant 0 : i32
    %c0_i32_0 = arith.constant 0 : i32
    %c0_i32_1 = arith.constant 0 : i32
    return %arg1, %c0_i32, %c0_i32_0 : i32, i32, i32
  }
  func.func @transform_4(%arg0: i32, %arg1: i32) -> (i32, i32, i32) {
    %c0_i32 = arith.constant 0 : i32
    %c0_i32_0 = arith.constant 0 : i32
    %c0_i32_1 = arith.constant 0 : i32
    return %arg1, %c0_i32, %c0_i32_0 : i32, i32, i32
  }
  func.func @transform_5(%arg0: i32, %arg1: i32) -> (i32, i32, i32) {
    %c0_i32 = arith.constant 0 : i32
    %c0_i32_0 = arith.constant 0 : i32
    %c0_i32_1 = arith.constant 0 : i32
    return %arg1, %c0_i32, %c0_i32_0 : i32, i32, i32
  }
  func.func @transform_6(%arg0: i32, %arg1: i32) -> (i32, i32, i32) {
    %c0_i32 = arith.constant 0 : i32
    %c0_i32_0 = arith.constant 0 : i32
    %c0_i32_1 = arith.constant 0 : i32
    return %arg1, %c0_i32, %c0_i32_0 : i32, i32, i32
  }
  func.func @transform_7(%arg0: i32, %arg1: i32) -> (i32, i32, i32) {
    %c0_i32 = arith.constant 0 : i32
    %c0_i32_0 = arith.constant 0 : i32
    %c0_i32_1 = arith.constant 0 : i32
    return %arg1, %c0_i32, %c0_i32_0 : i32, i32, i32
  }
  func.func @transform_8(%arg0: i32, %arg1: i32) -> (i32, i32) {
    %c0_i32 = arith.constant 0 : i32
    %c0_i32_0 = arith.constant 0 : i32
    return %c0_i32, %arg0 : i32, i32
  }
  func.func @transform_9(%arg0: i32, %arg1: i32) -> (i32, i32) {
    %c0_i32 = arith.constant 0 : i32
    %c0_i32_0 = arith.constant 0 : i32
    return %c0_i32, %arg0 : i32, i32
  }
}

</mosaic_0001>

<llo_original>
// kernel: _lambda_.1
$region0: #{_lambda_.1}
  #allocation0 [shape = 'u32[]', space=smem, size = 0x4, offset = 0x4, fixed_abs, tag = 'smem constant byte address 0x4 - core index']
  #allocation1 [shape = 'u32[144,128]{1,0:T(1,128)}', space=vmem, size = 0x12000, scoped, tag = 'internal scratch']
  %s0 = inlined_call_operand.vmem [shape: f32[4,128], index: 0, kind: input, shape index: {}]
  %s1 = inlined_call_operand.vmem [shape: f32[5,128], index: 1, kind: input, shape index: {}]
  %s2 = inlined_call_operand.hbm [shape: f32[3,40,5], index: 2, kind: input, shape index: {}]
  %s3 = inlined_call_operand.hbm [shape: f32[3,40,1], index: 3, kind: input, shape index: {}]
  %s4 = inlined_call_operand.hbm [shape: f32[3,40,40], index: 4, kind: input, shape index: {}]
  %s5 = inlined_call_operand.hbm [shape: f32[3,40,1], index: 5, kind: input, shape index: {}]
  %s6 = inlined_call_operand.hbm [shape: f32[3,128,40], index: 6, kind: input, shape index: {}]
  %s7 = inlined_call_operand.hbm [shape: f32[3,128,1], index: 7, kind: input, shape index: {}]
  %s8 = inlined_call_operand.vmem [shape: f32[4,128], index: 8, kind: output, shape index: {0}]
  %s9 = inlined_call_operand.vmem [shape: f32[1,128], index: 9, kind: output, shape index: {1}]
  %10 = xla_tuple %s8, %s9
  %s11 = sld [smem:[#allocation0]]
  $region101: #{_lambda_.1} parent=0
    _
  %s13 = ssub.s32 1, %s11
  %s14 = scalar_select 0, %s13, %s11
  $region1: #{_lambda_.1} parent=0
    #allocation2 [shape = 'u8[40960]{0}', space=vmem, size = 0xa000, scoped, tag = 'input window, operand 2']
    #allocation3 [shape = 's32[2]{0}', space=sflag, size = 0x8, scoped, tag = 'scoped memory for _lambda_.1']
    #allocation4 [shape = 'u8[40960]{0}', space=vmem, size = 0xa000, scoped, tag = 'input window, operand 3']
    #allocation5 [shape = 's32[2]{0}', space=sflag, size = 0x8, scoped, tag = 'scoped memory for _lambda_.1']
    #allocation6 [shape = 'u8[40960]{0}', space=vmem, size = 0xa000, scoped, tag = 'input window, operand 4']
    #allocation7 [shape = 'u8[40960]{0}', space=vmem, size = 0xa000, scoped, tag = 'input window, operand 5']
    #allocation8 [shape = 's32[2]{0}', space=sflag, size = 0x8, scoped, tag = 'scoped memory for _lambda_.1']
    #allocation9 [shape = 'u8[131072]{0}', space=vmem, size = 0x20000, scoped, tag = 'input window, operand 6']
    #allocation10 [shape = 'u8[131072]{0}', space=vmem, size = 0x20000, scoped, tag = 'input window, operand 7']
    #allocation11 [shape = 's32[2]{0}', space=sflag, size = 0x8, scoped, tag = 'scoped memory for _lambda_.1']
    %15 = vsyncpa [#allocation3], 0
    %s16 = scalar_lea.sflag [#allocation3], 1
    %17 = vsyncpa %s16, 0
    %18 = vsyncpa [#allocation5], 0
    %s19 = scalar_lea.sflag [#allocation5], 1
    %20 = vsyncpa %s19, 0
    %21 = vsyncpa [#allocation8], 0
    %s22 = scalar_lea.sflag [#allocation8], 1
    %23 = vsyncpa %s22, 0
    %24 = vsyncpa [#allocation11], 0
    %s25 = scalar_lea.sflag [#allocation11], 1
    %26 = vsyncpa %s25, 0
    loop: start=0, step=1, limit=5
    $region2: #{_lambda_.1} parent=1 // loop_pre_header
      _
    $region3: #{_lambda_.1} parent=1 // loop_header
      %s28 = sphi 0, %s32
      %p29 = scmp.ge.s32.totalorder %s28, 5
      %s35 = sphi 0, %s47
      %s36 = sphi 0, %s43
      %s37 = sphi 0, %s35
      %s38 = sphi 0, %s36
      %s39 = sphi 0, %s37
      %s40 = sphi 0, %s38
      %s50 = sphi 0, %s52
      %s53 = sphi 0, %s50
      %s54 = sphi 0, %s53
      %s70 = sphi 0, %s54
      %s76 = sphi 0, %s78
      %s79 = sphi 0, %s76
      %s80 = sphi 0, %s79
      %s96 = sphi 0, %s80
      %s102 = sphi 0, %s104
      %s105 = sphi 0, %s102
      %s106 = sphi 0, %s105
      %s122 = sphi 0, %s106
      %s128 = sphi 0, %s130
      %s131 = sphi 0, %s128
      %s132 = sphi 0, %s131
      %s148 = sphi 0, %s132
      %s154 = sphi 0, %s156
      %s157 = sphi 0, %s154
      %s158 = sphi 0, %s157
      %s174 = sphi 0, %s158
      %s180 = sphi 0, %s182
      %s183 = sphi 0, %s180
      %s184 = sphi 0, %s183
      %s200 = sphi 0, %s184
      %s206 = sphi 0, %s208
      %s209 = sphi 0, %s206
      %s210 = sphi 0, %s209
      %s226 = sphi 0, %s210
      %s232 = sphi 0, %s234
      %s235 = sphi 0, %s232
      %s236 = sphi 0, %s235
      %s252 = sphi 0, %s236
      %s258 = sphi 0, %s260
      %s261 = sphi 0, %s258
      %s262 = sphi 0, %s261
      %s278 = sphi 0, %s262
      %s284 = sphi 0, %s286
      %s287 = sphi 0, %s284
      %s288 = sphi 0, %s287
      %s304 = sphi 0, %s288
    $region4: #{_lambda_.1} parent=1 // loop_header_branch
      %31 = sbr.rel (%p29) target = $region8
    $region5: #{_lambda_.1} parent=1 // loop_body
      %s33 = ssub.s32 %s28, 1
      %s34 = ssub.s32 %s28, 2
      %s41 = sadd.s32 1, %s36
      %p42 = scmp.ge.s32.totalorder %s41, 3
      %s43 = scalar_select %p42, 0, %s41
      %s44 = sadd.s32 1, %s35
      %s45 = scalar_select %p42, %s44, %s35
      %p46 = scmp.ge.s32.totalorder %s45, 1
      %s47 = scalar_select %p46, 0, %s45
      %s48 = ssub.s32 %s35, %s47
      %p49 = scmp.eq.s32.totalorder %s48, 0
      %s51 = sadd.s32 %s50, 1
      %s52 = scalar_select %p49, %s50, %s51
      %p55 = pneg %p49
      %p56 = scmp.eq.s32.totalorder %s28, 2
      %p57 = por %p55, %p56
      %p58 = scmp.ne.s32.totalorder %s50, %s53
      %p59 = scmp.eq.s32.totalorder %s28, 0
      %p60 = por %p58, %p59
      %p61 = scmp.ne.s32.totalorder %s50, %s53
      %p62 = scmp.eq.s32.totalorder %s33, 2
      %p63 = por %p61, %p62
      %p64 = scmp.ne.s32.totalorder %s53, %s54
      %p65 = scmp.eq.s32.totalorder %s33, 0
      %p66 = por %p64, %p65
      %p67 = scmp.ne.s32.totalorder %s53, %s54
      %p68 = scmp.eq.s32.totalorder %s34, 2
      %p69 = por %p67, %p68
      %p71 = scmp.ne.s32.totalorder %s54, %s70
      %p72 = scmp.eq.s32.totalorder %s34, 0
      %p73 = por %p71, %p72
      %s74 = ssub.s32 %s35, %s47
      %p75 = scmp.eq.s32.totalorder %s74, 0
      %s77 = sadd.s32 %s76, 1
      %s78 = scalar_select %p75, %s76, %s77
      %p81 = pneg %p75
      %p82 = scmp.eq.s32.totalorder %s28, 2
      %p83 = por %p81, %p82
      %p84 = scmp.ne.s32.totalorder %s76, %s79
      %p85 = scmp.eq.s32.totalorder %s28, 0
      %p86 = por %p84, %p85
      %p87 = scmp.ne.s32.totalorder %s76, %s79
      %p88 = scmp.eq.s32.totalorder %s33, 2
      %p89 = por %p87, %p88
      %p90 = scmp.ne.s32.totalorder %s79, %s80
      %p91 = scmp.eq.s32.totalorder %s33, 0
      %p92 = por %p90, %p91
      %p93 = scmp.ne.s32.totalorder %s79, %s80
      %p94 = scmp.eq.s32.totalorder %s34, 2
      %p95 = por %p93, %p94
      %p97 = scmp.ne.s32.totalorder %s80, %s96
      %p98 = scmp.eq.s32.totalorder %s34, 0
      %p99 = por %p97, %p98
      %s100 = ssub.s32 %s36, %s43
      %p101 = scmp.eq.s32.totalorder %s100, 0
      %s103 = sadd.s32 %s102, 1
      %s104 = scalar_select %p101, %s102, %s103
      %p107 = pneg %p101
      %p108 = scmp.eq.s32.totalorder %s28, 2
      %p109 = por %p107, %p108
      %p110 = scmp.ne.s32.totalorder %s102, %s105
      %p111 = scmp.eq.s32.totalorder %s28, 0
      %p112 = por %p110, %p111
      %p113 = scmp.ne.s32.totalorder %s102, %s105
      %p114 = scmp.eq.s32.totalorder %s33, 2
      %p115 = por %p113, %p114
      %p116 = scmp.ne.s32.totalorder %s105, %s106
      %p117 = scmp.eq.s32.totalorder %s33, 0
      %p118 = por %p116, %p117
      %p119 = scmp.ne.s32.totalorder %s105, %s106
      %p120 = scmp.eq.s32.totalorder %s34, 2
      %p121 = por %p119, %p120
      %p123 = scmp.ne.s32.totalorder %s106, %s122
      %p124 = scmp.eq.s32.totalorder %s34, 0
      %p125 = por %p123, %p124
      %s126 = ssub.s32 %s36, %s43
      %p127 = scmp.eq.s32.totalorder %s126, 0
      %s129 = sadd.s32 %s128, 1
      %s130 = scalar_select %p127, %s128, %s129
      %p133 = pneg %p127
      %p134 = scmp.eq.s32.totalorder %s28, 2
      %p135 = por %p133, %p134
      %p136 = scmp.ne.s32.totalorder %s128, %s131
      %p137 = scmp.eq.s32.totalorder %s28, 0
      %p138 = por %p136, %p137
      %p139 = scmp.ne.s32.totalorder %s128, %s131
      %p140 = scmp.eq.s32.totalorder %s33, 2
      %p141 = por %p139, %p140
      %p142 = scmp.ne.s32.totalorder %s131, %s132
      %p143 = scmp.eq.s32.totalorder %s33, 0
      %p144 = por %p142, %p143
      %p145 = scmp.ne.s32.totalorder %s131, %s132
      %p146 = scmp.eq.s32.totalorder %s34, 2
      %p147 = por %p145, %p146
      %p149 = scmp.ne.s32.totalorder %s132, %s148
      %p150 = scmp.eq.s32.totalorder %s34, 0
      %p151 = por %p149, %p150
      %s152 = ssub.s32 %s36, %s43
      %p153 = scmp.eq.s32.totalorder %s152, 0
      %s155 = sadd.s32 %s154, 1
      %s156 = scalar_select %p153, %s154, %s155
      %p159 = pneg %p153
      %p160 = scmp.eq.s32.totalorder %s28, 2
      %p161 = por %p159, %p160
      %p162 = scmp.ne.s32.totalorder %s154, %s157
      %p163 = scmp.eq.s32.totalorder %s28, 0
      %p164 = por %p162, %p163
      %p165 = scmp.ne.s32.totalorder %s154, %s157
      %p166 = scmp.eq.s32.totalorder %s33, 2
      %p167 = por %p165, %p166
      %p168 = scmp.ne.s32.totalorder %s157, %s158
      %p169 = scmp.eq.s32.totalorder %s33, 0
      %p170 = por %p168, %p169
      %p171 = scmp.ne.s32.totalorder %s157, %s158
      %p172 = scmp.eq.s32.totalorder %s34, 2
      %p173 = por %p171, %p172
      %p175 = scmp.ne.s32.totalorder %s158, %s174
      %p176 = scmp.eq.s32.totalorder %s34, 0
      %p177 = por %p175, %p176
      %s178 = ssub.s32 %s36, %s43
      %p179 = scmp.eq.s32.totalorder %s178, 0
      %s181 = sadd.s32 %s180, 1
      %s182 = scalar_select %p179, %s180, %s181
      %p185 = pneg %p179
      %p186 = scmp.eq.s32.totalorder %s28, 2
      %p187 = por %p185, %p186
      %p188 = scmp.ne.s32.totalorder %s180, %s183
      %p189 = scmp.eq.s32.totalorder %s28, 0
      %p190 = por %p188, %p189
      %p191 = scmp.ne.s32.totalorder %s180, %s183
      %p192 = scmp.eq.s32.totalorder %s33, 2
      %p193 = por %p191, %p192
      %p194 = scmp.ne.s32.totalorder %s183, %s184
      %p195 = scmp.eq.s32.totalorder %s33, 0
      %p196 = por %p194, %p195
      %p197 = scmp.ne.s32.totalorder %s183, %s184
      %p198 = scmp.eq.s32.totalorder %s34, 2
      %p199 = por %p197, %p198
      %p201 = scmp.ne.s32.totalorder %s184, %s200
      %p202 = scmp.eq.s32.totalorder %s34, 0
      %p203 = por %p201, %p202
      %s204 = ssub.s32 %s36, %s43
      %p205 = scmp.eq.s32.totalorder %s204, 0
      %s207 = sadd.s32 %s206, 1
      %s208 = scalar_select %p205, %s206, %s207
      %p211 = pneg %p205
      %p212 = scmp.eq.s32.totalorder %s28, 2
      %p213 = por %p211, %p212
      %p214 = scmp.ne.s32.totalorder %s206, %s209
      %p215 = scmp.eq.s32.totalorder %s28, 0
      %p216 = por %p214, %p215
      %p217 = scmp.ne.s32.totalorder %s206, %s209
      %p218 = scmp.eq.s32.totalorder %s33, 2
      %p219 = por %p217, %p218
      %p220 = scmp.ne.s32.totalorder %s209, %s210
      %p221 = scmp.eq.s32.totalorder %s33, 0
      %p222 = por %p220, %p221
      %p223 = scmp.ne.s32.totalorder %s209, %s210
      %p224 = scmp.eq.s32.totalorder %s34, 2
      %p225 = por %p223, %p224
      %p227 = scmp.ne.s32.totalorder %s210, %s226
      %p228 = scmp.eq.s32.totalorder %s34, 0
      %p229 = por %p227, %p228
      %s230 = ssub.s32 %s36, %s43
      %p231 = scmp.eq.s32.totalorder %s230, 0
      %s233 = sadd.s32 %s232, 1
      %s234 = scalar_select %p231, %s232, %s233
      %p237 = pneg %p231
      %p238 = scmp.eq.s32.totalorder %s28, 2
      %p239 = por %p237, %p238
      %p240 = scmp.ne.s32.totalorder %s232, %s235
      %p241 = scmp.eq.s32.totalorder %s28, 0
      %p242 = por %p240, %p241
      %p243 = scmp.ne.s32.totalorder %s232, %s235
      %p244 = scmp.eq.s32.totalorder %s33, 2
      %p245 = por %p243, %p244
      %p246 = scmp.ne.s32.totalorder %s235, %s236
      %p247 = scmp.eq.s32.totalorder %s33, 0
      %p248 = por %p246, %p247
      %p249 = scmp.ne.s32.totalorder %s235, %s236
      %p250 = scmp.eq.s32.totalorder %s34, 2
      %p251 = por %p249, %p250
      %p253 = scmp.ne.s32.totalorder %s236, %s252
      %p254 = scmp.eq.s32.totalorder %s34, 0
      %p255 = por %p253, %p254
      %s256 = ssub.s32 %s35, %s47
      %p257 = scmp.eq.s32.totalorder %s256, 0
      %s259 = sadd.s32 %s258, 1
      %s260 = scalar_select %p257, %s258, %s259
      %p263 = pneg %p257
      %p264 = scmp.eq.s32.totalorder %s28, 2
      %p265 = por %p263, %p264
      %p266 = scmp.ne.s32.totalorder %s258, %s261
      %p267 = scmp.eq.s32.totalorder %s28, 0
      %p268 = por %p266, %p267
      %p269 = scmp.ne.s32.totalorder %s258, %s261
      %p270 = scmp.eq.s32.totalorder %s33, 2
      %p271 = por %p269, %p270
      %p272 = scmp.ne.s32.totalorder %s261, %s262
      %p273 = scmp.eq.s32.totalorder %s33, 0
      %p274 = por %p272, %p273
      %p275 = scmp.ne.s32.totalorder %s261, %s262
      %p276 = scmp.eq.s32.totalorder %s34, 2
      %p277 = por %p275, %p276
      %p279 = scmp.ne.s32.totalorder %s262, %s278
      %p280 = scmp.eq.s32.totalorder %s34, 0
      %p281 = por %p279, %p280
      %s282 = ssub.s32 %s35, %s47
      %p283 = scmp.eq.s32.totalorder %s282, 0
      %s285 = sadd.s32 %s284, 1
      %s286 = scalar_select %p283, %s284, %s285
      %p289 = pneg %p283
      %p290 = scmp.eq.s32.totalorder %s28, 2
      %p291 = por %p289, %p290
      %p292 = scmp.ne.s32.totalorder %s284, %s287
      %p293 = scmp.eq.s32.totalorder %s28, 0
      %p294 = por %p292, %p293
      %p295 = scmp.ne.s32.totalorder %s284, %s287
      %p296 = scmp.eq.s32.totalorder %s33, 2
      %p297 = por %p295, %p296
      %p298 = scmp.ne.s32.totalorder %s287, %s288
      %p299 = scmp.eq.s32.totalorder %s33, 0
      %p300 = por %p298, %p299
      %p301 = scmp.ne.s32.totalorder %s287, %s288
      %p302 = scmp.eq.s32.totalorder %s34, 2
      %p303 = por %p301, %p302
      %p305 = scmp.ne.s32.totalorder %s288, %s304
      %p306 = scmp.eq.s32.totalorder %s34, 0
      %p307 = por %p305, %p306
      %p308 = scmp.le.s32.totalorder 1, %s28
      %p309 = scmp.lt.s32.totalorder %s28, 4
      %p310 = pnand %p308, %p309
      %p311 = pneg %p310
      // Predicated region
      $region9: #{_lambda_.1} parent=5 // pred_check
        _
      $region10: #{_lambda_.1} parent=5 // pred_check_branch
        %313 = sbr.rel (%p310) target = $region12
      $region11: #{_lambda_.1} parent=5 // pred_region
        %s314 = ssub.s32 %s28, 1
        // Predicated region
        $region13: #{_lambda_.1} parent=11 // pred_check
          %p315 = pneg %p66
        $region14: #{_lambda_.1} parent=11 // pred_check_branch
          %317 = sbr.rel (%p315) target = $region16
        $region15: #{_lambda_.1} parent=11 // pred_region
          %p318 = scmp.lt.s32.totalorder %s37, 0
          %s319 = scalar_select %p318, %s37, 0
          %s320 = smul.addr %s319, 4
          %s321 = scalar_lea.vmem %s0, %s320
        $region16: #{_lambda_.1} parent=11 // pred_fallthru
          _
        // Predicated region
        $region17: #{_lambda_.1} parent=11 // pred_check
          %p322 = pneg %p92
        $region18: #{_lambda_.1} parent=11 // pred_check_branch
          %324 = sbr.rel (%p322) target = $region20
        $region19: #{_lambda_.1} parent=11 // pred_region
          %p325 = scmp.lt.s32.totalorder %s37, 0
          %s326 = scalar_select %p325, %s37, 0
          %s327 = smul.addr %s326, 8
          %s328 = scalar_lea.vmem %s1, %s327
        $region20: #{_lambda_.1} parent=11 // pred_fallthru
          _
      $region12: #{_lambda_.1} parent=5 // pred_fallthru
        _
      %p329 = scmp.lt.s32.totalorder %s28, 3
      // Predicated region
      $region21: #{_lambda_.1} parent=5 // pred_check
        %p330 = pneg %p329
      $region22: #{_lambda_.1} parent=5 // pred_check_branch
        %332 = sbr.rel (%p330) target = $region24
      $region23: #{_lambda_.1} parent=5 // pred_region
        // Predicated region
        $region25: #{_lambda_.1} parent=23 // pred_check
          %p333 = pneg %p112
        $region26: #{_lambda_.1} parent=23 // pred_check_branch
          %335 = sbr.rel (%p333) target = $region28
        $region27: #{_lambda_.1} parent=23 // pred_region
          %s336 = sand.u32 %s102, 1
          %s337 = scalar_lea.sflag [#allocation3], %s336
          %s338 = sand.u32 %s102, 1
          %s339 = smul.addr %s338, 40
          %s340 = scalar_lea.vmem [#allocation2], %s339
          %s342 = ssub.s32 640, 640
          %343 = vsyncadd %s337, %s342
          %s344 = smul.addr %s36, 5
          %s345 = smul.addr %s344, 128
          %s346 = scalar_lea.hbm %s2, %s345
          %s347 = sshll.u32 %s340, 4
          %s348 = int_to_ptr.vmem [resolvable:$true] %s347
          %353 = dma.hbm_to_vmem [thread:$0]  %s346, 640, %s348, %s337, 128, 128, 8
        $region28: #{_lambda_.1} parent=23 // pred_fallthru
          _
        // Predicated region
        $region29: #{_lambda_.1} parent=23 // pred_check
          %p354 = pneg %p138
        $region30: #{_lambda_.1} parent=23 // pred_check_branch
          %356 = sbr.rel (%p354) target = $region32
        $region31: #{_lambda_.1} parent=23 // pred_region
          %s357 = sand.u32 %s28, 1
          %s358 = scalar_lea.sflag [#allocation5], %s357
          %s359 = sand.u32 %s128, 1
          %s360 = smul.addr %s359, 40
          %s361 = scalar_lea.vmem [#allocation4], %s360
          %s363 = ssub.s32 640, 640
          %364 = vsyncadd %s358, %s363
          %s365 = smul.addr %s36, 5
          %s366 = smul.addr %s365, 128
          %s367 = scalar_lea.hbm %s3, %s366
          %s368 = sshll.u32 %s361, 4
          %s369 = int_to_ptr.vmem [resolvable:$true] %s368
          %374 = dma.hbm_to_vmem [thread:$0]  %s367, 640, %s369, %s358, 128, 128, 8
        $region32: #{_lambda_.1} parent=23 // pred_fallthru
          _
        // Predicated region
        $region33: #{_lambda_.1} parent=23 // pred_check
          %p375 = pneg %p164
        $region34: #{_lambda_.1} parent=23 // pred_check_branch
          %377 = sbr.rel (%p375) target = $region36
        $region35: #{_lambda_.1} parent=23 // pred_region
          %s378 = sand.u32 %s28, 1
          %s379 = scalar_lea.sflag [#allocation5], %s378
          %s380 = sand.u32 %s154, 1
          %s381 = smul.addr %s380, 40
          %s382 = scalar_lea.vmem [#allocation6], %s381
          %s384 = ssub.s32 640, 640
          %385 = vsyncadd %s379, %s384
          %s386 = smul.addr %s36, 5
          %s387 = smul.addr %s386, 128
          %s388 = scalar_lea.hbm %s4, %s387
          %s389 = sshll.u32 %s382, 4
          %s390 = int_to_ptr.vmem [resolvable:$true] %s389
          %395 = dma.hbm_to_vmem [thread:$0]  %s388, 640, %s390, %s379, 128, 128, 8
        $region36: #{_lambda_.1} parent=23 // pred_fallthru
          _
        // Predicated region
        $region37: #{_lambda_.1} parent=23 // pred_check
          %p396 = pneg %p190
        $region38: #{_lambda_.1} parent=23 // pred_check_branch
          %398 = sbr.rel (%p396) target = $region40
        $region39: #{_lambda_.1} parent=23 // pred_region
          %s399 = sand.u32 %s28, 1
          %s400 = scalar_lea.sflag [#allocation8], %s399
          %s401 = sand.u32 %s180, 1
          %s402 = smul.addr %s401, 40
          %s403 = scalar_lea.vmem [#allocation7], %s402
          %s405 = ssub.s32 640, 640
          %406 = vsyncadd %s400, %s405
          %s407 = smul.addr %s36, 5
          %s408 = smul.addr %s407, 128
          %s409 = scalar_lea.hbm %s5, %s408
          %s410 = sshll.u32 %s403, 4
          %s411 = int_to_ptr.vmem [resolvable:$true] %s410
          %416 = dma.hbm_to_vmem [thread:$0]  %s409, 640, %s411, %s400, 128, 128, 8
        $region40: #{_lambda_.1} parent=23 // pred_fallthru
          _
        // Predicated region
        $region41: #{_lambda_.1} parent=23 // pred_check
          %p417 = pneg %p216
        $region42: #{_lambda_.1} parent=23 // pred_check_branch
          %419 = sbr.rel (%p417) target = $region44
        $region43: #{_lambda_.1} parent=23 // pred_region
          %s420 = sand.u32 %s28, 1
          %s421 = scalar_lea.sflag [#allocation8], %s420
          %s422 = sand.u32 %s206, 1
          %s423 = smul.addr %s422, 128
          %s424 = scalar_lea.vmem [#allocation9], %s423
          %s426 = ssub.s32 2048, 2048
          %427 = vsyncadd %s421, %s426
          %s428 = smul.addr %s36, 16
          %s429 = smul.addr %s428, 128
          %s430 = scalar_lea.hbm %s6, %s429
          %s431 = sshll.u32 %s424, 4
          %s432 = int_to_ptr.vmem [resolvable:$true] %s431
          %437 = dma.hbm_to_vmem [thread:$0]  %s430, 2048, %s432, %s421, 128, 128, 8
        $region44: #{_lambda_.1} parent=23 // pred_fallthru
          _
        // Predicated region
        $region45: #{_lambda_.1} parent=23 // pred_check
          %p438 = pneg %p242
        $region46: #{_lambda_.1} parent=23 // pred_check_branch
          %440 = sbr.rel (%p438) target = $region48
        $region47: #{_lambda_.1} parent=23 // pred_region
          %s441 = sand.u32 %s232, 1
          %s442 = scalar_lea.sflag [#allocation11], %s441
          %s443 = sand.u32 %s232, 1
          %s444 = smul.addr %s443, 128
          %s445 = scalar_lea.vmem [#allocation10], %s444
          %s447 = ssub.s32 2048, 2048
          %448 = vsyncadd %s442, %s447
          %s449 = smul.addr %s36, 16
          %s450 = smul.addr %s449, 128
          %s451 = scalar_lea.hbm %s7, %s450
          %s452 = sshll.u32 %s445, 4
          %s453 = int_to_ptr.vmem [resolvable:$true] %s452
          %458 = dma.hbm_to_vmem [thread:$0]  %s451, 2048, %s453, %s442, 128, 128, 8
        $region48: #{_lambda_.1} parent=23 // pred_fallthru
          _
      $region24: #{_lambda_.1} parent=5 // pred_fallthru
        _
      %p459 = scmp.le.s32.totalorder 1, %s28
      %p460 = scmp.lt.s32.totalorder %s28, 4
      %p461 = pnand %p459, %p460
      %p462 = pneg %p461
      // Predicated region
      $region49: #{_lambda_.1} parent=5 // pred_check
        _
      $region50: #{_lambda_.1} parent=5 // pred_check_branch
        %464 = sbr.rel (%p461) target = $region52
      $region51: #{_lambda_.1} parent=5 // pred_region
        %s465 = ssub.s32 %s28, 1
        %s466 = sand.u32 %s105, 1
        %s467 = scalar_lea.sflag [#allocation3], %s466
        %s468 = sand.u32 %s105, 1
        %s469 = smul.addr %s468, 40
        %s470 = scalar_lea.vmem [#allocation2], %s469
        // Predicated region
        $region53: #{_lambda_.1} parent=51 // pred_check
          %p471 = pneg %p118
        $region54: #{_lambda_.1} parent=51 // pred_check_branch
          %473 = sbr.rel (%p471) target = $region56
        $region55: #{_lambda_.1} parent=51 // pred_region
          %474 = dma.done %s467, 640
        $region56: #{_lambda_.1} parent=51 // pred_fallthru
          _
        %s475 = sand.u32 %s33, 1
        %s476 = scalar_lea.sflag [#allocation5], %s475
        %s477 = sand.u32 %s131, 1
        %s478 = smul.addr %s477, 40
        %s479 = scalar_lea.vmem [#allocation4], %s478
        // Predicated region
        $region57: #{_lambda_.1} parent=51 // pred_check
          %p480 = pneg %p144
        $region58: #{_lambda_.1} parent=51 // pred_check_branch
          %482 = sbr.rel (%p480) target = $region60
        $region59: #{_lambda_.1} parent=51 // pred_region
          %483 = dma.done %s476, 640
        $region60: #{_lambda_.1} parent=51 // pred_fallthru
          _
        %s484 = sand.u32 %s33, 1
        %s485 = scalar_lea.sflag [#allocation5], %s484
        %s486 = sand.u32 %s157, 1
        %s487 = smul.addr %s486, 40
        %s488 = scalar_lea.vmem [#allocation6], %s487
        // Predicated region
        $region61: #{_lambda_.1} parent=51 // pred_check
          %p489 = pneg %p170
        $region62: #{_lambda_.1} parent=51 // pred_check_branch
          %491 = sbr.rel (%p489) target = $region64
        $region63: #{_lambda_.1} parent=51 // pred_region
          %492 = dma.done %s485, 640
        $region64: #{_lambda_.1} parent=51 // pred_fallthru
          _
        %s493 = sand.u32 %s33, 1
        %s494 = scalar_lea.sflag [#allocation8], %s493
        %s495 = sand.u32 %s183, 1
        %s496 = smul.addr %s495, 40
        %s497 = scalar_lea.vmem [#allocation7], %s496
        // Predicated region
        $region65: #{_lambda_.1} parent=51 // pred_check
          %p498 = pneg %p196
        $region66: #{_lambda_.1} parent=51 // pred_check_branch
          %500 = sbr.rel (%p498) target = $region68
        $region67: #{_lambda_.1} parent=51 // pred_region
          %501 = dma.done %s494, 640
        $region68: #{_lambda_.1} parent=51 // pred_fallthru
          _
        %s502 = sand.u32 %s33, 1
        %s503 = scalar_lea.sflag [#allocation8], %s502
        %s504 = sand.u32 %s209, 1
        %s505 = smul.addr %s504, 128
        %s506 = scalar_lea.vmem [#allocation9], %s505
        // Predicated region
        $region69: #{_lambda_.1} parent=51 // pred_check
          %p507 = pneg %p222
        $region70: #{_lambda_.1} parent=51 // pred_check_branch
          %509 = sbr.rel (%p507) target = $region72
        $region71: #{_lambda_.1} parent=51 // pred_region
          %510 = dma.done %s503, 2048
        $region72: #{_lambda_.1} parent=51 // pred_fallthru
          _
        %s511 = sand.u32 %s235, 1
        %s512 = scalar_lea.sflag [#allocation11], %s511
        %s513 = sand.u32 %s235, 1
        %s514 = smul.addr %s513, 128
        %s515 = scalar_lea.vmem [#allocation10], %s514
        // Predicated region
        $region73: #{_lambda_.1} parent=51 // pred_check
          %p516 = pneg %p248
        $region74: #{_lambda_.1} parent=51 // pred_check_branch
          %518 = sbr.rel (%p516) target = $region76
        $region75: #{_lambda_.1} parent=51 // pred_region
          %519 = dma.done %s512, 2048
        $region76: #{_lambda_.1} parent=51 // pred_fallthru
          _
        %p520 = scmp.lt.s32.totalorder %s37, 0
        %s521 = scalar_select %p520, %s37, 0
        %s522 = smul.addr %s521, 4
        %s523 = scalar_lea.vmem %s0, %s522
        %p524 = pneg %p66
        %p525 = pneg %p63
        %p526 = scmp.lt.s32.totalorder %s37, 0
        %s527 = scalar_select %p526, %s37, 0
        %s528 = smul.addr %s527, 8
        %s529 = scalar_lea.vmem %s1, %s528
        %p530 = pneg %p92
        %p531 = pneg %p89
        %s532 = sand.u32 %s105, 1
        %s533 = scalar_lea.sflag [#allocation3], %s532
        %s534 = sand.u32 %s105, 1
        %s535 = smul.addr %s534, 40
        %s536 = scalar_lea.vmem [#allocation2], %s535
        %p537 = pneg %p118
        %p538 = pneg %p115
        %s539 = sand.u32 %s33, 1
        %s540 = scalar_lea.sflag [#allocation5], %s539
        %s541 = sand.u32 %s131, 1
        %s542 = smul.addr %s541, 40
        %s543 = scalar_lea.vmem [#allocation4], %s542
        %p544 = pneg %p144
        %p545 = pneg %p141
        %s546 = sand.u32 %s33, 1
        %s547 = scalar_lea.sflag [#allocation5], %s546
        %s548 = sand.u32 %s157, 1
        %s549 = smul.addr %s548, 40
        %s550 = scalar_lea.vmem [#allocation6], %s549
        %p551 = pneg %p170
        %p552 = pneg %p167
        %s553 = sand.u32 %s33, 1
        %s554 = scalar_lea.sflag [#allocation8], %s553
        %s555 = sand.u32 %s183, 1
        %s556 = smul.addr %s555, 40
        %s557 = scalar_lea.vmem [#allocation7], %s556
        %p558 = pneg %p196
        %p559 = pneg %p193
        %s560 = sand.u32 %s33, 1
        %s561 = scalar_lea.sflag [#allocation8], %s560
        %s562 = sand.u32 %s209, 1
        %s563 = smul.addr %s562, 128
        %s564 = scalar_lea.vmem [#allocation9], %s563
        %p565 = pneg %p222
        %p566 = pneg %p219
        %s567 = sand.u32 %s235, 1
        %s568 = scalar_lea.sflag [#allocation11], %s567
        %s569 = sand.u32 %s235, 1
        %s570 = smul.addr %s569, 128
        %s571 = scalar_lea.vmem [#allocation10], %s570
        %p572 = pneg %p248
        %p573 = pneg %p245
        %p574 = pneg %p274
        %p575 = pneg %p271
        %p576 = scmp.lt.s32.totalorder %s37, 0
        %s577 = scalar_select %p576, %s37, 0
        %s578 = smul.addr %s577, 4
        %s579 = scalar_lea.vmem %s8, %s578
        %p580 = pneg %p300
        %p581 = pneg %p297
        %p582 = scmp.lt.s32.totalorder %s37, 0
        %s583 = scalar_select %p582, %s37, 0
        %s584 = scalar_lea.vmem %s9, %s583
        %p585 = scmp.lt.s32.totalorder %s37, 0
        %s586 = scalar_select %p585, %s37, 0
        %s587 = smul.addr %s586, 4
        %s588 = scalar_lea.vmem %s0, %s587
        %p589 = scmp.lt.s32.totalorder %s37, 0
        %s590 = scalar_select %p589, %s37, 0
        %s591 = smul.addr %s590, 8
        %s592 = scalar_lea.vmem %s1, %s591
        %p593 = scmp.lt.s32.totalorder %s37, 0
        %s594 = scalar_select %p593, %s37, 0
        %s595 = smul.addr %s594, 4
        %s596 = scalar_lea.vmem %s8, %s595
        %p597 = scmp.lt.s32.totalorder %s37, 0
        %s598 = scalar_select %p597, %s37, 0
        %s599 = scalar_lea.vmem %s9, %s598
        %p600 = scmp.eq.s32.totalorder %s38, 0
        // Predicated region
        $region77: #{_lambda_.1} parent=51 // pred_check
          %p601 = pneg %p600
        $region78: #{_lambda_.1} parent=51 // pred_check_branch
          %603 = sbr.rel (%p601) target = $region80
        $region79: #{_lambda_.1} parent=51 // pred_region
          %v604 = vld [vmem:[%s588] sm:$0xf]
          %605 = vst [vmem:[%s596] sm:$0xf] %v604
          %606 = vst [vmem:[%s599] sm:$0x1] 0.0
        $region80: #{_lambda_.1} parent=51 // pred_fallthru
          _
        %v607 = vld [vmem:[%s470] sm:$0xff]
        %v608 = vld [vmem:[%s470 + $0x8] sm:$0xff]
        %v609 = vld [vmem:[%s470 + $0x10] sm:$0xff]
        %v610 = vld [vmem:[%s470 + $0x18] sm:$0xff]
        %v611 = vld [vmem:[%s470 + $0x20] sm:$0xff]
        %v612 = vld [vmem:[%s592] sm:$0x1f]
        %v613 = vld [vmem:[%s479] sm:$0xff]
        %v614 = vld [vmem:[%s479 + $0x8] sm:$0xff]
        %v615 = vld [vmem:[%s479 + $0x10] sm:$0xff]
        %v616 = vld [vmem:[%s479 + $0x18] sm:$0xff]
        %v617 = vld [vmem:[%s479 + $0x20] sm:$0xff]
        %619 = vset.pattern.permute.xlu0 0
        %620 = vperm.xlu0 %619, %v613
        %v621 = vpop.permute.xlu0 %620
        %624 = vset.pattern.permute.xlu0 0
        %625 = vperm.xlu0 %624, %v614
        %v626 = vpop.permute.xlu0 %625
        %629 = vset.pattern.permute.xlu0 0
        %630 = vperm.xlu0 %629, %v615
        %v631 = vpop.permute.xlu0 %630
        %634 = vset.pattern.permute.xlu0 0
        %635 = vperm.xlu0 %634, %v616
        %v636 = vpop.permute.xlu0 %635
        %639 = vset.pattern.permute.xlu0 0
        %640 = vperm.xlu0 %639, %v617
        %v641 = vpop.permute.xlu0 %640
        %vm643 = vcmask 39936
        %v645 = vsel %vm643, %v607, 0
        %v648 = vsel %vm643, %v608, 0
        %v651 = vsel %vm643, %v609, 0
        %v654 = vsel %vm643, %v610, 0
        %v657 = vsel %vm643, %v611, 0
        %vm659 = vcmask 1044480
        %v661 = vsel %vm659, %v612, 0
        %663 = vmatprep.subr.mxu0 0.0
        %664 = vmatpush1.msra.mxu0 0.0
        %665 = vmatprep.subr.mxu0 0.0
        %666 = vmatpush1.msra.mxu0 0.0
        %667 = vmatprep.subr.mxu0 0.0
        %668 = vmatpush1.msra.mxu0 0.0
        %669 = vmatprep.subr.mxu0 0.0
        %670 = vmatpush1.msra.mxu0 0.0
        %671 = vmatprep.subr.mxu0 0.0
        %672 = vmatpush1.msra.mxu0 0.0
        %673 = vmatprep.subr.mxu0 0.0
        %674 = vmatpush1.msra.mxu0 0.0
        %675 = vmatprep.subr.mxu0 0.0
        %676 = vmatpush1.msra.mxu0 0.0
        %677 = vmatprep.subr.mxu0 0.0
        %678 = vmatpush1.msra.mxu0 0.0
        %679 = vmatprep.subr.mxu0 0.0
        %680 = vmatpush1.msra.mxu0 0.0
        %681 = vmatprep.subr.mxu0 0.0
        %682 = vmatpush1.msra.mxu0 0.0
        %683 = vmatprep.subr.mxu0 0.0
        %684 = vmatpush1.msra.mxu0 0.0
        %685 = vmatprep.subr.mxu0 0.0
        %686 = vmatpush1.msra.mxu0 0.0
        %687 = vmatprep.subr.mxu0 0.0
        %688 = vmatpush1.msra.mxu0 0.0
        %689 = vmatprep.subr.mxu0 0.0
        %690 = vmatpush1.msra.mxu0 0.0
        %691 = vmatprep.subr.mxu0 0.0
        %692 = vmatpush1.msra.mxu0 0.0
        %693 = vmatprep.subr.mxu0 0.0
        %694 = vmatpush1.msra.mxu0 %v661
        %695 = vmatprep.subr.mxu0 0.0
        %696 = vmatpush2.msra.mxu0 0.0
        %697 = vmatprep.subr.mxu0 0.0
        %698 = vmatpush2.msra.mxu0 0.0
        %699 = vmatprep.subr.mxu0 0.0
        %700 = vmatpush2.msra.mxu0 0.0
        %701 = vmatprep.subr.mxu0 0.0
        %702 = vmatpush2.msra.mxu0 0.0
        %703 = vmatprep.subr.mxu0 0.0
        %704 = vmatpush2.msra.mxu0 0.0
        %705 = vmatprep.subr.mxu0 0.0
        %706 = vmatpush2.msra.mxu0 0.0
        %707 = vmatprep.subr.mxu0 0.0
        %708 = vmatpush2.msra.mxu0 0.0
        %709 = vmatprep.subr.mxu0 0.0
        %710 = vmatpush2.msra.mxu0 0.0
        %711 = vmatprep.subr.mxu0 0.0
        %712 = vmatpush2.msra.mxu0 0.0
        %713 = vmatprep.subr.mxu0 0.0
        %714 = vmatpush2.msra.mxu0 0.0
        %715 = vmatprep.subr.mxu0 0.0
        %716 = vmatpush2.msra.mxu0 0.0
        %717 = vmatprep.subr.mxu0 0.0
        %718 = vmatpush2.msra.mxu0 0.0
        %719 = vmatprep.subr.mxu0 0.0
        %720 = vmatpush2.msra.mxu0 0.0
        %721 = vmatprep.subr.mxu0 0.0
        %722 = vmatpush2.msra.mxu0 0.0
        %723 = vmatprep.subr.mxu0 0.0
        %724 = vmatpush2.msra.mxu0 0.0
        %725 = vmatprep.subr.mxu0 0.0
        %726 = vmatpush2.msra.mxu0 0.0
        %727 = vmatprep.mubr.f32.mxu0 0.0
        %728 = vmatmul.mubr.f32.gmra.mxu0 %v645
        %v729 = vpop.f32.mrf.mxu0
        %v730 = vadd.f32 %v621, %v729
        %v731 = vpop.f32.mrf.mxu0
        %732 = vmatprep.mubr.f32.mxu0 0.0
        %733 = vmatmul.mubr.f32.gmra.mxu0 %v648
        %v734 = vpop.f32.mrf.mxu0
        %v735 = vadd.f32 %v626, %v734
        %v736 = vpop.f32.mrf.mxu0
        %737 = vmatprep.mubr.f32.mxu0 0.0
        %738 = vmatmul.mubr.f32.gmra.mxu0 %v651
        %v739 = vpop.f32.mrf.mxu0
        %v740 = vadd.f32 %v631, %v739
        %v741 = vpop.f32.mrf.mxu0
        %742 = vmatprep.mubr.f32.mxu0 0.0
        %743 = vmatmul.mubr.f32.gmra.mxu0 %v654
        %v744 = vpop.f32.mrf.mxu0
        %v745 = vadd.f32 %v636, %v744
        %v746 = vpop.f32.mrf.mxu0
        %747 = vmatprep.mubr.f32.mxu0 0.0
        %748 = vmatmul.mubr.f32.gmra.mxu0 %v657
        %v749 = vpop.f32.mrf.mxu0
        %v750 = vadd.f32 %v641, %v749
        %v751 = vpop.f32.mrf.mxu0
        %752 = vdwg.mxu0
        %v753 = vmax.f32 %v730, 0.0
        %v754 = vmax.f32 %v735, 0.0
        %v755 = vmax.f32 %v740, 0.0
        %v756 = vmax.f32 %v745, 0.0
        %v757 = vmax.f32 %v750, 0.0
        %v758 = vld [vmem:[%s488] sm:$0xff]
        %v759 = vld [vmem:[%s488 + $0x8] sm:$0xff]
        %v760 = vld [vmem:[%s488 + $0x10] sm:$0xff]
        %v761 = vld [vmem:[%s488 + $0x18] sm:$0xff]
        %v762 = vld [vmem:[%s488 + $0x20] sm:$0xff]
        %v763 = vld [vmem:[%s497] sm:$0xff]
        %v764 = vld [vmem:[%s497 + $0x8] sm:$0xff]
        %v765 = vld [vmem:[%s497 + $0x10] sm:$0xff]
        %v766 = vld [vmem:[%s497 + $0x18] sm:$0xff]
        %v767 = vld [vmem:[%s497 + $0x20] sm:$0xff]
        %769 = vset.pattern.permute.xlu0 0
        %770 = vperm.xlu0 %769, %v763
        %v771 = vpop.permute.xlu0 %770
        %774 = vset.pattern.permute.xlu0 0
        %775 = vperm.xlu0 %774, %v764
        %v776 = vpop.permute.xlu0 %775
        %779 = vset.pattern.permute.xlu0 0
        %780 = vperm.xlu0 %779, %v765
        %v781 = vpop.permute.xlu0 %780
        %784 = vset.pattern.permute.xlu0 0
        %785 = vperm.xlu0 %784, %v766
        %v786 = vpop.permute.xlu0 %785
        %789 = vset.pattern.permute.xlu0 0
        %790 = vperm.xlu0 %789, %v767
        %v791 = vpop.permute.xlu0 %790
        %vm793 = vcmask 326656
        %v795 = vsel %vm793, %v758, 0
        %v798 = vsel %vm793, %v759, 0
        %v801 = vsel %vm793, %v760, 0
        %v804 = vsel %vm793, %v761, 0
        %v807 = vsel %vm793, %v762, 0
        %809 = vmatprep.subr.mxu0 0.0
        %810 = vmatpush1.msra.mxu0 0.0
        %811 = vmatprep.subr.mxu0 0.0
        %812 = vmatpush1.msra.mxu0 0.0
        %813 = vmatprep.subr.mxu0 0.0
        %814 = vmatpush1.msra.mxu0 0.0
        %815 = vmatprep.subr.mxu0 0.0
        %816 = vmatpush1.msra.mxu0 0.0
        %817 = vmatprep.subr.mxu0 0.0
        %818 = vmatpush1.msra.mxu0 0.0
        %819 = vmatprep.subr.mxu0 0.0
        %820 = vmatpush1.msra.mxu0 0.0
        %821 = vmatprep.subr.mxu0 0.0
        %822 = vmatpush1.msra.mxu0 0.0
        %823 = vmatprep.subr.mxu0 0.0
        %824 = vmatpush1.msra.mxu0 0.0
        %825 = vmatprep.subr.mxu0 0.0
        %826 = vmatpush1.msra.mxu0 0.0
        %827 = vmatprep.subr.mxu0 0.0
        %828 = vmatpush1.msra.mxu0 0.0
        %829 = vmatprep.subr.mxu0 0.0
        %830 = vmatpush1.msra.mxu0 0.0
        %831 = vmatprep.subr.mxu0 0.0
        %832 = vmatpush1.msra.mxu0 %v757
        %833 = vmatprep.subr.mxu0 0.0
        %834 = vmatpush1.msra.mxu0 %v756
        %835 = vmatprep.subr.mxu0 0.0
        %836 = vmatpush1.msra.mxu0 %v755
        %837 = vmatprep.subr.mxu0 0.0
        %838 = vmatpush1.msra.mxu0 %v754
        %839 = vmatprep.subr.mxu0 0.0
        %840 = vmatpush1.msra.mxu0 %v753
        %841 = vmatprep.subr.mxu0 0.0
        %842 = vmatpush2.msra.mxu0 0.0
        %843 = vmatprep.subr.mxu0 0.0
        %844 = vmatpush2.msra.mxu0 0.0
        %845 = vmatprep.subr.mxu0 0.0
        %846 = vmatpush2.msra.mxu0 0.0
        %847 = vmatprep.subr.mxu0 0.0
        %848 = vmatpush2.msra.mxu0 0.0
        %849 = vmatprep.subr.mxu0 0.0
        %850 = vmatpush2.msra.mxu0 0.0
        %851 = vmatprep.subr.mxu0 0.0
        %852 = vmatpush2.msra.mxu0 0.0
        %853 = vmatprep.subr.mxu0 0.0
        %854 = vmatpush2.msra.mxu0 0.0
        %855 = vmatprep.subr.mxu0 0.0
        %856 = vmatpush2.msra.mxu0 0.0
        %857 = vmatprep.subr.mxu0 0.0
        %858 = vmatpush2.msra.mxu0 0.0
        %859 = vmatprep.subr.mxu0 0.0
        %860 = vmatpush2.msra.mxu0 0.0
        %861 = vmatprep.subr.mxu0 0.0
        %862 = vmatpush2.msra.mxu0 0.0
        %863 = vmatprep.subr.mxu0 0.0
        %864 = vmatpush2.msra.mxu0 0.0
        %865 = vmatprep.subr.mxu0 0.0
        %866 = vmatpush2.msra.mxu0 0.0
        %867 = vmatprep.subr.mxu0 0.0
        %868 = vmatpush2.msra.mxu0 0.0
        %869 = vmatprep.subr.mxu0 0.0
        %870 = vmatpush2.msra.mxu0 0.0
        %871 = vmatprep.subr.mxu0 0.0
        %872 = vmatpush2.msra.mxu0 0.0
        %873 = vmatprep.mubr.f32.mxu0 0.0
        %874 = vmatmul.mubr.f32.gmra.mxu0 %v795
        %v875 = vpop.f32.mrf.mxu0
        %v876 = vadd.f32 %v771, %v875
        %v877 = vpop.f32.mrf.mxu0
        %878 = vmatprep.mubr.f32.mxu0 0.0
        %879 = vmatmul.mubr.f32.gmra.mxu0 %v798
        %v880 = vpop.f32.mrf.mxu0
        %v881 = vadd.f32 %v776, %v880
        %v882 = vpop.f32.mrf.mxu0
        %883 = vmatprep.mubr.f32.mxu0 0.0
        %884 = vmatmul.mubr.f32.gmra.mxu0 %v801
        %v885 = vpop.f32.mrf.mxu0
        %v886 = vadd.f32 %v781, %v885
        %v887 = vpop.f32.mrf.mxu0
        %888 = vmatprep.mubr.f32.mxu0 0.0
        %889 = vmatmul.mubr.f32.gmra.mxu0 %v804
        %v890 = vpop.f32.mrf.mxu0
        %v891 = vadd.f32 %v786, %v890
        %v892 = vpop.f32.mrf.mxu0
        %893 = vmatprep.mubr.f32.mxu0 0.0
        %894 = vmatmul.mubr.f32.gmra.mxu0 %v807
        %v895 = vpop.f32.mrf.mxu0
        %v896 = vadd.f32 %v791, %v895
        %v897 = vpop.f32.mrf.mxu0
        %898 = vdwg.mxu0
        %v899 = vmax.f32 %v876, 0.0
        %v900 = vmax.f32 %v881, 0.0
        %v901 = vmax.f32 %v886, 0.0
        %v902 = vmax.f32 %v891, 0.0
        %v903 = vmax.f32 %v896, 0.0
        %v904 = vld [vmem:[%s506] sm:$0xff]
        %v905 = vld [vmem:[%s506 + $0x8] sm:$0xff]
        %v906 = vld [vmem:[%s506 + $0x10] sm:$0xff]
        %v907 = vld [vmem:[%s506 + $0x18] sm:$0xff]
        %v908 = vld [vmem:[%s506 + $0x20] sm:$0xff]
        %v909 = vld [vmem:[%s506 + $0x28] sm:$0xff]
        %v910 = vld [vmem:[%s506 + $0x30] sm:$0xff]
        %v911 = vld [vmem:[%s506 + $0x38] sm:$0xff]
        %v912 = vld [vmem:[%s506 + $0x40] sm:$0xff]
        %v913 = vld [vmem:[%s506 + $0x48] sm:$0xff]
        %v914 = vld [vmem:[%s506 + $0x50] sm:$0xff]
        %v915 = vld [vmem:[%s506 + $0x58] sm:$0xff]
        %v916 = vld [vmem:[%s506 + $0x60] sm:$0xff]
        %v917 = vld [vmem:[%s506 + $0x68] sm:$0xff]
        %v918 = vld [vmem:[%s506 + $0x70] sm:$0xff]
        %v919 = vld [vmem:[%s506 + $0x78] sm:$0xff]
        %v920 = vld [vmem:[%s515] sm:$0xff]
        %v921 = vld [vmem:[%s515 + $0x8] sm:$0xff]
        %v922 = vld [vmem:[%s515 + $0x10] sm:$0xff]
        %v923 = vld [vmem:[%s515 + $0x18] sm:$0xff]
        %v924 = vld [vmem:[%s515 + $0x20] sm:$0xff]
        %v925 = vld [vmem:[%s515 + $0x28] sm:$0xff]
        %v926 = vld [vmem:[%s515 + $0x30] sm:$0xff]
        %v927 = vld [vmem:[%s515 + $0x38] sm:$0xff]
        %v928 = vld [vmem:[%s515 + $0x40] sm:$0xff]
        %v929 = vld [vmem:[%s515 + $0x48] sm:$0xff]
        %v930 = vld [vmem:[%s515 + $0x50] sm:$0xff]
        %v931 = vld [vmem:[%s515 + $0x58] sm:$0xff]
        %v932 = vld [vmem:[%s515 + $0x60] sm:$0xff]
        %v933 = vld [vmem:[%s515 + $0x68] sm:$0xff]
        %v934 = vld [vmem:[%s515 + $0x70] sm:$0xff]
        %v935 = vld [vmem:[%s515 + $0x78] sm:$0xff]
        %937 = vset.pattern.permute.xlu0 0
        %938 = vperm.xlu0 %937, %v920
        %v939 = vpop.permute.xlu0 %938
        %942 = vset.pattern.permute.xlu0 0
        %943 = vperm.xlu0 %942, %v921
        %v944 = vpop.permute.xlu0 %943
        %947 = vset.pattern.permute.xlu0 0
        %948 = vperm.xlu0 %947, %v922
        %v949 = vpop.permute.xlu0 %948
        %952 = vset.pattern.permute.xlu0 0
        %953 = vperm.xlu0 %952, %v923
        %v954 = vpop.permute.xlu0 %953
        %957 = vset.pattern.permute.xlu0 0
        %958 = vperm.xlu0 %957, %v924
        %v959 = vpop.permute.xlu0 %958
        %962 = vset.pattern.permute.xlu0 0
        %963 = vperm.xlu0 %962, %v925
        %v964 = vpop.permute.xlu0 %963
        %967 = vset.pattern.permute.xlu0 0
        %968 = vperm.xlu0 %967, %v926
        %v969 = vpop.permute.xlu0 %968
        %972 = vset.pattern.permute.xlu0 0
        %973 = vperm.xlu0 %972, %v927
        %v974 = vpop.permute.xlu0 %973
        %977 = vset.pattern.permute.xlu0 0
        %978 = vperm.xlu0 %977, %v928
        %v979 = vpop.permute.xlu0 %978
        %982 = vset.pattern.permute.xlu0 0
        %983 = vperm.xlu0 %982, %v929
        %v984 = vpop.permute.xlu0 %983
        %987 = vset.pattern.permute.xlu0 0
        %988 = vperm.xlu0 %987, %v930
        %v989 = vpop.permute.xlu0 %988
        %992 = vset.pattern.permute.xlu0 0
        %993 = vperm.xlu0 %992, %v931
        %v994 = vpop.permute.xlu0 %993
        %997 = vset.pattern.permute.xlu0 0
        %998 = vperm.xlu0 %997, %v932
        %v999 = vpop.permute.xlu0 %998
        %1002 = vset.pattern.permute.xlu0 0
        %1003 = vperm.xlu0 %1002, %v933
        %v1004 = vpop.permute.xlu0 %1003
        %1007 = vset.pattern.permute.xlu0 0
        %1008 = vperm.xlu0 %1007, %v934
        %v1009 = vpop.permute.xlu0 %1008
        %1012 = vset.pattern.permute.xlu0 0
        %1013 = vperm.xlu0 %1012, %v935
        %v1014 = vpop.permute.xlu0 %1013
        %v1017 = vsel %vm793, %v904, 0
        %v1020 = vsel %vm793, %v905, 0
        %v1023 = vsel %vm793, %v906, 0
        %v1026 = vsel %vm793, %v907, 0
        %v1029 = vsel %vm793, %v908, 0
        %v1032 = vsel %vm793, %v909, 0
        %v1035 = vsel %vm793, %v910, 0
        %v1038 = vsel %vm793, %v911, 0
        %v1041 = vsel %vm793, %v912, 0
        %v1044 = vsel %vm793, %v913, 0
        %v1047 = vsel %vm793, %v914, 0
        %v1050 = vsel %vm793, %v915, 0
        %v1053 = vsel %vm793, %v916, 0
        %v1056 = vsel %vm793, %v917, 0
        %v1059 = vsel %vm793, %v918, 0
        %v1062 = vsel %vm793, %v919, 0
        %1064 = vmatprep.subr.mxu0 0.0
        %1065 = vmatpush1.msra.mxu0 0.0
        %1066 = vmatprep.subr.mxu0 0.0
        %1067 = vmatpush1.msra.mxu0 0.0
        %1068 = vmatprep.subr.mxu0 0.0
        %1069 = vmatpush1.msra.mxu0 0.0
        %1070 = vmatprep.subr.mxu0 0.0
        %1071 = vmatpush1.msra.mxu0 0.0
        %1072 = vmatprep.subr.mxu0 0.0
        %1073 = vmatpush1.msra.mxu0 0.0
        %1074 = vmatprep.subr.mxu0 0.0
        %1075 = vmatpush1.msra.mxu0 0.0
        %1076 = vmatprep.subr.mxu0 0.0
        %1077 = vmatpush1.msra.mxu0 0.0
        %1078 = vmatprep.subr.mxu0 0.0
        %1079 = vmatpush1.msra.mxu0 0.0
        %1080 = vmatprep.subr.mxu0 0.0
        %1081 = vmatpush1.msra.mxu0 0.0
        %1082 = vmatprep.subr.mxu0 0.0
        %1083 = vmatpush1.msra.mxu0 0.0
        %1084 = vmatprep.subr.mxu0 0.0
        %1085 = vmatpush1.msra.mxu0 0.0
        %1086 = vmatprep.subr.mxu0 0.0
        %1087 = vmatpush1.msra.mxu0 %v903
        %1088 = vmatprep.subr.mxu0 0.0
        %1089 = vmatpush1.msra.mxu0 %v902
        %1090 = vmatprep.subr.mxu0 0.0
        %1091 = vmatpush1.msra.mxu0 %v901
        %1092 = vmatprep.subr.mxu0 0.0
        %1093 = vmatpush1.msra.mxu0 %v900
        %1094 = vmatprep.subr.mxu0 0.0
        %1095 = vmatpush1.msra.mxu0 %v899
        %1096 = vmatprep.subr.mxu0 0.0
        %1097 = vmatpush2.msra.mxu0 0.0
        %1098 = vmatprep.subr.mxu0 0.0
        %1099 = vmatpush2.msra.mxu0 0.0
        %1100 = vmatprep.subr.mxu0 0.0
        %1101 = vmatpush2.msra.mxu0 0.0
        %1102 = vmatprep.subr.mxu0 0.0
        %1103 = vmatpush2.msra.mxu0 0.0
        %1104 = vmatprep.subr.mxu0 0.0
        %1105 = vmatpush2.msra.mxu0 0.0
        %1106 = vmatprep.subr.mxu0 0.0
        %1107 = vmatpush2.msra.mxu0 0.0
        %1108 = vmatprep.subr.mxu0 0.0
        %1109 = vmatpush2.msra.mxu0 0.0
        %1110 = vmatprep.subr.mxu0 0.0
        %1111 = vmatpush2.msra.mxu0 0.0
        %1112 = vmatprep.subr.mxu0 0.0
        %1113 = vmatpush2.msra.mxu0 0.0
        %1114 = vmatprep.subr.mxu0 0.0
        %1115 = vmatpush2.msra.mxu0 0.0
        %1116 = vmatprep.subr.mxu0 0.0
        %1117 = vmatpush2.msra.mxu0 0.0
        %1118 = vmatprep.subr.mxu0 0.0
        %1119 = vmatpush2.msra.mxu0 0.0
        %1120 = vmatprep.subr.mxu0 0.0
        %1121 = vmatpush2.msra.mxu0 0.0
        %1122 = vmatprep.subr.mxu0 0.0
        %1123 = vmatpush2.msra.mxu0 0.0
        %1124 = vmatprep.subr.mxu0 0.0
        %1125 = vmatpush2.msra.mxu0 0.0
        %1126 = vmatprep.subr.mxu0 0.0
        %1127 = vmatpush2.msra.mxu0 0.0
        %1128 = vmatprep.mubr.f32.mxu0 0.0
        %1129 = vmatmul.mubr.f32.gmra.mxu0 %v1017
        %v1130 = vpop.f32.mrf.mxu0
        %v1131 = vadd.f32 %v939, %v1130
        %v1132 = vpop.f32.mrf.mxu0
        %1133 = vmatprep.mubr.f32.mxu0 0.0
        %1134 = vmatmul.mubr.f32.gmra.mxu0 %v1020
        %v1135 = vpop.f32.mrf.mxu0
        %v1136 = vadd.f32 %v944, %v1135
        %v1137 = vpop.f32.mrf.mxu0
        %1138 = vmatprep.mubr.f32.mxu0 0.0
        %1139 = vmatmul.mubr.f32.gmra.mxu0 %v1023
        %v1140 = vpop.f32.mrf.mxu0
        %v1141 = vadd.f32 %v949, %v1140
        %v1142 = vpop.f32.mrf.mxu0
        %1143 = vmatprep.mubr.f32.mxu0 0.0
        %1144 = vmatmul.mubr.f32.gmra.mxu0 %v1026
        %v1145 = vpop.f32.mrf.mxu0
        %v1146 = vadd.f32 %v954, %v1145
        %v1147 = vpop.f32.mrf.mxu0
        %1148 = vmatprep.mubr.f32.mxu0 0.0
        %1149 = vmatmul.mubr.f32.gmra.mxu0 %v1029
        %v1150 = vpop.f32.mrf.mxu0
        %v1151 = vadd.f32 %v959, %v1150
        %v1152 = vpop.f32.mrf.mxu0
        %1153 = vmatprep.mubr.f32.mxu0 0.0
        %1154 = vmatmul.mubr.f32.gmra.mxu0 %v1032
        %v1155 = vpop.f32.mrf.mxu0
        %v1156 = vadd.f32 %v964, %v1155
        %v1157 = vpop.f32.mrf.mxu0
        %1158 = vmatprep.mubr.f32.mxu0 0.0
        %1159 = vmatmul.mubr.f32.gmra.mxu0 %v1035
        %v1160 = vpop.f32.mrf.mxu0
        %v1161 = vadd.f32 %v969, %v1160
        %v1162 = vpop.f32.mrf.mxu0
        %1163 = vmatprep.mubr.f32.mxu0 0.0
        %1164 = vmatmul.mubr.f32.gmra.mxu0 %v1038
        %v1165 = vpop.f32.mrf.mxu0
        %v1166 = vadd.f32 %v974, %v1165
        %v1167 = vpop.f32.mrf.mxu0
        %1168 = vmatprep.mubr.f32.mxu0 0.0
        %1169 = vmatmul.mubr.f32.gmra.mxu0 %v1041
        %v1170 = vpop.f32.mrf.mxu0
        %v1171 = vadd.f32 %v979, %v1170
        %v1172 = vpop.f32.mrf.mxu0
        %1173 = vmatprep.mubr.f32.mxu0 0.0
        %1174 = vmatmul.mubr.f32.gmra.mxu0 %v1044
        %v1175 = vpop.f32.mrf.mxu0
        %v1176 = vadd.f32 %v984, %v1175
        %v1177 = vpop.f32.mrf.mxu0
        %1178 = vmatprep.mubr.f32.mxu0 0.0
        %1179 = vmatmul.mubr.f32.gmra.mxu0 %v1047
        %v1180 = vpop.f32.mrf.mxu0
        %v1181 = vadd.f32 %v989, %v1180
        %v1182 = vpop.f32.mrf.mxu0
        %1183 = vmatprep.mubr.f32.mxu0 0.0
        %1184 = vmatmul.mubr.f32.gmra.mxu0 %v1050
        %v1185 = vpop.f32.mrf.mxu0
        %v1186 = vadd.f32 %v994, %v1185
        %v1187 = vpop.f32.mrf.mxu0
        %1188 = vmatprep.mubr.f32.mxu0 0.0
        %1189 = vmatmul.mubr.f32.gmra.mxu0 %v1053
        %v1190 = vpop.f32.mrf.mxu0
        %v1191 = vadd.f32 %v999, %v1190
        %v1192 = vpop.f32.mrf.mxu0
        %1193 = vmatprep.mubr.f32.mxu0 0.0
        %1194 = vmatmul.mubr.f32.gmra.mxu0 %v1056
        %v1195 = vpop.f32.mrf.mxu0
        %v1196 = vadd.f32 %v1004, %v1195
        %v1197 = vpop.f32.mrf.mxu0
        %1198 = vmatprep.mubr.f32.mxu0 0.0
        %1199 = vmatmul.mubr.f32.gmra.mxu0 %v1059
        %v1200 = vpop.f32.mrf.mxu0
        %v1201 = vadd.f32 %v1009, %v1200
        %v1202 = vpop.f32.mrf.mxu0
        %1203 = vmatprep.mubr.f32.mxu0 0.0
        %1204 = vmatmul.mubr.f32.gmra.mxu0 %v1062
        %v1205 = vpop.f32.mrf.mxu0
        %v1206 = vadd.f32 %v1014, %v1205
        %v1207 = vpop.f32.mrf.mxu0
        %1208 = vdwg.mxu0
        %v1209 = vrot.slane %v1131, 4
        %v1210 = vmax.f32 %v1131, %v1209
        %v1211 = vrot.slane %v1210, 2
        %v1212 = vmax.f32 %v1210, %v1211
        %v1213 = vrot.slane %v1212, 1
        %v1214 = vmax.f32 %v1212, %v1213
        %v1215 = vrot.slane %v1136, 4
        %v1216 = vmax.f32 %v1136, %v1215
        %v1217 = vrot.slane %v1216, 2
        %v1218 = vmax.f32 %v1216, %v1217
        %v1219 = vrot.slane %v1218, 1
        %v1220 = vmax.f32 %v1218, %v1219
        %v1221 = vrot.slane %v1141, 4
        %v1222 = vmax.f32 %v1141, %v1221
        %v1223 = vrot.slane %v1222, 2
        %v1224 = vmax.f32 %v1222, %v1223
        %v1225 = vrot.slane %v1224, 1
        %v1226 = vmax.f32 %v1224, %v1225
        %v1227 = vrot.slane %v1146, 4
        %v1228 = vmax.f32 %v1146, %v1227
        %v1229 = vrot.slane %v1228, 2
        %v1230 = vmax.f32 %v1228, %v1229
        %v1231 = vrot.slane %v1230, 1
        %v1232 = vmax.f32 %v1230, %v1231
        %v1233 = vsub.f32 %v1131, %v1214
        %v1234 = vsub.f32 %v1136, %v1220
        %v1235 = vsub.f32 %v1141, %v1226
        %v1236 = vsub.f32 %v1146, %v1232
        %v1237 = vmul.f32 %v1233, 1.442695
        %v1238 = vpow.pop %v1237
        %v1239 = vmul.f32 %v1234, 1.442695
        %v1240 = vpow.pop %v1239
        %v1241 = vmul.f32 %v1235, 1.442695
        %v1242 = vpow.pop %v1241
        %v1243 = vmul.f32 %v1236, 1.442695
        %v1244 = vpow.pop %v1243
        %v1245 = vrot.slane %v1238, 4
        %v1246 = vadd.f32 %v1238, %v1245
        %v1247 = vrot.slane %v1246, 2
        %v1248 = vadd.f32 %v1246, %v1247
        %v1249 = vrot.slane %v1248, 1
        %v1250 = vadd.f32 %v1248, %v1249
        %v1251 = vrot.slane %v1240, 4
        %v1252 = vadd.f32 %v1240, %v1251
        %v1253 = vrot.slane %v1252, 2
        %v1254 = vadd.f32 %v1252, %v1253
        %v1255 = vrot.slane %v1254, 1
        %v1256 = vadd.f32 %v1254, %v1255
        %v1257 = vrot.slane %v1242, 4
        %v1258 = vadd.f32 %v1242, %v1257
        %v1259 = vrot.slane %v1258, 2
        %v1260 = vadd.f32 %v1258, %v1259
        %v1261 = vrot.slane %v1260, 1
        %v1262 = vadd.f32 %v1260, %v1261
        %v1263 = vrot.slane %v1244, 4
        %v1264 = vadd.f32 %v1244, %v1263
        %v1265 = vrot.slane %v1264, 2
        %v1266 = vadd.f32 %v1264, %v1265
        %v1267 = vrot.slane %v1266, 1
        %v1268 = vadd.f32 %v1266, %v1267
        %v1269 = vrcp.pop %v1250
        %v1270 = vrcp.pop %v1256
        %v1271 = vrcp.pop %v1262
        %v1272 = vrcp.pop %v1268
        %v1273 = vmul.f32 %v1238, %v1269
        %v1274 = vmul.f32 %v1240, %v1270
        %v1275 = vmul.f32 %v1242, %v1271
        %v1276 = vmul.f32 %v1244, %v1272
        %v1277 = vrot.slane %v1151, 4
        %v1278 = vmax.f32 %v1151, %v1277
        %v1279 = vrot.slane %v1278, 2
        %v1280 = vmax.f32 %v1278, %v1279
        %v1281 = vrot.slane %v1280, 1
        %v1282 = vmax.f32 %v1280, %v1281
        %v1283 = vrot.slane %v1156, 4
        %v1284 = vmax.f32 %v1156, %v1283
        %v1285 = vrot.slane %v1284, 2
        %v1286 = vmax.f32 %v1284, %v1285
        %v1287 = vrot.slane %v1286, 1
        %v1288 = vmax.f32 %v1286, %v1287
        %v1289 = vrot.slane %v1161, 4
        %v1290 = vmax.f32 %v1161, %v1289
        %v1291 = vrot.slane %v1290, 2
        %v1292 = vmax.f32 %v1290, %v1291
        %v1293 = vrot.slane %v1292, 1
        %v1294 = vmax.f32 %v1292, %v1293
        %v1295 = vrot.slane %v1166, 4
        %v1296 = vmax.f32 %v1166, %v1295
        %v1297 = vrot.slane %v1296, 2
        %v1298 = vmax.f32 %v1296, %v1297
        %v1299 = vrot.slane %v1298, 1
        %v1300 = vmax.f32 %v1298, %v1299
        %v1301 = vsub.f32 %v1151, %v1282
        %v1302 = vsub.f32 %v1156, %v1288
        %v1303 = vsub.f32 %v1161, %v1294
        %v1304 = vsub.f32 %v1166, %v1300
        %v1305 = vmul.f32 %v1301, 1.442695
        %v1306 = vpow.pop %v1305
        %v1307 = vmul.f32 %v1302, 1.442695
        %v1308 = vpow.pop %v1307
        %v1309 = vmul.f32 %v1303, 1.442695
        %v1310 = vpow.pop %v1309
        %v1311 = vmul.f32 %v1304, 1.442695
        %v1312 = vpow.pop %v1311
        %v1313 = vrot.slane %v1306, 4
        %v1314 = vadd.f32 %v1306, %v1313
        %v1315 = vrot.slane %v1314, 2
        %v1316 = vadd.f32 %v1314, %v1315
        %v1317 = vrot.slane %v1316, 1
        %v1318 = vadd.f32 %v1316, %v1317
        %v1319 = vrot.slane %v1308, 4
        %v1320 = vadd.f32 %v1308, %v1319
        %v1321 = vrot.slane %v1320, 2
        %v1322 = vadd.f32 %v1320, %v1321
        %v1323 = vrot.slane %v1322, 1
        %v1324 = vadd.f32 %v1322, %v1323
        %v1325 = vrot.slane %v1310, 4
        %v1326 = vadd.f32 %v1310, %v1325
        %v1327 = vrot.slane %v1326, 2
        %v1328 = vadd.f32 %v1326, %v1327
        %v1329 = vrot.slane %v1328, 1
        %v1330 = vadd.f32 %v1328, %v1329
        %v1331 = vrot.slane %v1312, 4
        %v1332 = vadd.f32 %v1312, %v1331
        %v1333 = vrot.slane %v1332, 2
        %v1334 = vadd.f32 %v1332, %v1333
        %v1335 = vrot.slane %v1334, 1
        %v1336 = vadd.f32 %v1334, %v1335
        %v1337 = vrcp.pop %v1318
        %v1338 = vrcp.pop %v1324
        %v1339 = vrcp.pop %v1330
        %v1340 = vrcp.pop %v1336
        %v1341 = vmul.f32 %v1306, %v1337
        %v1342 = vmul.f32 %v1308, %v1338
        %v1343 = vmul.f32 %v1310, %v1339
        %v1344 = vmul.f32 %v1312, %v1340
        %v1345 = vmax.f32 %v1191, 0.0
        %v1346 = vmax.f32 %v1196, 0.0
        %v1347 = vmax.f32 %v1201, 0.0
        %v1348 = vmax.f32 %v1206, 0.0
        %v1349 = vand.u32 2147483647, %v1191
        %v1350 = vand.u32 2147483647, %v1196
        %v1351 = vand.u32 2147483647, %v1201
        %v1352 = vand.u32 2147483647, %v1206
        %v1353 = vsub.f32 0.0, %v1349
        %v1354 = vsub.f32 0.0, %v1350
        %v1355 = vsub.f32 0.0, %v1351
        %v1356 = vsub.f32 0.0, %v1352
        %v1357 = vmul.f32 %v1353, 1.442695
        %v1358 = vpow.pop %v1357
        %v1359 = vmul.f32 %v1354, 1.442695
        %v1360 = vpow.pop %v1359
        %v1361 = vmul.f32 %v1355, 1.442695
        %v1362 = vpow.pop %v1361
        %v1363 = vmul.f32 %v1356, 1.442695
        %v1364 = vpow.pop %v1363
        %v1365 = vadd.f32 %v1358, 1.0
        %v1366 = vadd.f32 %v1360, 1.0
        %v1367 = vadd.f32 %v1362, 1.0
        %v1368 = vadd.f32 %v1364, 1.0
        %v1369 = vlog2.pop %v1365
        %v1370 = vmul.f32 %v1369, 0.6931472
        %v1371 = vlog2.pop %v1366
        %v1372 = vmul.f32 %v1371, 0.6931472
        %v1373 = vlog2.pop %v1367
        %v1374 = vmul.f32 %v1373, 0.6931472
        %v1375 = vlog2.pop %v1368
        %v1376 = vmul.f32 %v1375, 0.6931472
        %v1377 = vadd.f32 %v1345, %v1370
        %v1378 = vadd.f32 %v1346, %v1372
        %v1379 = vadd.f32 %v1347, %v1374
        %v1380 = vadd.f32 %v1348, %v1376
        %v1381 = vadd.f32 %v1377, 0.001
        %v1382 = vadd.f32 %v1378, 0.001
        %v1383 = vadd.f32 %v1379, 0.001
        %v1384 = vadd.f32 %v1380, 0.001
        %v1385 = vsub.f32 0.0, %v1171
        %v1386 = vsub.f32 0.0, %v1176
        %v1387 = vsub.f32 0.0, %v1181
        %v1388 = vsub.f32 0.0, %v1186
        %v1389 = vmul.f32 %v1385, 1.442695
        %v1390 = vpow.pop %v1389
        %v1391 = vmul.f32 %v1386, 1.442695
        %v1392 = vpow.pop %v1391
        %v1393 = vmul.f32 %v1387, 1.442695
        %v1394 = vpow.pop %v1393
        %v1395 = vmul.f32 %v1388, 1.442695
        %v1396 = vpow.pop %v1395
        %v1397 = vadd.f32 %v1390, 1.0
        %v1398 = vadd.f32 %v1392, 1.0
        %v1399 = vadd.f32 %v1394, 1.0
        %v1400 = vadd.f32 %v1396, 1.0
        %v1401 = vrcp.pop %v1397
        %v1402 = vrcp.pop %v1398
        %v1403 = vrcp.pop %v1399
        %v1404 = vrcp.pop %v1400
        %v1405 = vmul.f32 %v1401, 0.95
        %v1406 = vmul.f32 %v1402, 0.95
        %v1407 = vmul.f32 %v1403, 0.95
        %v1408 = vmul.f32 %v1404, 0.95
        %v1409 = vadd.f32 %v1405, 0.025
        %v1410 = vadd.f32 %v1406, 0.025
        %v1411 = vadd.f32 %v1407, 0.025
        %v1412 = vadd.f32 %v1408, 0.025
        %v1413 = vmul.f32 %v1273, 0.992
        %v1414 = vmul.f32 %v1274, 0.992
        %v1415 = vmul.f32 %v1275, 0.992
        %v1416 = vmul.f32 %v1276, 0.992
        %v1417 = vadd.f32 %v1413, 0.001
        %v1418 = vadd.f32 %v1414, 0.001
        %v1419 = vadd.f32 %v1415, 0.001
        %v1420 = vadd.f32 %v1416, 0.001
        %v1421 = vmul.f32 %v1341, 0.992
        %v1422 = vmul.f32 %v1342, 0.992
        %v1423 = vmul.f32 %v1343, 0.992
        %v1424 = vmul.f32 %v1344, 0.992
        %v1425 = vadd.f32 %v1421, 0.001
        %v1426 = vadd.f32 %v1422, 0.001
        %v1427 = vadd.f32 %v1423, 0.001
        %v1428 = vadd.f32 %v1424, 0.001
        %v1429 = vlaneseq
        %v1430 = vshrl.u32 %v1429, 7
        %v1431 = vadd.f32 %v1417, 0.0
        %v1432 = vadd.f32 %v1418, 0.0
        %v1433 = vadd.f32 %v1419, 0.0
        %v1434 = vadd.f32 %v1420, 0.0
        %vm1435 = vcmp.eq.s32.totalorder %v1430, 0
        %v1436 = vlaneseq
        %v1437 = vshrl.u32 %v1436, 7
        %v1438 = vsub.s32 0, %v1437
        %v1439 = vrot.slane %v1431, %v1438
        %v1440 = vlaneseq
        %v1441 = vshrl.u32 %v1440, 7
        %v1442 = vsub.s32 0, %v1441
        %v1443 = vrot.slane %v1432, %v1442
        %v1444 = vlaneseq
        %v1445 = vshrl.u32 %v1444, 7
        %v1446 = vsub.s32 0, %v1445
        %v1447 = vrot.slane %v1433, %v1446
        %v1448 = vlaneseq
        %v1449 = vshrl.u32 %v1448, 7
        %v1450 = vsub.s32 0, %v1449
        %v1451 = vrot.slane %v1434, %v1450
        %v1452 = vsel %vm1435, %v1439, 0.0
        %v1453 = vsel %vm1435, %v1443, 0.0
        %v1454 = vsel %vm1435, %v1447, 0.0
        %v1455 = vsel %vm1435, %v1451, 0.0
        %vm1456 = vcmp.eq.s32.totalorder %v1430, 1
        %v1457 = vsel %vm1456, %v1439, 0.0
        %v1458 = vsel %vm1456, %v1443, 0.0
        %v1459 = vsel %vm1456, %v1447, 0.0
        %v1460 = vsel %vm1456, %v1451, 0.0
        %v1465 = vrot.slane %v1417, 1
        %v1466 = vrot.slane %v1418, 1
        %v1467 = vrot.slane %v1419, 1
        %v1468 = vrot.slane %v1420, 1
        %v1473 = vadd.f32 %v1431, %v1465
        %v1474 = vadd.f32 %v1432, %v1466
        %v1475 = vadd.f32 %v1433, %v1467
        %v1476 = vadd.f32 %v1434, %v1468
        %v1477 = vlaneseq
        %v1478 = vshrl.u32 %v1477, 7
        %v1479 = vsub.s32 0, %v1478
        %v1480 = vrot.slane %v1473, %v1479
        %v1481 = vlaneseq
        %v1482 = vshrl.u32 %v1481, 7
        %v1483 = vsub.s32 0, %v1482
        %v1484 = vrot.slane %v1474, %v1483
        %v1485 = vlaneseq
        %v1486 = vshrl.u32 %v1485, 7
        %v1487 = vsub.s32 0, %v1486
        %v1488 = vrot.slane %v1475, %v1487
        %v1489 = vlaneseq
        %v1490 = vshrl.u32 %v1489, 7
        %v1491 = vsub.s32 0, %v1490
        %v1492 = vrot.slane %v1476, %v1491
        %v1493 = vsel %vm1456, %v1480, %v1452
        %v1494 = vsel %vm1456, %v1484, %v1453
        %v1495 = vsel %vm1456, %v1488, %v1454
        %v1496 = vsel %vm1456, %v1492, %v1455
        %vm1497 = vcmp.eq.s32.totalorder %v1430, 2
        %v1498 = vsel %vm1497, %v1480, %v1457
        %v1499 = vsel %vm1497, %v1484, %v1458
        %v1500 = vsel %vm1497, %v1488, %v1459
        %v1501 = vsel %vm1497, %v1492, %v1460
        %v1502 = vrot.slane %v1417, 2
        %v1503 = vrot.slane %v1418, 2
        %v1504 = vrot.slane %v1419, 2
        %v1505 = vrot.slane %v1420, 2
        %v1510 = vadd.f32 %v1473, %v1502
        %v1511 = vadd.f32 %v1474, %v1503
        %v1512 = vadd.f32 %v1475, %v1504
        %v1513 = vadd.f32 %v1476, %v1505
        %v1514 = vlaneseq
        %v1515 = vshrl.u32 %v1514, 7
        %v1516 = vsub.s32 0, %v1515
        %v1517 = vrot.slane %v1510, %v1516
        %v1518 = vlaneseq
        %v1519 = vshrl.u32 %v1518, 7
        %v1520 = vsub.s32 0, %v1519
        %v1521 = vrot.slane %v1511, %v1520
        %v1522 = vlaneseq
        %v1523 = vshrl.u32 %v1522, 7
        %v1524 = vsub.s32 0, %v1523
        %v1525 = vrot.slane %v1512, %v1524
        %v1526 = vlaneseq
        %v1527 = vshrl.u32 %v1526, 7
        %v1528 = vsub.s32 0, %v1527
        %v1529 = vrot.slane %v1513, %v1528
        %v1530 = vsel %vm1497, %v1517, %v1493
        %v1531 = vsel %vm1497, %v1521, %v1494
        %v1532 = vsel %vm1497, %v1525, %v1495
        %v1533 = vsel %vm1497, %v1529, %v1496
        %vm1534 = vcmp.eq.s32.totalorder %v1430, 3
        %v1535 = vsel %vm1534, %v1517, %v1498
        %v1536 = vsel %vm1534, %v1521, %v1499
        %v1537 = vsel %vm1534, %v1525, %v1500
        %v1538 = vsel %vm1534, %v1529, %v1501
        %v1539 = vrot.slane %v1417, 3
        %v1540 = vrot.slane %v1418, 3
        %v1541 = vrot.slane %v1419, 3
        %v1542 = vrot.slane %v1420, 3
        %v1547 = vadd.f32 %v1510, %v1539
        %v1548 = vadd.f32 %v1511, %v1540
        %v1549 = vadd.f32 %v1512, %v1541
        %v1550 = vadd.f32 %v1513, %v1542
        %v1551 = vlaneseq
        %v1552 = vshrl.u32 %v1551, 7
        %v1553 = vsub.s32 0, %v1552
        %v1554 = vrot.slane %v1547, %v1553
        %v1555 = vlaneseq
        %v1556 = vshrl.u32 %v1555, 7
        %v1557 = vsub.s32 0, %v1556
        %v1558 = vrot.slane %v1548, %v1557
        %v1559 = vlaneseq
        %v1560 = vshrl.u32 %v1559, 7
        %v1561 = vsub.s32 0, %v1560
        %v1562 = vrot.slane %v1549, %v1561
        %v1563 = vlaneseq
        %v1564 = vshrl.u32 %v1563, 7
        %v1565 = vsub.s32 0, %v1564
        %v1566 = vrot.slane %v1550, %v1565
        %v1567 = vsel %vm1534, %v1554, %v1530
        %v1568 = vsel %vm1534, %v1558, %v1531
        %v1569 = vsel %vm1534, %v1562, %v1532
        %v1570 = vsel %vm1534, %v1566, %v1533
        %vm1571 = vcmp.eq.s32.totalorder %v1430, 4
        %v1572 = vsel %vm1571, %v1554, %v1535
        %v1573 = vsel %vm1571, %v1558, %v1536
        %v1574 = vsel %vm1571, %v1562, %v1537
        %v1575 = vsel %vm1571, %v1566, %v1538
        %v1576 = vrot.slane %v1417, 4
        %v1577 = vrot.slane %v1418, 4
        %v1578 = vrot.slane %v1419, 4
        %v1579 = vrot.slane %v1420, 4
        %v1584 = vadd.f32 %v1547, %v1576
        %v1585 = vadd.f32 %v1548, %v1577
        %v1586 = vadd.f32 %v1549, %v1578
        %v1587 = vadd.f32 %v1550, %v1579
        %v1588 = vlaneseq
        %v1589 = vshrl.u32 %v1588, 7
        %v1590 = vsub.s32 0, %v1589
        %v1591 = vrot.slane %v1584, %v1590
        %v1592 = vlaneseq
        %v1593 = vshrl.u32 %v1592, 7
        %v1594 = vsub.s32 0, %v1593
        %v1595 = vrot.slane %v1585, %v1594
        %v1596 = vlaneseq
        %v1597 = vshrl.u32 %v1596, 7
        %v1598 = vsub.s32 0, %v1597
        %v1599 = vrot.slane %v1586, %v1598
        %v1600 = vlaneseq
        %v1601 = vshrl.u32 %v1600, 7
        %v1602 = vsub.s32 0, %v1601
        %v1603 = vrot.slane %v1587, %v1602
        %v1604 = vsel %vm1571, %v1591, %v1567
        %v1605 = vsel %vm1571, %v1595, %v1568
        %v1606 = vsel %vm1571, %v1599, %v1569
        %v1607 = vsel %vm1571, %v1603, %v1570
        %vm1608 = vcmp.eq.s32.totalorder %v1430, 5
        %v1609 = vsel %vm1608, %v1591, %v1572
        %v1610 = vsel %vm1608, %v1595, %v1573
        %v1611 = vsel %vm1608, %v1599, %v1574
        %v1612 = vsel %vm1608, %v1603, %v1575
        %v1613 = vrot.slane %v1417, 5
        %v1614 = vrot.slane %v1418, 5
        %v1615 = vrot.slane %v1419, 5
        %v1616 = vrot.slane %v1420, 5
        %v1621 = vadd.f32 %v1584, %v1613
        %v1622 = vadd.f32 %v1585, %v1614
        %v1623 = vadd.f32 %v1586, %v1615
        %v1624 = vadd.f32 %v1587, %v1616
        %v1625 = vlaneseq
        %v1626 = vshrl.u32 %v1625, 7
        %v1627 = vsub.s32 0, %v1626
        %v1628 = vrot.slane %v1621, %v1627
        %v1629 = vlaneseq
        %v1630 = vshrl.u32 %v1629, 7
        %v1631 = vsub.s32 0, %v1630
        %v1632 = vrot.slane %v1622, %v1631
        %v1633 = vlaneseq
        %v1634 = vshrl.u32 %v1633, 7
        %v1635 = vsub.s32 0, %v1634
        %v1636 = vrot.slane %v1623, %v1635
        %v1637 = vlaneseq
        %v1638 = vshrl.u32 %v1637, 7
        %v1639 = vsub.s32 0, %v1638
        %v1640 = vrot.slane %v1624, %v1639
        %v1641 = vsel %vm1608, %v1628, %v1604
        %v1642 = vsel %vm1608, %v1632, %v1605
        %v1643 = vsel %vm1608, %v1636, %v1606
        %v1644 = vsel %vm1608, %v1640, %v1607
        %vm1645 = vcmp.eq.s32.totalorder %v1430, 6
        %v1646 = vsel %vm1645, %v1628, %v1609
        %v1647 = vsel %vm1645, %v1632, %v1610
        %v1648 = vsel %vm1645, %v1636, %v1611
        %v1649 = vsel %vm1645, %v1640, %v1612
        %v1650 = vrot.slane %v1417, 6
        %v1651 = vrot.slane %v1418, 6
        %v1652 = vrot.slane %v1419, 6
        %v1653 = vrot.slane %v1420, 6
        %v1658 = vadd.f32 %v1621, %v1650
        %v1659 = vadd.f32 %v1622, %v1651
        %v1660 = vadd.f32 %v1623, %v1652
        %v1661 = vadd.f32 %v1624, %v1653
        %v1662 = vlaneseq
        %v1663 = vshrl.u32 %v1662, 7
        %v1664 = vsub.s32 0, %v1663
        %v1665 = vrot.slane %v1658, %v1664
        %v1666 = vlaneseq
        %v1667 = vshrl.u32 %v1666, 7
        %v1668 = vsub.s32 0, %v1667
        %v1669 = vrot.slane %v1659, %v1668
        %v1670 = vlaneseq
        %v1671 = vshrl.u32 %v1670, 7
        %v1672 = vsub.s32 0, %v1671
        %v1673 = vrot.slane %v1660, %v1672
        %v1674 = vlaneseq
        %v1675 = vshrl.u32 %v1674, 7
        %v1676 = vsub.s32 0, %v1675
        %v1677 = vrot.slane %v1661, %v1676
        %v1678 = vsel %vm1645, %v1665, %v1641
        %v1679 = vsel %vm1645, %v1669, %v1642
        %v1680 = vsel %vm1645, %v1673, %v1643
        %v1681 = vsel %vm1645, %v1677, %v1644
        %vm1682 = vcmp.eq.s32.totalorder %v1430, 7
        %v1683 = vsel %vm1682, %v1665, %v1646
        %v1684 = vsel %vm1682, %v1669, %v1647
        %v1685 = vsel %vm1682, %v1673, %v1648
        %v1686 = vsel %vm1682, %v1677, %v1649
        %v1687 = vrot.slane %v1417, 7
        %v1688 = vrot.slane %v1418, 7
        %v1689 = vrot.slane %v1419, 7
        %v1690 = vrot.slane %v1420, 7
        %v1695 = vadd.f32 %v1658, %v1687
        %v1696 = vadd.f32 %v1659, %v1688
        %v1697 = vadd.f32 %v1660, %v1689
        %v1698 = vadd.f32 %v1661, %v1690
        %v1699 = vlaneseq
        %v1700 = vshrl.u32 %v1699, 7
        %v1701 = vsub.s32 0, %v1700
        %v1702 = vrot.slane %v1695, %v1701
        %v1703 = vlaneseq
        %v1704 = vshrl.u32 %v1703, 7
        %v1705 = vsub.s32 0, %v1704
        %v1706 = vrot.slane %v1696, %v1705
        %v1707 = vlaneseq
        %v1708 = vshrl.u32 %v1707, 7
        %v1709 = vsub.s32 0, %v1708
        %v1710 = vrot.slane %v1697, %v1709
        %v1711 = vlaneseq
        %v1712 = vshrl.u32 %v1711, 7
        %v1713 = vsub.s32 0, %v1712
        %v1714 = vrot.slane %v1698, %v1713
        %v1715 = vsel %vm1682, %v1702, %v1678
        %v1716 = vsel %vm1682, %v1706, %v1679
        %v1717 = vsel %vm1682, %v1710, %v1680
        %v1718 = vsel %vm1682, %v1714, %v1681
        %v1719 = vadd.f32 %v1425, 0.0
        %v1720 = vadd.f32 %v1426, 0.0
        %v1721 = vadd.f32 %v1427, 0.0
        %v1722 = vadd.f32 %v1428, 0.0
        %v1723 = vlaneseq
        %v1724 = vshrl.u32 %v1723, 7
        %v1725 = vsub.s32 0, %v1724
        %v1726 = vrot.slane %v1719, %v1725
        %v1727 = vlaneseq
        %v1728 = vshrl.u32 %v1727, 7
        %v1729 = vsub.s32 0, %v1728
        %v1730 = vrot.slane %v1720, %v1729
        %v1731 = vlaneseq
        %v1732 = vshrl.u32 %v1731, 7
        %v1733 = vsub.s32 0, %v1732
        %v1734 = vrot.slane %v1721, %v1733
        %v1735 = vlaneseq
        %v1736 = vshrl.u32 %v1735, 7
        %v1737 = vsub.s32 0, %v1736
        %v1738 = vrot.slane %v1722, %v1737
        %v1739 = vsel %vm1435, %v1726, 0.0
        %v1740 = vsel %vm1435, %v1730, 0.0
        %v1741 = vsel %vm1435, %v1734, 0.0
        %v1742 = vsel %vm1435, %v1738, 0.0
        %v1743 = vsel %vm1456, %v1726, 0.0
        %v1744 = vsel %vm1456, %v1730, 0.0
        %v1745 = vsel %vm1456, %v1734, 0.0
        %v1746 = vsel %vm1456, %v1738, 0.0
        %v1751 = vrot.slane %v1425, 1
        %v1752 = vrot.slane %v1426, 1
        %v1753 = vrot.slane %v1427, 1
        %v1754 = vrot.slane %v1428, 1
        %v1759 = vadd.f32 %v1719, %v1751
        %v1760 = vadd.f32 %v1720, %v1752
        %v1761 = vadd.f32 %v1721, %v1753
        %v1762 = vadd.f32 %v1722, %v1754
        %v1763 = vlaneseq
        %v1764 = vshrl.u32 %v1763, 7
        %v1765 = vsub.s32 0, %v1764
        %v1766 = vrot.slane %v1759, %v1765
        %v1767 = vlaneseq
        %v1768 = vshrl.u32 %v1767, 7
        %v1769 = vsub.s32 0, %v1768
        %v1770 = vrot.slane %v1760, %v1769
        %v1771 = vlaneseq
        %v1772 = vshrl.u32 %v1771, 7
        %v1773 = vsub.s32 0, %v1772
        %v1774 = vrot.slane %v1761, %v1773
        %v1775 = vlaneseq
        %v1776 = vshrl.u32 %v1775, 7
        %v1777 = vsub.s32 0, %v1776
        %v1778 = vrot.slane %v1762, %v1777
        %v1779 = vsel %vm1456, %v1766, %v1739
        %v1780 = vsel %vm1456, %v1770, %v1740
        %v1781 = vsel %vm1456, %v1774, %v1741
        %v1782 = vsel %vm1456, %v1778, %v1742
        %v1783 = vsel %vm1497, %v1766, %v1743
        %v1784 = vsel %vm1497, %v1770, %v1744
        %v1785 = vsel %vm1497, %v1774, %v1745
        %v1786 = vsel %vm1497, %v1778, %v1746
        %v1787 = vrot.slane %v1425, 2
        %v1788 = vrot.slane %v1426, 2
        %v1789 = vrot.slane %v1427, 2
        %v1790 = vrot.slane %v1428, 2
        %v1795 = vadd.f32 %v1759, %v1787
        %v1796 = vadd.f32 %v1760, %v1788
        %v1797 = vadd.f32 %v1761, %v1789
        %v1798 = vadd.f32 %v1762, %v1790
        %v1799 = vlaneseq
        %v1800 = vshrl.u32 %v1799, 7
        %v1801 = vsub.s32 0, %v1800
        %v1802 = vrot.slane %v1795, %v1801
        %v1803 = vlaneseq
        %v1804 = vshrl.u32 %v1803, 7
        %v1805 = vsub.s32 0, %v1804
        %v1806 = vrot.slane %v1796, %v1805
        %v1807 = vlaneseq
        %v1808 = vshrl.u32 %v1807, 7
        %v1809 = vsub.s32 0, %v1808
        %v1810 = vrot.slane %v1797, %v1809
        %v1811 = vlaneseq
        %v1812 = vshrl.u32 %v1811, 7
        %v1813 = vsub.s32 0, %v1812
        %v1814 = vrot.slane %v1798, %v1813
        %v1815 = vsel %vm1497, %v1802, %v1779
        %v1816 = vsel %vm1497, %v1806, %v1780
        %v1817 = vsel %vm1497, %v1810, %v1781
        %v1818 = vsel %vm1497, %v1814, %v1782
        %v1819 = vsel %vm1534, %v1802, %v1783
        %v1820 = vsel %vm1534, %v1806, %v1784
        %v1821 = vsel %vm1534, %v1810, %v1785
        %v1822 = vsel %vm1534, %v1814, %v1786
        %v1823 = vrot.slane %v1425, 3
        %v1824 = vrot.slane %v1426, 3
        %v1825 = vrot.slane %v1427, 3
        %v1826 = vrot.slane %v1428, 3
        %v1831 = vadd.f32 %v1795, %v1823
        %v1832 = vadd.f32 %v1796, %v1824
        %v1833 = vadd.f32 %v1797, %v1825
        %v1834 = vadd.f32 %v1798, %v1826
        %v1835 = vlaneseq
        %v1836 = vshrl.u32 %v1835, 7
        %v1837 = vsub.s32 0, %v1836
        %v1838 = vrot.slane %v1831, %v1837
        %v1839 = vlaneseq
        %v1840 = vshrl.u32 %v1839, 7
        %v1841 = vsub.s32 0, %v1840
        %v1842 = vrot.slane %v1832, %v1841
        %v1843 = vlaneseq
        %v1844 = vshrl.u32 %v1843, 7
        %v1845 = vsub.s32 0, %v1844
        %v1846 = vrot.slane %v1833, %v1845
        %v1847 = vlaneseq
        %v1848 = vshrl.u32 %v1847, 7
        %v1849 = vsub.s32 0, %v1848
        %v1850 = vrot.slane %v1834, %v1849
        %v1851 = vsel %vm1534, %v1838, %v1815
        %v1852 = vsel %vm1534, %v1842, %v1816
        %v1853 = vsel %vm1534, %v1846, %v1817
        %v1854 = vsel %vm1534, %v1850, %v1818
        %v1855 = vsel %vm1571, %v1838, %v1819
        %v1856 = vsel %vm1571, %v1842, %v1820
        %v1857 = vsel %vm1571, %v1846, %v1821
        %v1858 = vsel %vm1571, %v1850, %v1822
        %v1859 = vrot.slane %v1425, 4
        %v1860 = vrot.slane %v1426, 4
        %v1861 = vrot.slane %v1427, 4
        %v1862 = vrot.slane %v1428, 4
        %v1867 = vadd.f32 %v1831, %v1859
        %v1868 = vadd.f32 %v1832, %v1860
        %v1869 = vadd.f32 %v1833, %v1861
        %v1870 = vadd.f32 %v1834, %v1862
        %v1871 = vlaneseq
        %v1872 = vshrl.u32 %v1871, 7
        %v1873 = vsub.s32 0, %v1872
        %v1874 = vrot.slane %v1867, %v1873
        %v1875 = vlaneseq
        %v1876 = vshrl.u32 %v1875, 7
        %v1877 = vsub.s32 0, %v1876
        %v1878 = vrot.slane %v1868, %v1877
        %v1879 = vlaneseq
        %v1880 = vshrl.u32 %v1879, 7
        %v1881 = vsub.s32 0, %v1880
        %v1882 = vrot.slane %v1869, %v1881
        %v1883 = vlaneseq
        %v1884 = vshrl.u32 %v1883, 7
        %v1885 = vsub.s32 0, %v1884
        %v1886 = vrot.slane %v1870, %v1885
        %v1887 = vsel %vm1571, %v1874, %v1851
        %v1888 = vsel %vm1571, %v1878, %v1852
        %v1889 = vsel %vm1571, %v1882, %v1853
        %v1890 = vsel %vm1571, %v1886, %v1854
        %v1891 = vsel %vm1608, %v1874, %v1855
        %v1892 = vsel %vm1608, %v1878, %v1856
        %v1893 = vsel %vm1608, %v1882, %v1857
        %v1894 = vsel %vm1608, %v1886, %v1858
        %v1895 = vrot.slane %v1425, 5
        %v1896 = vrot.slane %v1426, 5
        %v1897 = vrot.slane %v1427, 5
        %v1898 = vrot.slane %v1428, 5
        %v1903 = vadd.f32 %v1867, %v1895
        %v1904 = vadd.f32 %v1868, %v1896
        %v1905 = vadd.f32 %v1869, %v1897
        %v1906 = vadd.f32 %v1870, %v1898
        %v1907 = vlaneseq
        %v1908 = vshrl.u32 %v1907, 7
        %v1909 = vsub.s32 0, %v1908
        %v1910 = vrot.slane %v1903, %v1909
        %v1911 = vlaneseq
        %v1912 = vshrl.u32 %v1911, 7
        %v1913 = vsub.s32 0, %v1912
        %v1914 = vrot.slane %v1904, %v1913
        %v1915 = vlaneseq
        %v1916 = vshrl.u32 %v1915, 7
        %v1917 = vsub.s32 0, %v1916
        %v1918 = vrot.slane %v1905, %v1917
        %v1919 = vlaneseq
        %v1920 = vshrl.u32 %v1919, 7
        %v1921 = vsub.s32 0, %v1920
        %v1922 = vrot.slane %v1906, %v1921
        %v1923 = vsel %vm1608, %v1910, %v1887
        %v1924 = vsel %vm1608, %v1914, %v1888
        %v1925 = vsel %vm1608, %v1918, %v1889
        %v1926 = vsel %vm1608, %v1922, %v1890
        %v1927 = vsel %vm1645, %v1910, %v1891
        %v1928 = vsel %vm1645, %v1914, %v1892
        %v1929 = vsel %vm1645, %v1918, %v1893
        %v1930 = vsel %vm1645, %v1922, %v1894
        %v1931 = vrot.slane %v1425, 6
        %v1932 = vrot.slane %v1426, 6
        %v1933 = vrot.slane %v1427, 6
        %v1934 = vrot.slane %v1428, 6
        %v1939 = vadd.f32 %v1903, %v1931
        %v1940 = vadd.f32 %v1904, %v1932
        %v1941 = vadd.f32 %v1905, %v1933
        %v1942 = vadd.f32 %v1906, %v1934
        %v1943 = vlaneseq
        %v1944 = vshrl.u32 %v1943, 7
        %v1945 = vsub.s32 0, %v1944
        %v1946 = vrot.slane %v1939, %v1945
        %v1947 = vlaneseq
        %v1948 = vshrl.u32 %v1947, 7
        %v1949 = vsub.s32 0, %v1948
        %v1950 = vrot.slane %v1940, %v1949
        %v1951 = vlaneseq
        %v1952 = vshrl.u32 %v1951, 7
        %v1953 = vsub.s32 0, %v1952
        %v1954 = vrot.slane %v1941, %v1953
        %v1955 = vlaneseq
        %v1956 = vshrl.u32 %v1955, 7
        %v1957 = vsub.s32 0, %v1956
        %v1958 = vrot.slane %v1942, %v1957
        %v1959 = vsel %vm1645, %v1946, %v1923
        %v1960 = vsel %vm1645, %v1950, %v1924
        %v1961 = vsel %vm1645, %v1954, %v1925
        %v1962 = vsel %vm1645, %v1958, %v1926
        %v1963 = vsel %vm1682, %v1946, %v1927
        %v1964 = vsel %vm1682, %v1950, %v1928
        %v1965 = vsel %vm1682, %v1954, %v1929
        %v1966 = vsel %vm1682, %v1958, %v1930
        %v1967 = vrot.slane %v1425, 7
        %v1968 = vrot.slane %v1426, 7
        %v1969 = vrot.slane %v1427, 7
        %v1970 = vrot.slane %v1428, 7
        %v1975 = vadd.f32 %v1939, %v1967
        %v1976 = vadd.f32 %v1940, %v1968
        %v1977 = vadd.f32 %v1941, %v1969
        %v1978 = vadd.f32 %v1942, %v1970
        %v1979 = vlaneseq
        %v1980 = vshrl.u32 %v1979, 7
        %v1981 = vsub.s32 0, %v1980
        %v1982 = vrot.slane %v1975, %v1981
        %v1983 = vlaneseq
        %v1984 = vshrl.u32 %v1983, 7
        %v1985 = vsub.s32 0, %v1984
        %v1986 = vrot.slane %v1976, %v1985
        %v1987 = vlaneseq
        %v1988 = vshrl.u32 %v1987, 7
        %v1989 = vsub.s32 0, %v1988
        %v1990 = vrot.slane %v1977, %v1989
        %v1991 = vlaneseq
        %v1992 = vshrl.u32 %v1991, 7
        %v1993 = vsub.s32 0, %v1992
        %v1994 = vrot.slane %v1978, %v1993
        %v1995 = vsel %vm1682, %v1982, %v1959
        %v1996 = vsel %vm1682, %v1986, %v1960
        %v1997 = vsel %vm1682, %v1990, %v1961
        %v1998 = vsel %vm1682, %v1994, %v1962
        %v1999 = vmul.f32 %v1715, 6.0
        %v2000 = vmul.f32 %v1716, 6.0
        %v2001 = vmul.f32 %v1717, 6.0
        %v2002 = vmul.f32 %v1718, 6.0
        %v2003 = vadd.f32 %v1999, -3.0
        %v2004 = vadd.f32 %v2000, -3.0
        %v2005 = vadd.f32 %v2001, -3.0
        %v2006 = vadd.f32 %v2002, -3.0
        %v2007 = vmul.f32 %v1683, 6.0
        %v2008 = vmul.f32 %v1684, 6.0
        %v2009 = vmul.f32 %v1685, 6.0
        %v2010 = vmul.f32 %v1686, 6.0
        %v2011 = vadd.f32 %v2007, -3.0
        %v2012 = vadd.f32 %v2008, -3.0
        %v2013 = vadd.f32 %v2009, -3.0
        %v2014 = vadd.f32 %v2010, -3.0
        %v2015 = vmul.f32 %v1995, 6.0
        %v2016 = vmul.f32 %v1996, 6.0
        %v2017 = vmul.f32 %v1997, 6.0
        %v2018 = vmul.f32 %v1998, 6.0
        %v2019 = vadd.f32 %v2015, -3.0
        %v2020 = vadd.f32 %v2016, -3.0
        %v2021 = vadd.f32 %v2017, -3.0
        %v2022 = vadd.f32 %v2018, -3.0
        %v2023 = vmul.f32 %v1963, 6.0
        %v2024 = vmul.f32 %v1964, 6.0
        %v2025 = vmul.f32 %v1965, 6.0
        %v2026 = vmul.f32 %v1966, 6.0
        %v2027 = vadd.f32 %v2023, -3.0
        %v2028 = vadd.f32 %v2024, -3.0
        %v2029 = vadd.f32 %v2025, -3.0
        %v2030 = vadd.f32 %v2026, -3.0
        %v2031 = vsel %vm1682, 3.0, %v2003
        %v2032 = vsel %vm1682, 3.0, %v2004
        %v2033 = vsel %vm1682, 3.0, %v2005
        %v2034 = vsel %vm1682, 3.0, %v2006
        %v2035 = vsel %vm1682, 3.0, %v2019
        %v2036 = vsel %vm1682, 3.0, %v2020
        %v2037 = vsel %vm1682, 3.0, %v2021
        %v2038 = vsel %vm1682, 3.0, %v2022
        %v2039 = vsub.f32 %v2031, %v2011
        %v2040 = vsub.f32 %v2032, %v2012
        %v2041 = vsub.f32 %v2033, %v2013
        %v2042 = vsub.f32 %v2034, %v2014
        %v2043 = vsub.f32 %v2035, %v2027
        %v2044 = vsub.f32 %v2036, %v2028
        %v2045 = vsub.f32 %v2037, %v2029
        %v2046 = vsub.f32 %v2038, %v2030
        %v2047 = vrcp.pop %v2039
        %v2048 = vmul.f32 %v2043, %v2047
        %v2049 = vrcp.pop %v2040
        %v2050 = vmul.f32 %v2044, %v2049
        %v2051 = vrcp.pop %v2041
        %v2052 = vmul.f32 %v2045, %v2051
        %v2053 = vrcp.pop %v2042
        %v2054 = vmul.f32 %v2046, %v2053
        %v2055 = vld [vmem:[%s596] sm:$0xf]
        %v2056 = vmax.f32 %v2055, -3.0
        %v2057 = vmin.f32 %v2056, 3.0
        %v2060 = vunpack.c.l.s4 1966171168
        %v2061 = vunpack.c.0.s8 %v2060
        %v2062 = vlaneseq
        %v2063 = vshrl.u32 %v2062, 7
        %v2064 = vsub.s32 %v2061, %v2063
        %v2065 = vrot.slane %v2057, %v2064
        %v2066 = vcombine.high %v2065, %v2065
        %v2068 = vunpack.c.l.s4 1966171168
        %v2069 = vunpack.c.0.s8 %v2068
        %v2070 = vlaneseq
        %v2071 = vshrl.u32 %v2070, 7
        %v2072 = vsub.s32 %v2069, %v2071
        %v2073 = vrot.slane %v2065, %v2072
        %v2075 = vunpack.c.l.s4 1966171168
        %v2076 = vunpack.c.0.s8 %v2075
        %v2077 = vlaneseq
        %v2078 = vshrl.u32 %v2077, 7
        %v2079 = vsub.s32 %v2076, %v2078
        %v2080 = vrot.slane %v2066, %v2079
        %v2081 = vcombine.high %v2073, %v2073
        %v2082 = vcombine.high %v2080, %v2080
        %vm2087 = vcmp.ge.f32.partialorder %v2073, -2.999999
        %vm2088 = vcmp.ge.f32.partialorder %v2080, -2.999999
        %vm2089 = vcmp.ge.f32.partialorder %v2081, -2.999999
        %vm2090 = vcmp.ge.f32.partialorder %v2082, -2.999999
        %v2091 = vsel %vm2087, 1, 0
        %v2092 = vsel %vm2088, 1, 0
        %v2093 = vsel %vm2089, 1, 0
        %v2094 = vsel %vm2090, 1, 0
        %v2095 = vadd.f32 %v2031, 1e-06
        %v2096 = vadd.f32 %v2032, 1e-06
        %v2097 = vadd.f32 %v2033, 1e-06
        %v2098 = vadd.f32 %v2034, 1e-06
        %v2099 = vlaneseq
        %v2100 = vshrl.u32 %v2099, 7
        %v2101 = vsub.s32 0, %v2100
        %v2102 = vrot.slane %v2073, %v2101
        %v2103 = vlaneseq
        %v2104 = vshrl.u32 %v2103, 7
        %v2105 = vsub.s32 0, %v2104
        %v2106 = vrot.slane %v2080, %v2105
        %v2107 = vlaneseq
        %v2108 = vshrl.u32 %v2107, 7
        %v2109 = vsub.s32 0, %v2108
        %v2110 = vrot.slane %v2081, %v2109
        %v2111 = vlaneseq
        %v2112 = vshrl.u32 %v2111, 7
        %v2113 = vsub.s32 0, %v2112
        %v2114 = vrot.slane %v2082, %v2113
        %vm2119 = vcmp.ge.f32.partialorder %v2102, %v2095
        %vm2120 = vcmp.ge.f32.partialorder %v2106, %v2096
        %vm2121 = vcmp.ge.f32.partialorder %v2110, %v2097
        %vm2122 = vcmp.ge.f32.partialorder %v2114, %v2098
        %v2123 = vsel %vm2119, 1, 0
        %v2124 = vsel %vm2120, 1, 0
        %v2125 = vsel %vm2121, 1, 0
        %v2126 = vsel %vm2122, 1, 0
        %v2127 = vrot.slane %v2123, 4
        %v2128 = vadd.s32 %v2123, %v2127
        %v2129 = vrot.slane %v2128, 2
        %v2130 = vadd.s32 %v2128, %v2129
        %v2131 = vrot.slane %v2130, 1
        %v2132 = vadd.s32 %v2130, %v2131
        %v2133 = vrot.slane %v2124, 4
        %v2134 = vadd.s32 %v2124, %v2133
        %v2135 = vrot.slane %v2134, 2
        %v2136 = vadd.s32 %v2134, %v2135
        %v2137 = vrot.slane %v2136, 1
        %v2138 = vadd.s32 %v2136, %v2137
        %v2139 = vrot.slane %v2125, 4
        %v2140 = vadd.s32 %v2125, %v2139
        %v2141 = vrot.slane %v2140, 2
        %v2142 = vadd.s32 %v2140, %v2141
        %v2143 = vrot.slane %v2142, 1
        %v2144 = vadd.s32 %v2142, %v2143
        %v2145 = vrot.slane %v2126, 4
        %v2146 = vadd.s32 %v2126, %v2145
        %v2147 = vrot.slane %v2146, 2
        %v2148 = vadd.s32 %v2146, %v2147
        %v2149 = vrot.slane %v2148, 1
        %v2150 = vadd.s32 %v2148, %v2149
        %v2151 = vadd.s32 %v2091, %v2132
        %v2152 = vadd.s32 %v2092, %v2138
        %v2153 = vadd.s32 %v2093, %v2144
        %v2154 = vadd.s32 %v2094, %v2150
        %v2155 = vsub.s32 %v2151, 1
        %v2156 = vsub.s32 %v2152, 1
        %v2157 = vsub.s32 %v2153, 1
        %v2158 = vsub.s32 %v2154, 1
        %vm2159 = vcmp.gt.s32.totalorder %v2155, 0
        %v2160 = vsel %vm2159, %v2155, 0
        %vm2161 = vcmp.gt.s32.totalorder %v2156, 0
        %v2162 = vsel %vm2161, %v2156, 0
        %vm2163 = vcmp.gt.s32.totalorder %v2157, 0
        %v2164 = vsel %vm2163, %v2157, 0
        %vm2165 = vcmp.gt.s32.totalorder %v2158, 0
        %v2166 = vsel %vm2165, %v2158, 0
        %vm2167 = vcmp.lt.s32.totalorder %v2160, 7
        %v2168 = vsel %vm2167, %v2160, 7
        %vm2169 = vcmp.lt.s32.totalorder %v2162, 7
        %v2170 = vsel %vm2169, %v2162, 7
        %vm2171 = vcmp.lt.s32.totalorder %v2164, 7
        %v2172 = vsel %vm2171, %v2164, 7
        %vm2173 = vcmp.lt.s32.totalorder %v2166, 7
        %v2174 = vsel %vm2173, %v2166, 7
        %v2175 = vlaneseq
        %v2176 = vshrl.u32 %v2175, 7
        %v2177 = vsub.s32 0, %v2176
        %v2178 = vrot.slane %v2168, %v2177
        %v2179 = vlaneseq
        %v2180 = vshrl.u32 %v2179, 7
        %v2181 = vsub.s32 0, %v2180
        %v2182 = vrot.slane %v2170, %v2181
        %v2183 = vlaneseq
        %v2184 = vshrl.u32 %v2183, 7
        %v2185 = vsub.s32 0, %v2184
        %v2186 = vrot.slane %v2172, %v2185
        %v2187 = vlaneseq
        %v2188 = vshrl.u32 %v2187, 7
        %v2189 = vsub.s32 0, %v2188
        %v2190 = vrot.slane %v2174, %v2189
        %vm2191 = vcmp.eq.s32.totalorder %v1430, %v2178
        %vm2192 = vcmp.eq.s32.totalorder %v1430, %v2182
        %vm2193 = vcmp.eq.s32.totalorder %v1430, %v2186
        %vm2194 = vcmp.eq.s32.totalorder %v1430, %v2190
        %v2195 = vsel %vm2191, 1, 0
        %v2196 = vsel %vm2192, 1, 0
        %v2197 = vsel %vm2193, 1, 0
        %v2198 = vsel %vm2194, 1, 0
        %v2199 = vcvt.s32.f32 %v2195
        %v2200 = vcvt.s32.f32 %v2196
        %v2201 = vcvt.s32.f32 %v2197
        %v2202 = vcvt.s32.f32 %v2198
        %v2203 = vmul.f32 %v2039, %v2199
        %v2204 = vmul.f32 %v2040, %v2200
        %v2205 = vmul.f32 %v2041, %v2201
        %v2206 = vmul.f32 %v2042, %v2202
        %v2207 = vrot.slane %v2203, 4
        %v2208 = vadd.f32 %v2203, %v2207
        %v2209 = vrot.slane %v2208, 2
        %v2210 = vadd.f32 %v2208, %v2209
        %v2211 = vrot.slane %v2210, 1
        %v2212 = vadd.f32 %v2210, %v2211
        %v2213 = vrot.slane %v2204, 4
        %v2214 = vadd.f32 %v2204, %v2213
        %v2215 = vrot.slane %v2214, 2
        %v2216 = vadd.f32 %v2214, %v2215
        %v2217 = vrot.slane %v2216, 1
        %v2218 = vadd.f32 %v2216, %v2217
        %v2219 = vrot.slane %v2205, 4
        %v2220 = vadd.f32 %v2205, %v2219
        %v2221 = vrot.slane %v2220, 2
        %v2222 = vadd.f32 %v2220, %v2221
        %v2223 = vrot.slane %v2222, 1
        %v2224 = vadd.f32 %v2222, %v2223
        %v2225 = vrot.slane %v2206, 4
        %v2226 = vadd.f32 %v2206, %v2225
        %v2227 = vrot.slane %v2226, 2
        %v2228 = vadd.f32 %v2226, %v2227
        %v2229 = vrot.slane %v2228, 1
        %v2230 = vadd.f32 %v2228, %v2229
        %v2231 = vmul.f32 %v2011, %v2199
        %v2232 = vmul.f32 %v2012, %v2200
        %v2233 = vmul.f32 %v2013, %v2201
        %v2234 = vmul.f32 %v2014, %v2202
        %v2235 = vrot.slane %v2231, 4
        %v2236 = vadd.f32 %v2231, %v2235
        %v2237 = vrot.slane %v2236, 2
        %v2238 = vadd.f32 %v2236, %v2237
        %v2239 = vrot.slane %v2238, 1
        %v2240 = vadd.f32 %v2238, %v2239
        %v2241 = vrot.slane %v2232, 4
        %v2242 = vadd.f32 %v2232, %v2241
        %v2243 = vrot.slane %v2242, 2
        %v2244 = vadd.f32 %v2242, %v2243
        %v2245 = vrot.slane %v2244, 1
        %v2246 = vadd.f32 %v2244, %v2245
        %v2247 = vrot.slane %v2233, 4
        %v2248 = vadd.f32 %v2233, %v2247
        %v2249 = vrot.slane %v2248, 2
        %v2250 = vadd.f32 %v2248, %v2249
        %v2251 = vrot.slane %v2250, 1
        %v2252 = vadd.f32 %v2250, %v2251
        %v2253 = vrot.slane %v2234, 4
        %v2254 = vadd.f32 %v2234, %v2253
        %v2255 = vrot.slane %v2254, 2
        %v2256 = vadd.f32 %v2254, %v2255
        %v2257 = vrot.slane %v2256, 1
        %v2258 = vadd.f32 %v2256, %v2257
        %v2259 = vmul.f32 %v2027, %v2199
        %v2260 = vmul.f32 %v2028, %v2200
        %v2261 = vmul.f32 %v2029, %v2201
        %v2262 = vmul.f32 %v2030, %v2202
        %v2263 = vrot.slane %v2259, 4
        %v2264 = vadd.f32 %v2259, %v2263
        %v2265 = vrot.slane %v2264, 2
        %v2266 = vadd.f32 %v2264, %v2265
        %v2267 = vrot.slane %v2266, 1
        %v2268 = vadd.f32 %v2266, %v2267
        %v2269 = vrot.slane %v2260, 4
        %v2270 = vadd.f32 %v2260, %v2269
        %v2271 = vrot.slane %v2270, 2
        %v2272 = vadd.f32 %v2270, %v2271
        %v2273 = vrot.slane %v2272, 1
        %v2274 = vadd.f32 %v2272, %v2273
        %v2275 = vrot.slane %v2261, 4
        %v2276 = vadd.f32 %v2261, %v2275
        %v2277 = vrot.slane %v2276, 2
        %v2278 = vadd.f32 %v2276, %v2277
        %v2279 = vrot.slane %v2278, 1
        %v2280 = vadd.f32 %v2278, %v2279
        %v2281 = vrot.slane %v2262, 4
        %v2282 = vadd.f32 %v2262, %v2281
        %v2283 = vrot.slane %v2282, 2
        %v2284 = vadd.f32 %v2282, %v2283
        %v2285 = vrot.slane %v2284, 1
        %v2286 = vadd.f32 %v2284, %v2285
        %v2287 = vmul.f32 %v2043, %v2199
        %v2288 = vmul.f32 %v2044, %v2200
        %v2289 = vmul.f32 %v2045, %v2201
        %v2290 = vmul.f32 %v2046, %v2202
        %v2291 = vrot.slane %v2287, 4
        %v2292 = vadd.f32 %v2287, %v2291
        %v2293 = vrot.slane %v2292, 2
        %v2294 = vadd.f32 %v2292, %v2293
        %v2295 = vrot.slane %v2294, 1
        %v2296 = vadd.f32 %v2294, %v2295
        %v2297 = vrot.slane %v2288, 4
        %v2298 = vadd.f32 %v2288, %v2297
        %v2299 = vrot.slane %v2298, 2
        %v2300 = vadd.f32 %v2298, %v2299
        %v2301 = vrot.slane %v2300, 1
        %v2302 = vadd.f32 %v2300, %v2301
        %v2303 = vrot.slane %v2289, 4
        %v2304 = vadd.f32 %v2289, %v2303
        %v2305 = vrot.slane %v2304, 2
        %v2306 = vadd.f32 %v2304, %v2305
        %v2307 = vrot.slane %v2306, 1
        %v2308 = vadd.f32 %v2306, %v2307
        %v2309 = vrot.slane %v2290, 4
        %v2310 = vadd.f32 %v2290, %v2309
        %v2311 = vrot.slane %v2310, 2
        %v2312 = vadd.f32 %v2310, %v2311
        %v2313 = vrot.slane %v2312, 1
        %v2314 = vadd.f32 %v2312, %v2313
        %v2315 = vmul.f32 %v2048, %v2199
        %v2316 = vmul.f32 %v2050, %v2200
        %v2317 = vmul.f32 %v2052, %v2201
        %v2318 = vmul.f32 %v2054, %v2202
        %v2319 = vrot.slane %v2315, 4
        %v2320 = vadd.f32 %v2315, %v2319
        %v2321 = vrot.slane %v2320, 2
        %v2322 = vadd.f32 %v2320, %v2321
        %v2323 = vrot.slane %v2322, 1
        %v2324 = vadd.f32 %v2322, %v2323
        %v2325 = vrot.slane %v2316, 4
        %v2326 = vadd.f32 %v2316, %v2325
        %v2327 = vrot.slane %v2326, 2
        %v2328 = vadd.f32 %v2326, %v2327
        %v2329 = vrot.slane %v2328, 1
        %v2330 = vadd.f32 %v2328, %v2329
        %v2331 = vrot.slane %v2317, 4
        %v2332 = vadd.f32 %v2317, %v2331
        %v2333 = vrot.slane %v2332, 2
        %v2334 = vadd.f32 %v2332, %v2333
        %v2335 = vrot.slane %v2334, 1
        %v2336 = vadd.f32 %v2334, %v2335
        %v2337 = vrot.slane %v2318, 4
        %v2338 = vadd.f32 %v2318, %v2337
        %v2339 = vrot.slane %v2338, 2
        %v2340 = vadd.f32 %v2338, %v2339
        %v2341 = vrot.slane %v2340, 1
        %v2342 = vadd.f32 %v2340, %v2341
        %v2343 = vmul.f32 %v1409, %v2199
        %v2344 = vmul.f32 %v1410, %v2200
        %v2345 = vmul.f32 %v1411, %v2201
        %v2346 = vmul.f32 %v1412, %v2202
        %v2347 = vrot.slane %v2343, 4
        %v2348 = vadd.f32 %v2343, %v2347
        %v2349 = vrot.slane %v2348, 2
        %v2350 = vadd.f32 %v2348, %v2349
        %v2351 = vrot.slane %v2350, 1
        %v2352 = vadd.f32 %v2350, %v2351
        %v2353 = vrot.slane %v2344, 4
        %v2354 = vadd.f32 %v2344, %v2353
        %v2355 = vrot.slane %v2354, 2
        %v2356 = vadd.f32 %v2354, %v2355
        %v2357 = vrot.slane %v2356, 1
        %v2358 = vadd.f32 %v2356, %v2357
        %v2359 = vrot.slane %v2345, 4
        %v2360 = vadd.f32 %v2345, %v2359
        %v2361 = vrot.slane %v2360, 2
        %v2362 = vadd.f32 %v2360, %v2361
        %v2363 = vrot.slane %v2362, 1
        %v2364 = vadd.f32 %v2362, %v2363
        %v2365 = vrot.slane %v2346, 4
        %v2366 = vadd.f32 %v2346, %v2365
        %v2367 = vrot.slane %v2366, 2
        %v2368 = vadd.f32 %v2366, %v2367
        %v2369 = vrot.slane %v2368, 1
        %v2370 = vadd.f32 %v2368, %v2369
        %v2371 = vsub.s32 %v2168, 1
        %v2372 = vsub.s32 %v2170, 1
        %v2373 = vsub.s32 %v2172, 1
        %v2374 = vsub.s32 %v2174, 1
        %v2375 = vlaneseq
        %v2376 = vshrl.u32 %v2375, 7
        %v2377 = vsub.s32 0, %v2376
        %v2378 = vrot.slane %v2371, %v2377
        %v2379 = vlaneseq
        %v2380 = vshrl.u32 %v2379, 7
        %v2381 = vsub.s32 0, %v2380
        %v2382 = vrot.slane %v2372, %v2381
        %v2383 = vlaneseq
        %v2384 = vshrl.u32 %v2383, 7
        %v2385 = vsub.s32 0, %v2384
        %v2386 = vrot.slane %v2373, %v2385
        %v2387 = vlaneseq
        %v2388 = vshrl.u32 %v2387, 7
        %v2389 = vsub.s32 0, %v2388
        %v2390 = vrot.slane %v2374, %v2389
        %vm2391 = vcmp.eq.s32.totalorder %v1430, %v2378
        %vm2392 = vcmp.eq.s32.totalorder %v1430, %v2382
        %vm2393 = vcmp.eq.s32.totalorder %v1430, %v2386
        %vm2394 = vcmp.eq.s32.totalorder %v1430, %v2390
        %v2395 = vsel %vm2391, 1, 0
        %v2396 = vsel %vm2392, 1, 0
        %v2397 = vsel %vm2393, 1, 0
        %v2398 = vsel %vm2394, 1, 0
        %v2399 = vcvt.s32.f32 %v2395
        %v2400 = vcvt.s32.f32 %v2396
        %v2401 = vcvt.s32.f32 %v2397
        %v2402 = vcvt.s32.f32 %v2398
        %v2403 = vmul.f32 %v1381, %v2399
        %v2404 = vmul.f32 %v1382, %v2400
        %v2405 = vmul.f32 %v1383, %v2401
        %v2406 = vmul.f32 %v1384, %v2402
        %v2407 = vrot.slane %v2403, 4
        %v2408 = vadd.f32 %v2403, %v2407
        %v2409 = vrot.slane %v2408, 2
        %v2410 = vadd.f32 %v2408, %v2409
        %v2411 = vrot.slane %v2410, 1
        %v2412 = vadd.f32 %v2410, %v2411
        %v2413 = vrot.slane %v2404, 4
        %v2414 = vadd.f32 %v2404, %v2413
        %v2415 = vrot.slane %v2414, 2
        %v2416 = vadd.f32 %v2414, %v2415
        %v2417 = vrot.slane %v2416, 1
        %v2418 = vadd.f32 %v2416, %v2417
        %v2419 = vrot.slane %v2405, 4
        %v2420 = vadd.f32 %v2405, %v2419
        %v2421 = vrot.slane %v2420, 2
        %v2422 = vadd.f32 %v2420, %v2421
        %v2423 = vrot.slane %v2422, 1
        %v2424 = vadd.f32 %v2422, %v2423
        %v2425 = vrot.slane %v2406, 4
        %v2426 = vadd.f32 %v2406, %v2425
        %v2427 = vrot.slane %v2426, 2
        %v2428 = vadd.f32 %v2426, %v2427
        %v2429 = vrot.slane %v2428, 1
        %v2430 = vadd.f32 %v2428, %v2429
        %v2431 = vmul.f32 %v1381, %v2199
        %v2432 = vmul.f32 %v1382, %v2200
        %v2433 = vmul.f32 %v1383, %v2201
        %v2434 = vmul.f32 %v1384, %v2202
        %v2435 = vrot.slane %v2431, 4
        %v2436 = vadd.f32 %v2431, %v2435
        %v2437 = vrot.slane %v2436, 2
        %v2438 = vadd.f32 %v2436, %v2437
        %v2439 = vrot.slane %v2438, 1
        %v2440 = vadd.f32 %v2438, %v2439
        %v2441 = vrot.slane %v2432, 4
        %v2442 = vadd.f32 %v2432, %v2441
        %v2443 = vrot.slane %v2442, 2
        %v2444 = vadd.f32 %v2442, %v2443
        %v2445 = vrot.slane %v2444, 1
        %v2446 = vadd.f32 %v2444, %v2445
        %v2447 = vrot.slane %v2433, 4
        %v2448 = vadd.f32 %v2433, %v2447
        %v2449 = vrot.slane %v2448, 2
        %v2450 = vadd.f32 %v2448, %v2449
        %v2451 = vrot.slane %v2450, 1
        %v2452 = vadd.f32 %v2450, %v2451
        %v2453 = vrot.slane %v2434, 4
        %v2454 = vadd.f32 %v2434, %v2453
        %v2455 = vrot.slane %v2454, 2
        %v2456 = vadd.f32 %v2454, %v2455
        %v2457 = vrot.slane %v2456, 1
        %v2458 = vadd.f32 %v2456, %v2457
        %vm2459 = vcmp.eq.s32.totalorder %v2168, 0
        %vm2460 = vcmp.eq.s32.totalorder %v2170, 0
        %vm2461 = vcmp.eq.s32.totalorder %v2172, 0
        %vm2462 = vcmp.eq.s32.totalorder %v2174, 0
        %v2463 = vsel %vm2459, 1.0, %v2412
        %v2464 = vsel %vm2460, 1.0, %v2418
        %v2465 = vsel %vm2461, 1.0, %v2424
        %v2466 = vsel %vm2462, 1.0, %v2430
        %vm2467 = vcmp.eq.s32.totalorder %v2168, 7
        %vm2468 = vcmp.eq.s32.totalorder %v2170, 7
        %vm2469 = vcmp.eq.s32.totalorder %v2172, 7
        %vm2470 = vcmp.eq.s32.totalorder %v2174, 7
        %v2471 = vsel %vm2467, 1.0, %v2440
        %v2472 = vsel %vm2468, 1.0, %v2446
        %v2473 = vsel %vm2469, 1.0, %v2452
        %v2474 = vsel %vm2470, 1.0, %v2458
        %v2475 = vrcp.pop %v2471
        %v2476 = vmul.f32 %v2463, %v2475
        %v2477 = vrcp.pop %v2472
        %v2478 = vmul.f32 %v2464, %v2477
        %v2479 = vrcp.pop %v2473
        %v2480 = vmul.f32 %v2465, %v2479
        %v2481 = vrcp.pop %v2474
        %v2482 = vmul.f32 %v2466, %v2481
        %v2483 = vrsqrt.pop %v2476
        %v2484 = vmul.f32 %v2476, %v2483
        %vm2485 = vcmp.eq.f32.partialorder %v2476, inf
        %v2486 = vsel %vm2485, %v2476, %v2484
        %vm2487 = vcmp.eq.f32.partialorder %v2476, 0.0
        %v2488 = vand.u32 %v2476, 2147483648
        %v2489 = vsel %vm2487, %v2488, %v2486
        %v2490 = vrsqrt.pop %v2478
        %v2491 = vmul.f32 %v2478, %v2490
        %vm2492 = vcmp.eq.f32.partialorder %v2478, inf
        %v2493 = vsel %vm2492, %v2478, %v2491
        %vm2494 = vcmp.eq.f32.partialorder %v2478, 0.0
        %v2495 = vand.u32 %v2478, 2147483648
        %v2496 = vsel %vm2494, %v2495, %v2493
        %v2497 = vrsqrt.pop %v2480
        %v2498 = vmul.f32 %v2480, %v2497
        %vm2499 = vcmp.eq.f32.partialorder %v2480, inf
        %v2500 = vsel %vm2499, %v2480, %v2498
        %vm2501 = vcmp.eq.f32.partialorder %v2480, 0.0
        %v2502 = vand.u32 %v2480, 2147483648
        %v2503 = vsel %vm2501, %v2502, %v2500
        %v2504 = vrsqrt.pop %v2482
        %v2505 = vmul.f32 %v2482, %v2504
        %vm2506 = vcmp.eq.f32.partialorder %v2482, inf
        %v2507 = vsel %vm2506, %v2482, %v2505
        %vm2508 = vcmp.eq.f32.partialorder %v2482, 0.0
        %v2509 = vand.u32 %v2482, 2147483648
        %v2510 = vsel %vm2508, %v2509, %v2507
        %v2511 = vmul.f32 %v2352, %v2463
        %v2512 = vmul.f32 %v2358, %v2464
        %v2513 = vmul.f32 %v2364, %v2465
        %v2514 = vmul.f32 %v2370, %v2466
        %v2515 = vsub.f32 1.0, %v2352
        %v2516 = vsub.f32 1.0, %v2358
        %v2517 = vsub.f32 1.0, %v2364
        %v2518 = vsub.f32 1.0, %v2370
        %v2519 = vmul.f32 %v2515, %v2489
        %v2520 = vmul.f32 %v2516, %v2496
        %v2521 = vmul.f32 %v2517, %v2503
        %v2522 = vmul.f32 %v2518, %v2510
        %v2523 = vmul.f32 %v2519, %v2471
        %v2524 = vmul.f32 %v2520, %v2472
        %v2525 = vmul.f32 %v2521, %v2473
        %v2526 = vmul.f32 %v2522, %v2474
        %v2527 = vadd.f32 %v2511, %v2523
        %v2528 = vadd.f32 %v2512, %v2524
        %v2529 = vadd.f32 %v2513, %v2525
        %v2530 = vadd.f32 %v2514, %v2526
        %v2531 = vrcp.pop %v2324
        %v2532 = vmul.f32 %v2527, %v2531
        %v2533 = vrcp.pop %v2330
        %v2534 = vmul.f32 %v2528, %v2533
        %v2535 = vrcp.pop %v2336
        %v2536 = vmul.f32 %v2529, %v2535
        %v2537 = vrcp.pop %v2342
        %v2538 = vmul.f32 %v2530, %v2537
        %v2539 = vadd.f32 %v2296, %v2268
        %v2540 = vadd.f32 %v2302, %v2274
        %v2541 = vadd.f32 %v2308, %v2280
        %v2542 = vadd.f32 %v2314, %v2286
        %v2543 = vmul.f32 %v2515, %v2268
        %v2544 = vmul.f32 %v2516, %v2274
        %v2545 = vmul.f32 %v2517, %v2280
        %v2546 = vmul.f32 %v2518, %v2286
        %v2547 = vmul.f32 %v2352, %v2489
        %v2548 = vmul.f32 %v2358, %v2496
        %v2549 = vmul.f32 %v2364, %v2503
        %v2550 = vmul.f32 %v2370, %v2510
        %v2551 = vmul.f32 %v2547, %v2539
        %v2552 = vmul.f32 %v2548, %v2540
        %v2553 = vmul.f32 %v2549, %v2541
        %v2554 = vmul.f32 %v2550, %v2542
        %v2555 = vadd.f32 %v2543, %v2551
        %v2556 = vadd.f32 %v2544, %v2552
        %v2557 = vadd.f32 %v2545, %v2553
        %v2558 = vadd.f32 %v2546, %v2554
        %v2559 = vadd.f32 %v2515, %v2547
        %v2560 = vadd.f32 %v2516, %v2548
        %v2561 = vadd.f32 %v2517, %v2549
        %v2562 = vadd.f32 %v2518, %v2550
        %v2563 = vrcp.pop %v2559
        %v2564 = vrcp.pop %v2560
        %v2565 = vrcp.pop %v2561
        %v2566 = vrcp.pop %v2562
        %v2567 = vmul.f32 %v2555, %v2563
        %v2568 = vmul.f32 %v2556, %v2564
        %v2569 = vmul.f32 %v2557, %v2565
        %v2570 = vmul.f32 %v2558, %v2566
        %v2571 = vsub.f32 %v2073, %v2240
        %v2572 = vsub.f32 %v2080, %v2246
        %v2573 = vsub.f32 %v2081, %v2252
        %v2574 = vsub.f32 %v2082, %v2258
        %v2575 = vrcp.pop %v2212
        %v2576 = vrcp.pop %v2218
        %v2577 = vrcp.pop %v2224
        %v2578 = vrcp.pop %v2230
        %v2579 = vmul.f32 %v2571, %v2575
        %v2580 = vmul.f32 %v2572, %v2576
        %v2581 = vmul.f32 %v2573, %v2577
        %v2582 = vmul.f32 %v2574, %v2578
        %v2583 = vmax.f32 %v2579, 0.0
        %v2584 = vmax.f32 %v2580, 0.0
        %v2585 = vmax.f32 %v2581, 0.0
        %v2586 = vmax.f32 %v2582, 0.0
        %v2587 = vmin.f32 %v2583, 1.0
        %v2588 = vmin.f32 %v2584, 1.0
        %v2589 = vmin.f32 %v2585, 1.0
        %v2590 = vmin.f32 %v2586, 1.0
        %vm2591 = vcmp.le.f32.partialorder %v2587, %v2352
        %vm2592 = vcmp.le.f32.partialorder %v2588, %v2358
        %vm2593 = vcmp.le.f32.partialorder %v2589, %v2364
        %vm2594 = vcmp.le.f32.partialorder %v2590, %v2370
        %v2595 = vsel %vm2591, 1, 0
        %v2596 = vsel %vm2592, 1, 0
        %v2597 = vsel %vm2593, 1, 0
        %v2598 = vsel %vm2594, 1, 0
        %v2599 = vcvt.s32.f32 %v2595
        %v2600 = vcvt.s32.f32 %v2596
        %v2601 = vcvt.s32.f32 %v2597
        %v2602 = vcvt.s32.f32 %v2598
        %v2603 = vsub.f32 1.0, %v2599
        %v2604 = vsub.f32 1.0, %v2600
        %v2605 = vsub.f32 1.0, %v2601
        %v2606 = vsub.f32 1.0, %v2602
        %v2607 = vsub.f32 %v2352, %v2587
        %v2608 = vsub.f32 %v2358, %v2588
        %v2609 = vsub.f32 %v2364, %v2589
        %v2610 = vsub.f32 %v2370, %v2590
        %v2611 = vmul.f32 %v2268, %v2607
        %v2612 = vmul.f32 %v2274, %v2608
        %v2613 = vmul.f32 %v2280, %v2609
        %v2614 = vmul.f32 %v2286, %v2610
        %v2615 = vmul.f32 %v2532, %v2567
        %v2616 = vmul.f32 %v2534, %v2568
        %v2617 = vmul.f32 %v2536, %v2569
        %v2618 = vmul.f32 %v2538, %v2570
        %v2619 = vmul.f32 %v2615, %v2587
        %v2620 = vmul.f32 %v2616, %v2588
        %v2621 = vmul.f32 %v2617, %v2589
        %v2622 = vmul.f32 %v2618, %v2590
        %v2623 = vadd.f32 %v2611, %v2619
        %v2624 = vadd.f32 %v2612, %v2620
        %v2625 = vadd.f32 %v2613, %v2621
        %v2626 = vadd.f32 %v2614, %v2622
        %v2627 = vmul.f32 %v2623, %v2599
        %v2628 = vmul.f32 %v2624, %v2600
        %v2629 = vmul.f32 %v2625, %v2601
        %v2630 = vmul.f32 %v2626, %v2602
        %v2631 = vsub.f32 1.0, %v2587
        %v2632 = vsub.f32 1.0, %v2588
        %v2633 = vsub.f32 1.0, %v2589
        %v2634 = vsub.f32 1.0, %v2590
        %v2635 = vmul.f32 %v2615, %v2631
        %v2636 = vmul.f32 %v2616, %v2632
        %v2637 = vmul.f32 %v2617, %v2633
        %v2638 = vmul.f32 %v2618, %v2634
        %v2639 = vmul.f32 %v2489, %v2539
        %v2640 = vmul.f32 %v2496, %v2540
        %v2641 = vmul.f32 %v2503, %v2541
        %v2642 = vmul.f32 %v2510, %v2542
        %v2643 = vsub.f32 %v2587, %v2352
        %v2644 = vsub.f32 %v2588, %v2358
        %v2645 = vsub.f32 %v2589, %v2364
        %v2646 = vsub.f32 %v2590, %v2370
        %v2647 = vmul.f32 %v2639, %v2643
        %v2648 = vmul.f32 %v2640, %v2644
        %v2649 = vmul.f32 %v2641, %v2645
        %v2650 = vmul.f32 %v2642, %v2646
        %v2651 = vadd.f32 %v2635, %v2647
        %v2652 = vadd.f32 %v2636, %v2648
        %v2653 = vadd.f32 %v2637, %v2649
        %v2654 = vadd.f32 %v2638, %v2650
        %v2655 = vmul.f32 %v2651, %v2603
        %v2656 = vmul.f32 %v2652, %v2604
        %v2657 = vmul.f32 %v2653, %v2605
        %v2658 = vmul.f32 %v2654, %v2606
        %v2659 = vadd.f32 %v2627, %v2655
        %v2660 = vadd.f32 %v2628, %v2656
        %v2661 = vadd.f32 %v2629, %v2657
        %v2662 = vadd.f32 %v2630, %v2658
        %v2663 = vmul.f32 %v2532, %v2587
        %v2664 = vmul.f32 %v2534, %v2588
        %v2665 = vmul.f32 %v2536, %v2589
        %v2666 = vmul.f32 %v2538, %v2590
        %v2667 = vadd.f32 %v2607, %v2663
        %v2668 = vadd.f32 %v2608, %v2664
        %v2669 = vadd.f32 %v2609, %v2665
        %v2670 = vadd.f32 %v2610, %v2666
        %v2671 = vmul.f32 %v2667, %v2599
        %v2672 = vmul.f32 %v2668, %v2600
        %v2673 = vmul.f32 %v2669, %v2601
        %v2674 = vmul.f32 %v2670, %v2602
        %v2675 = vmul.f32 %v2532, %v2631
        %v2676 = vmul.f32 %v2534, %v2632
        %v2677 = vmul.f32 %v2536, %v2633
        %v2678 = vmul.f32 %v2538, %v2634
        %v2679 = vmul.f32 %v2489, %v2643
        %v2680 = vmul.f32 %v2496, %v2644
        %v2681 = vmul.f32 %v2503, %v2645
        %v2682 = vmul.f32 %v2510, %v2646
        %v2683 = vadd.f32 %v2675, %v2679
        %v2684 = vadd.f32 %v2676, %v2680
        %v2685 = vadd.f32 %v2677, %v2681
        %v2686 = vadd.f32 %v2678, %v2682
        %v2687 = vmul.f32 %v2683, %v2603
        %v2688 = vmul.f32 %v2684, %v2604
        %v2689 = vmul.f32 %v2685, %v2605
        %v2690 = vmul.f32 %v2686, %v2606
        %v2691 = vadd.f32 %v2671, %v2687
        %v2692 = vadd.f32 %v2672, %v2688
        %v2693 = vadd.f32 %v2673, %v2689
        %v2694 = vadd.f32 %v2674, %v2690
        %v2695 = vrcp.pop %v2691
        %v2696 = vrcp.pop %v2692
        %v2697 = vrcp.pop %v2693
        %v2698 = vrcp.pop %v2694
        %v2699 = vmul.f32 %v2659, %v2695
        %v2700 = vmul.f32 %v2660, %v2696
        %v2701 = vmul.f32 %v2661, %v2697
        %v2702 = vmul.f32 %v2662, %v2698
        %v2703 = vmul.f32 %v2532, %v2352
        %v2704 = vmul.f32 %v2534, %v2358
        %v2705 = vmul.f32 %v2536, %v2364
        %v2706 = vmul.f32 %v2538, %v2370
        %v2707 = vsub.f32 %v2567, %v2268
        %v2708 = vsub.f32 %v2568, %v2274
        %v2709 = vsub.f32 %v2569, %v2280
        %v2710 = vsub.f32 %v2570, %v2286
        %v2711 = vmul.f32 %v2703, %v2707
        %v2712 = vmul.f32 %v2704, %v2708
        %v2713 = vmul.f32 %v2705, %v2709
        %v2714 = vmul.f32 %v2706, %v2710
        %v2715 = vmul.f32 %v2711, %v2599
        %v2716 = vmul.f32 %v2712, %v2600
        %v2717 = vmul.f32 %v2713, %v2601
        %v2718 = vmul.f32 %v2714, %v2602
        %v2719 = vmul.f32 %v2489, %v2532
        %v2720 = vmul.f32 %v2496, %v2534
        %v2721 = vmul.f32 %v2503, %v2536
        %v2722 = vmul.f32 %v2510, %v2538
        %v2723 = vmul.f32 %v2719, %v2515
        %v2724 = vmul.f32 %v2720, %v2516
        %v2725 = vmul.f32 %v2721, %v2517
        %v2726 = vmul.f32 %v2722, %v2518
        %v2727 = vsub.f32 %v2539, %v2567
        %v2728 = vsub.f32 %v2540, %v2568
        %v2729 = vsub.f32 %v2541, %v2569
        %v2730 = vsub.f32 %v2542, %v2570
        %v2731 = vmul.f32 %v2723, %v2727
        %v2732 = vmul.f32 %v2724, %v2728
        %v2733 = vmul.f32 %v2725, %v2729
        %v2734 = vmul.f32 %v2726, %v2730
        %v2735 = vmul.f32 %v2731, %v2603
        %v2736 = vmul.f32 %v2732, %v2604
        %v2737 = vmul.f32 %v2733, %v2605
        %v2738 = vmul.f32 %v2734, %v2606
        %v2739 = vadd.f32 %v2715, %v2735
        %v2740 = vadd.f32 %v2716, %v2736
        %v2741 = vadd.f32 %v2717, %v2737
        %v2742 = vadd.f32 %v2718, %v2738
        %v2743 = vmul.f32 %v2739, %v2212
        %v2744 = vmul.f32 %v2740, %v2218
        %v2745 = vmul.f32 %v2741, %v2224
        %v2746 = vmul.f32 %v2742, %v2230
        %v2747 = vmul.f32 %v2691, %v2691
        %v2748 = vmul.f32 %v2692, %v2692
        %v2749 = vmul.f32 %v2693, %v2693
        %v2750 = vmul.f32 %v2694, %v2694
        %v2751 = vrcp.pop %v2747
        %v2752 = vmul.f32 %v2743, %v2751
        %v2753 = vrcp.pop %v2748
        %v2754 = vmul.f32 %v2744, %v2753
        %v2755 = vrcp.pop %v2749
        %v2756 = vmul.f32 %v2745, %v2755
        %v2757 = vrcp.pop %v2750
        %v2758 = vmul.f32 %v2746, %v2757
        %v2759 = vlog2.pop %v2752
        %v2760 = vmul.f32 %v2759, 0.6931472
        %v2761 = vlog2.pop %v2754
        %v2762 = vmul.f32 %v2761, 0.6931472
        %v2763 = vlog2.pop %v2756
        %v2764 = vmul.f32 %v2763, 0.6931472
        %v2765 = vlog2.pop %v2758
        %v2766 = vmul.f32 %v2765, 0.6931472
        %vm2767 = vcmp.ge.f32.partialorder %v2055, -3.0
        %vm2768 = vcmp.le.f32.partialorder %v2055, 3.0
        %vm2769 = vmand %vm2767, %vm2768
        %v2774 = vrot.slane %v2700, 7
        %vm2775 = vcmask 1041409
        %v2776 = vsel %vm2775, %v2774, %v2699
        %v2777 = vrot.slane %v2701, 6
        %vm2778 = vcmask 1042434
        %v2779 = vsel %vm2778, %v2777, %v2776
        %v2780 = vrot.slane %v2702, 5
        %vm2781 = vcmask 1043459
        %v2782 = vsel %vm2781, %v2780, %v2779
        %v2784 = vsel %vm2769, %v2782, %v2055
        %2785 = vst [vmem:[%s596] sm:$0xf] %v2784
        %v2786 = vld [vmem:[%s599] sm:$0x1]
        %v2791 = vrot.slane %v2762, 7
        %v2792 = vsel %vm2775, %v2791, %v2760
        %v2793 = vrot.slane %v2764, 6
        %v2794 = vsel %vm2778, %v2793, %v2792
        %v2795 = vrot.slane %v2766, 5
        %v2796 = vsel %vm2781, %v2795, %v2794
        %v2798 = vsel %vm2769, %v2796, 0.0
        %vm2799 = vcmask 1043456
        %v2800 = vsel %vm2799, %v2798, 0.0
        %v2801 = vrot.slane %v2800, 4
        %v2802 = vadd.f32 %v2800, %v2801
        %v2803 = vrot.slane %v2802, 2
        %v2804 = vadd.f32 %v2802, %v2803
        %v2805 = vrot.slane %v2804, 1
        %v2806 = vadd.f32 %v2804, %v2805
        %v2807 = vadd.f32 %v2786, %v2806
        %2808 = vst [vmem:[%s599] sm:$0x1] %v2807
        %p2809 = scmp.lt.s32.totalorder %s37, 0
        %s2810 = scalar_select %p2809, %s37, 0
        %s2811 = smul.addr %s2810, 4
        %s2812 = scalar_lea.vmem %s8, %s2811
        %p2813 = scmp.lt.s32.totalorder %s37, 0
        %s2814 = scalar_select %p2813, %s37, 0
        %s2815 = scalar_lea.vmem %s9, %s2814
        // Predicated region
        $region81: #{_lambda_.1} parent=51 // pred_check
          %p2816 = pneg %p271
        $region82: #{_lambda_.1} parent=51 // pred_check_branch
          %2818 = sbr.rel (%p2816) target = $region84
        $region83: #{_lambda_.1} parent=51 // pred_region
          _
        $region84: #{_lambda_.1} parent=51 // pred_fallthru
          _
        // Predicated region
        $region85: #{_lambda_.1} parent=51 // pred_check
          %p2819 = pneg %p297
        $region86: #{_lambda_.1} parent=51 // pred_check_branch
          %2821 = sbr.rel (%p2819) target = $region88
        $region87: #{_lambda_.1} parent=51 // pred_region
          _
        $region88: #{_lambda_.1} parent=51 // pred_fallthru
          _
        // Predicated region
        $region89: #{_lambda_.1} parent=51 // pred_check
          %p2822 = pneg %p271
        $region90: #{_lambda_.1} parent=51 // pred_check_branch
          %2824 = sbr.rel (%p2822) target = $region92
        $region91: #{_lambda_.1} parent=51 // pred_region
          %p2825 = scmp.lt.s32.totalorder %s37, 0
          %s2826 = scalar_select %p2825, %s37, 0
          %s2827 = smul.addr %s2826, 4
          %s2828 = scalar_lea.vmem %s8, %s2827
        $region92: #{_lambda_.1} parent=51 // pred_fallthru
          _
        // Predicated region
        $region93: #{_lambda_.1} parent=51 // pred_check
          %p2829 = pneg %p297
        $region94: #{_lambda_.1} parent=51 // pred_check_branch
          %2831 = sbr.rel (%p2829) target = $region96
        $region95: #{_lambda_.1} parent=51 // pred_region
          %p2832 = scmp.lt.s32.totalorder %s37, 0
          %s2833 = scalar_select %p2832, %s37, 0
          %s2834 = scalar_lea.vmem %s9, %s2833
        $region96: #{_lambda_.1} parent=51 // pred_fallthru
          _
      $region52: #{_lambda_.1} parent=5 // pred_fallthru
        _
      %p2835 = scmp.le.s32.totalorder 2, %s28
      // Predicated region
      $region97: #{_lambda_.1} parent=5 // pred_check
        %p2836 = pneg %p2835
      $region98: #{_lambda_.1} parent=5 // pred_check_branch
        %2838 = sbr.rel (%p2836) target = $region100
      $region99: #{_lambda_.1} parent=5 // pred_region
        %s2839 = ssub.s32 %s28, 2
      $region100: #{_lambda_.1} parent=5 // pred_fallthru
        _
    $region6: #{_lambda_.1} parent=1 // loop_footer
      %s32 = sadd.s32 1, %s28
    $region7: #{_lambda_.1} parent=1 // loop_footer_branch
      %27 = sbr.rel target = $region3
    $region8: #{_lambda_.1} parent=1 // loop_exit
      _
    %2840 = vsyncpa [#allocation3], 1
    %s2841 = scalar_lea.sflag [#allocation3], 1
    %2842 = vsyncpa %s2841, 1
    %2843 = vsyncpa [#allocation5], 1
    %s2844 = scalar_lea.sflag [#allocation5], 1
    %2845 = vsyncpa %s2844, 1
    %2846 = vsyncpa [#allocation8], 1
    %s2847 = scalar_lea.sflag [#allocation8], 1
    %2848 = vsyncpa %s2847, 1
    %2849 = vsyncpa [#allocation11], 1
    %s2850 = scalar_lea.sflag [#allocation11], 1
    %2851 = vsyncpa %s2850, 1

</llo_original>
